<compile_context>
chip_gen: v7x
topology: tpu7x:2x2x1
jax: 0.10.0
libtpu: 0.0.40
codegen_flags: <defaults>
</compile_context>

<pallas_src>
import jax
import jax.numpy as jnp
from jax import lax
from jax.experimental import pallas as pl
from jax.experimental.pallas import tpu as pltpu

INPUT_SIZE = 1
HIDDEN_SIZE = 18
SEQ_LEN = 30
OUTPUT_SIZE = 1

GATE_LANES = 128   # all four gates (4*H = 72) packed into one 128-lane vreg:
                   # i at lanes [0,18), f at [18,36), g at [36,54), o at [54,72)


def _sigmoid(x):
    # tanh-form sigmoid: a single EUP push instead of exp + reciprocal.
    return 0.5 * jnp.tanh(0.5 * x) + 0.5


def lstm_linear_kernel(x_ref, wih_ref, whh_ref, b_ref, wlin_ref, blin_ref,
                       out_ref):
    """Single-pass LSTM recurrence with the output Linear fused in.

    x_ref    : (S, TB, 1)        time-major input (batch tile)
    wih_ref  : (1, 1, 128)       W_ih row, gates packed at lane offsets 0/H/2H/3H
    whh_ref  : (H, 128)          W_hh^T, gate-packed along lanes (K stays = H)
    b_ref    : (1, 1, 128)       b_ih + b_hh, gate-packed
    wlin_ref : (S, 1, H)         Linear weight, row t matches h_t
    blin_ref : (1, 1)            Linear bias
    out_ref  : (TB, 1)           final output (written exactly once)
    """
    S = x_ref.shape[0]
    TB = x_ref.shape[1]
    H = HIDDEN_SIZE

    # Hoist the loop-invariant weight loads out of the unrolled loop.
    wih = wih_ref[0]       # (1, 128)
    bias = b_ref[0]        # (1, 128)
    whh = whh_ref[...]     # (H, 128)
    # TODO(synk): could hold W_hh weight-stationary in the MXU explicitly
    # (pltpu.matmul_push_rhs once + matmul_acc_lhs/matmul_pop per step); here we
    # rely on Mosaic reusing the identical RHS across the unrolled jnp.dot calls.

    h0 = jnp.zeros((TB, H), jnp.float32)
    c0 = jnp.zeros((TB, H), jnp.float32)
    acc0 = jnp.zeros((TB, H), jnp.float32)

    def body(t, carry):
        h, c, acc = carry
        # Input projection (I = 1) + fused bias: one VPU broadcast-multiply,
        # off the serial h->h chain.
        xg = x_ref[t] * wih + bias                                  # (TB, 128)
        # (TB, H) @ (H, 128) -> (TB, 128): one MXU N-tile per step.
        gates = xg + jnp.dot(h, whh, preferred_element_type=jnp.float32)

        # Realign f/g/o gate blocks to lane 0 with XLU rotates (i already at 0).
        f_al = pltpu.roll(gates, GATE_LANES - 1 * H, 1)
        g_al = pltpu.roll(gates, GATE_LANES - 2 * H, 1)
        o_al = pltpu.roll(gates, GATE_LANES - 3 * H, 1)

        i = _sigmoid(gates[:, :H])
        f = _sigmoid(f_al[:, :H])
        g = jnp.tanh(g_al[:, :H])
        o = _sigmoid(o_al[:, :H])

        c_new = f * c + i * g
        h_new = o * jnp.tanh(c_new)

        # Fused output Linear as a VPU accumulator; reduced once after the loop.
        acc_new = acc + h_new * wlin_ref[t]
        return h_new, c_new, acc_new

    # Fully unrolled: S=30 is small/static; gives the LLO scheduler visibility
    # across the serial h->h dependence.
    _, _, acc = lax.fori_loop(0, S, body, (h0, c0, acc0), unroll=True)

    out_ref[...] = (jnp.sum(acc, axis=-1, keepdims=True)
                    + blin_ref[...]).astype(out_ref.dtype)


def _round_up(v, m):
    return (v + m - 1) // m * m


@jax.jit
def net_forward(x, w_ih, w_hh, b_ih, b_hh, w_lin, b_lin):
    """x: (B, S, I) float32 (PyTorch batch_first layout). Returns (B, 1)."""
    B, S, I = x.shape
    H = HIDDEN_SIZE
    assert S == SEQ_LEN and I == INPUT_SIZE

    # Batch tile: multiple of 8 (sublane granule), capped at 64 so the fully
    # unrolled h/c/acc carries stay within the 64-vreg file (no spills on the
    # serial chain).  Grid over batch tiles is marked "parallel" (uses both
    # TensorCores on v7x; no-op on v5e/v6e).
    TB = min(64, _round_up(B, 8))
    B_pad = _round_up(B, TB)

    x_tm = jnp.transpose(x, (1, 0, 2)).astype(jnp.float32)          # (S, B, 1)
    if B_pad != B:
        x_tm = jnp.pad(x_tm, ((0, 0), (0, B_pad - B), (0, 0)))      # (S, B_pad, 1)

    # W_ih row (I=1) and fused bias, all four gates packed in one 128-lane block.
    wih_row = w_ih[:, 0].astype(jnp.float32)                        # (4H,)
    wih_pad = jnp.zeros((1, 1, GATE_LANES), jnp.float32).at[0, 0, :4 * H].set(wih_row)

    b_row = (b_ih + b_hh).astype(jnp.float32)                       # (4H,)
    b_pad = jnp.zeros((1, 1, GATE_LANES), jnp.float32).at[0, 0, :4 * H].set(b_row)

    # W_hh^T gate-packed along lanes: (H, 4H) -> (H, 128).
    whh_t = jnp.transpose(w_hh).astype(jnp.float32)                 # (H, 4H)
    whh_pad = jnp.zeros((H, GATE_LANES), jnp.float32).at[:, :4 * H].set(whh_t)

    # Linear weight (1, S*H) -> (S, 1, H); row t matches h_t (PyTorch flatten order).
    wlin = w_lin.astype(jnp.float32).reshape(S, 1, H)
    blin = b_lin.reshape(1, 1).astype(jnp.float32)

    grid = (B_pad // TB,)
    cost = pl.CostEstimate(
        flops=B_pad * S * (2 * H * 4 * H + 16 * H),
        transcendentals=B_pad * S * 5 * H,
        bytes_accessed=4 * (x_tm.size + wih_pad.size + whh_pad.size + b_pad.size
                            + wlin.size + blin.size + B_pad * OUTPUT_SIZE),
    )

    out = pl.pallas_call(
        lstm_linear_kernel,
        out_shape=jax.ShapeDtypeStruct((B_pad, OUTPUT_SIZE), jnp.float32),
        grid=grid,
        in_specs=[
            pl.BlockSpec((S, TB, 1), lambda n: (0, n, 0)),           # x (batch-tiled)
            pl.BlockSpec((1, 1, GATE_LANES), lambda n: (0, 0, 0)),   # W_ih (broadcast)
            pl.BlockSpec((H, GATE_LANES), lambda n: (0, 0)),         # W_hh^T
            pl.BlockSpec((1, 1, GATE_LANES), lambda n: (0, 0, 0)),   # bias
            pl.BlockSpec((S, 1, H), lambda n: (0, 0, 0)),            # Linear weight
            pl.BlockSpec((1, 1), lambda n: (0, 0)),                  # Linear bias
        ],
        out_specs=pl.BlockSpec((TB, OUTPUT_SIZE), lambda n: (n, 0)),
        compiler_params=pltpu.CompilerParams(
            dimension_semantics=("parallel",)),
        cost_estimate=cost,
    )(x_tm, wih_pad, whh_pad, b_pad, wlin, blin)
    return out[:B]


def reference_forward(x, w_ih, w_hh, b_ih, b_hh, w_lin, b_lin):
    """Pure-JAX reference matching torch.nn.LSTM + Linear (eval mode)."""
    B, S, I = x.shape
    H = HIDDEN_SIZE
    h = jnp.zeros((B, H), jnp.float32)
    c = jnp.zeros((B, H), jnp.float32)
    hs = []
    for t in range(S):
        gates = x[:, t, :] @ w_ih.T + b_ih + h @ w_hh.T + b_hh
        i = jax.nn.sigmoid(gates[:, 0 * H:1 * H])
        f = jax.nn.sigmoid(gates[:, 1 * H:2 * H])
        g = jnp.tanh(gates[:, 2 * H:3 * H])
        o = jax.nn.sigmoid(gates[:, 3 * H:4 * H])
        c = f * c + i * g
        h = o * jnp.tanh(c)
        hs.append(h)
    flat = jnp.stack(hs, axis=1).reshape(B, S * H)
    # TODO(synk): nn.Dropout(0.5) is identity in eval mode; training-mode mask not modeled.
    return flat @ w_lin.T + b_lin


def init_params(key):
    """Deterministic init matching PyTorch's default U(-1/sqrt(fan), 1/sqrt(fan))."""
    H, I, S = HIDDEN_SIZE, INPUT_SIZE, SEQ_LEN
    k = 1.0 / jnp.sqrt(H)
    keys = jax.random.split(key, 6)
    w_ih = jax.random.uniform(keys[0], (4 * H, I), jnp.float32, -k, k)
    w_hh = jax.random.uniform(keys[1], (4 * H, H), jnp.float32, -k, k)
    b_ih = jax.random.uniform(keys[2], (4 * H,), jnp.float32, -k, k)
    b_hh = jax.random.uniform(keys[3], (4 * H,), jnp.float32, -k, k)
    kl = 1.0 / jnp.sqrt(H * S)
    w_lin = jax.random.uniform(keys[4], (OUTPUT_SIZE, H * S), jnp.float32, -kl, kl)
    b_lin = jax.random.uniform(keys[5], (OUTPUT_SIZE,), jnp.float32, -kl, kl)
    return w_ih, w_hh, b_ih, b_hh, w_lin, b_lin


if __name__ == "__main__":
    key = jax.random.PRNGKey(0)
    k_x, k_p = jax.random.split(key)

    B = 4
    x = jax.random.normal(k_x, (B, SEQ_LEN, INPUT_SIZE), jnp.float32)
    params = init_params(k_p)

    out = net_forward(x, *params)
    out = jax.block_until_ready(out)

    ref = reference_forward(x, *params)
    assert out.shape == (B, OUTPUT_SIZE), out.shape
    assert jnp.allclose(out, ref, rtol=1e-4, atol=1e-4), (out, ref)

    print("KERNEL_OK")
</pallas_src>

<mosaic_0001>
module attributes {stable_mosaic.version = 11 : i64} {
  func.func @lstm_linear_kernel(%arg0: i32, %arg1: memref<30x8x1xf32, #tpu.memory_space<vmem>>, %arg2: memref<1x1x128xf32, #tpu.memory_space<vmem>>, %arg3: memref<18x128xf32, #tpu.memory_space<vmem>>, %arg4: memref<1x1x128xf32, #tpu.memory_space<vmem>>, %arg5: memref<30x1x18xf32, #tpu.memory_space<vmem>>, %arg6: memref<1x1xf32, #tpu.memory_space<vmem>>, %arg7: memref<8x1xf32, #tpu.memory_space<vmem>>) attributes {dimension_semantics = [#tpu.dimension_semantics<parallel>], iteration_bounds = array<i64: 1>, scalar_prefetch = 0 : i64, scratch_operands = 0 : i64, tpu.core_type = #tpu.core_type<tc>, window_params = [{transform_indices = @transform_0, window_bounds = array<i64: 30, 8, 1>}, {pipeline_mode = #tpu.pipeline_mode<synchronous>, transform_indices = @transform_1, window_bounds = array<i64: 1, 1, 128>}, {pipeline_mode = #tpu.pipeline_mode<synchronous>, transform_indices = @transform_2, window_bounds = array<i64: 18, 128>}, {pipeline_mode = #tpu.pipeline_mode<synchronous>, transform_indices = @transform_3, window_bounds = array<i64: 1, 1, 128>}, {pipeline_mode = #tpu.pipeline_mode<synchronous>, transform_indices = @transform_4, window_bounds = array<i64: 30, 1, 18>}, {pipeline_mode = #tpu.pipeline_mode<synchronous>, transform_indices = @transform_5, window_bounds = array<i64: 1, 1>}, {transform_indices = @transform_6, window_bounds = array<i64: 8, 1>}]} {
    %c0 = arith.constant 0 : index
    %c0_0 = arith.constant 0 : index
    %c0_1 = arith.constant 0 : index
    %0 = vector.load %arg2[%c0, %c0_0, %c0_1] : memref<1x1x128xf32, #tpu.memory_space<vmem>>, vector<1x1x128xf32>
    %1 = vector.shape_cast %0 : vector<1x1x128xf32> to vector<1x128xf32>
    %c0_2 = arith.constant 0 : index
    %c0_3 = arith.constant 0 : index
    %c0_4 = arith.constant 0 : index
    %2 = vector.load %arg4[%c0_2, %c0_3, %c0_4] : memref<1x1x128xf32, #tpu.memory_space<vmem>>, vector<1x1x128xf32>
    %3 = vector.shape_cast %2 : vector<1x1x128xf32> to vector<1x128xf32>
    %c0_5 = arith.constant 0 : index
    %c0_6 = arith.constant 0 : index
    %4 = vector.load %arg3[%c0_5, %c0_6] : memref<18x128xf32, #tpu.memory_space<vmem>>, vector<18x128xf32>
    %cst = arith.constant 0.000000e+00 : f32
    %5 = vector.broadcast %cst : f32 to vector<8x18xf32>
    %cst_7 = arith.constant 0.000000e+00 : f32
    %6 = vector.broadcast %cst_7 : f32 to vector<8x18xf32>
    %cst_8 = arith.constant 0.000000e+00 : f32
    %7 = vector.broadcast %cst_8 : f32 to vector<8x18xf32>
    %c0_i32 = arith.constant 0 : i32
    %8 = arith.index_cast %c0_i32 : i32 to index
    %c0_9 = arith.constant 0 : index
    %c0_10 = arith.constant 0 : index
    %9 = vector.load %arg1[%8, %c0_9, %c0_10] : memref<30x8x1xf32, #tpu.memory_space<vmem>>, vector<1x8x1xf32>
    %10 = vector.shape_cast %9 : vector<1x8x1xf32> to vector<8x1xf32>
    %11 = vector.broadcast %10 : vector<8x1xf32> to vector<8x128xf32>
    %12 = vector.broadcast %1 : vector<1x128xf32> to vector<8x128xf32>
    %13 = arith.mulf %11, %12 : vector<8x128xf32>
    %14 = vector.broadcast %3 : vector<1x128xf32> to vector<8x128xf32>
    %15 = arith.addf %13, %14 : vector<8x128xf32>
    %cst_11 = arith.constant dense<0.000000e+00> : vector<8x128xf32>
    %16 = tpu.matmul %5, %4, %cst_11 {dimension_numbers = #tpu.dot_dimension_numbers<[1], [0], [0], [1], [0, 0, 1, 1], [], []>} : vector<8x18xf32>, vector<18x128xf32>, vector<8x128xf32> -> vector<8x128xf32>
    %17 = arith.addf %15, %16 : vector<8x128xf32>
    %c110_i32 = arith.constant 110 : i32
    %18 = tpu.dynamic_rotate %17 by %c110_i32 dim 1 : vector<8x128xf32>, i32 -> vector<8x128xf32>
    %c92_i32 = arith.constant 92 : i32
    %19 = tpu.dynamic_rotate %17 by %c92_i32 dim 1 : vector<8x128xf32>, i32 -> vector<8x128xf32>
    %c74_i32 = arith.constant 74 : i32
    %20 = tpu.dynamic_rotate %17 by %c74_i32 dim 1 : vector<8x128xf32>, i32 -> vector<8x128xf32>
    %21 = vector.extract_strided_slice %17 {offsets = [0, 0], sizes = [8, 18], strides = [1, 1]} : vector<8x128xf32> to vector<8x18xf32>
    %cst_12 = arith.constant 5.000000e-01 : f32
    %22 = vector.broadcast %cst_12 : f32 to vector<8x18xf32>
    %23 = arith.mulf %22, %21 : vector<8x18xf32>
    %24 = math.tanh %23 : vector<8x18xf32>
    %cst_13 = arith.constant 5.000000e-01 : f32
    %25 = vector.broadcast %cst_13 : f32 to vector<8x18xf32>
    %26 = arith.mulf %25, %24 : vector<8x18xf32>
    %cst_14 = arith.constant 5.000000e-01 : f32
    %27 = vector.broadcast %cst_14 : f32 to vector<8x18xf32>
    %28 = arith.addf %26, %27 : vector<8x18xf32>
    %29 = vector.extract_strided_slice %18 {offsets = [0, 0], sizes = [8, 18], strides = [1, 1]} : vector<8x128xf32> to vector<8x18xf32>
    %cst_15 = arith.constant 5.000000e-01 : f32
    %30 = vector.broadcast %cst_15 : f32 to vector<8x18xf32>
    %31 = arith.mulf %30, %29 : vector<8x18xf32>
    %32 = math.tanh %31 : vector<8x18xf32>
    %cst_16 = arith.constant 5.000000e-01 : f32
    %33 = vector.broadcast %cst_16 : f32 to vector<8x18xf32>
    %34 = arith.mulf %33, %32 : vector<8x18xf32>
    %cst_17 = arith.constant 5.000000e-01 : f32
    %35 = vector.broadcast %cst_17 : f32 to vector<8x18xf32>
    %36 = arith.addf %34, %35 : vector<8x18xf32>
    %37 = vector.extract_strided_slice %19 {offsets = [0, 0], sizes = [8, 18], strides = [1, 1]} : vector<8x128xf32> to vector<8x18xf32>
    %38 = math.tanh %37 : vector<8x18xf32>
    %39 = vector.extract_strided_slice %20 {offsets = [0, 0], sizes = [8, 18], strides = [1, 1]} : vector<8x128xf32> to vector<8x18xf32>
    %cst_18 = arith.constant 5.000000e-01 : f32
    %40 = vector.broadcast %cst_18 : f32 to vector<8x18xf32>
    %41 = arith.mulf %40, %39 : vector<8x18xf32>
    %42 = math.tanh %41 : vector<8x18xf32>
    %cst_19 = arith.constant 5.000000e-01 : f32
    %43 = vector.broadcast %cst_19 : f32 to vector<8x18xf32>
    %44 = arith.mulf %43, %42 : vector<8x18xf32>
    %cst_20 = arith.constant 5.000000e-01 : f32
    %45 = vector.broadcast %cst_20 : f32 to vector<8x18xf32>
    %46 = arith.addf %44, %45 : vector<8x18xf32>
    %47 = arith.mulf %36, %6 : vector<8x18xf32>
    %48 = arith.mulf %28, %38 : vector<8x18xf32>
    %49 = arith.addf %47, %48 : vector<8x18xf32>
    %50 = math.tanh %49 : vector<8x18xf32>
    %51 = arith.mulf %46, %50 : vector<8x18xf32>
    %52 = arith.index_cast %c0_i32 : i32 to index
    %c0_21 = arith.constant 0 : index
    %c0_22 = arith.constant 0 : index
    %53 = vector.load %arg5[%52, %c0_21, %c0_22] : memref<30x1x18xf32, #tpu.memory_space<vmem>>, vector<1x1x18xf32>
    %54 = vector.shape_cast %53 : vector<1x1x18xf32> to vector<1x18xf32>
    %55 = vector.broadcast %54 : vector<1x18xf32> to vector<8x18xf32>
    %56 = arith.mulf %51, %55 : vector<8x18xf32>
    %57 = arith.addf %7, %56 : vector<8x18xf32>
    %c1_i32 = arith.constant 1 : i32
    %58 = arith.index_cast %c1_i32 : i32 to index
    %c0_23 = arith.constant 0 : index
    %c0_24 = arith.constant 0 : index
    %59 = vector.load %arg1[%58, %c0_23, %c0_24] : memref<30x8x1xf32, #tpu.memory_space<vmem>>, vector<1x8x1xf32>
    %60 = vector.shape_cast %59 : vector<1x8x1xf32> to vector<8x1xf32>
    %61 = vector.broadcast %60 : vector<8x1xf32> to vector<8x128xf32>
    %62 = vector.broadcast %1 : vector<1x128xf32> to vector<8x128xf32>
    %63 = arith.mulf %61, %62 : vector<8x128xf32>
    %64 = vector.broadcast %3 : vector<1x128xf32> to vector<8x128xf32>
    %65 = arith.addf %63, %64 : vector<8x128xf32>
    %cst_25 = arith.constant dense<0.000000e+00> : vector<8x128xf32>
    %66 = tpu.matmul %51, %4, %cst_25 {dimension_numbers = #tpu.dot_dimension_numbers<[1], [0], [0], [1], [0, 0, 1, 1], [], []>} : vector<8x18xf32>, vector<18x128xf32>, vector<8x128xf32> -> vector<8x128xf32>
    %67 = arith.addf %65, %66 : vector<8x128xf32>
    %c110_i32_26 = arith.constant 110 : i32
    %68 = tpu.dynamic_rotate %67 by %c110_i32_26 dim 1 : vector<8x128xf32>, i32 -> vector<8x128xf32>
    %c92_i32_27 = arith.constant 92 : i32
    %69 = tpu.dynamic_rotate %67 by %c92_i32_27 dim 1 : vector<8x128xf32>, i32 -> vector<8x128xf32>
    %c74_i32_28 = arith.constant 74 : i32
    %70 = tpu.dynamic_rotate %67 by %c74_i32_28 dim 1 : vector<8x128xf32>, i32 -> vector<8x128xf32>
    %71 = vector.extract_strided_slice %67 {offsets = [0, 0], sizes = [8, 18], strides = [1, 1]} : vector<8x128xf32> to vector<8x18xf32>
    %cst_29 = arith.constant 5.000000e-01 : f32
    %72 = vector.broadcast %cst_29 : f32 to vector<8x18xf32>
    %73 = arith.mulf %72, %71 : vector<8x18xf32>
    %74 = math.tanh %73 : vector<8x18xf32>
    %cst_30 = arith.constant 5.000000e-01 : f32
    %75 = vector.broadcast %cst_30 : f32 to vector<8x18xf32>
    %76 = arith.mulf %75, %74 : vector<8x18xf32>
    %cst_31 = arith.constant 5.000000e-01 : f32
    %77 = vector.broadcast %cst_31 : f32 to vector<8x18xf32>
    %78 = arith.addf %76, %77 : vector<8x18xf32>
    %79 = vector.extract_strided_slice %68 {offsets = [0, 0], sizes = [8, 18], strides = [1, 1]} : vector<8x128xf32> to vector<8x18xf32>
    %cst_32 = arith.constant 5.000000e-01 : f32
    %80 = vector.broadcast %cst_32 : f32 to vector<8x18xf32>
    %81 = arith.mulf %80, %79 : vector<8x18xf32>
    %82 = math.tanh %81 : vector<8x18xf32>
    %cst_33 = arith.constant 5.000000e-01 : f32
    %83 = vector.broadcast %cst_33 : f32 to vector<8x18xf32>
    %84 = arith.mulf %83, %82 : vector<8x18xf32>
    %cst_34 = arith.constant 5.000000e-01 : f32
    %85 = vector.broadcast %cst_34 : f32 to vector<8x18xf32>
    %86 = arith.addf %84, %85 : vector<8x18xf32>
    %87 = vector.extract_strided_slice %69 {offsets = [0, 0], sizes = [8, 18], strides = [1, 1]} : vector<8x128xf32> to vector<8x18xf32>
    %88 = math.tanh %87 : vector<8x18xf32>
    %89 = vector.extract_strided_slice %70 {offsets = [0, 0], sizes = [8, 18], strides = [1, 1]} : vector<8x128xf32> to vector<8x18xf32>
    %cst_35 = arith.constant 5.000000e-01 : f32
    %90 = vector.broadcast %cst_35 : f32 to vector<8x18xf32>
    %91 = arith.mulf %90, %89 : vector<8x18xf32>
    %92 = math.tanh %91 : vector<8x18xf32>
    %cst_36 = arith.constant 5.000000e-01 : f32
    %93 = vector.broadcast %cst_36 : f32 to vector<8x18xf32>
    %94 = arith.mulf %93, %92 : vector<8x18xf32>
    %cst_37 = arith.constant 5.000000e-01 : f32
    %95 = vector.broadcast %cst_37 : f32 to vector<8x18xf32>
    %96 = arith.addf %94, %95 : vector<8x18xf32>
    %97 = arith.mulf %86, %49 : vector<8x18xf32>
    %98 = arith.mulf %78, %88 : vector<8x18xf32>
    %99 = arith.addf %97, %98 : vector<8x18xf32>
    %100 = math.tanh %99 : vector<8x18xf32>
    %101 = arith.mulf %96, %100 : vector<8x18xf32>
    %102 = arith.index_cast %c1_i32 : i32 to index
    %c0_38 = arith.constant 0 : index
    %c0_39 = arith.constant 0 : index
    %103 = vector.load %arg5[%102, %c0_38, %c0_39] : memref<30x1x18xf32, #tpu.memory_space<vmem>>, vector<1x1x18xf32>
    %104 = vector.shape_cast %103 : vector<1x1x18xf32> to vector<1x18xf32>
    %105 = vector.broadcast %104 : vector<1x18xf32> to vector<8x18xf32>
    %106 = arith.mulf %101, %105 : vector<8x18xf32>
    %107 = arith.addf %57, %106 : vector<8x18xf32>
    %c2_i32 = arith.constant 2 : i32
    %108 = arith.index_cast %c2_i32 : i32 to index
    %c0_40 = arith.constant 0 : index
    %c0_41 = arith.constant 0 : index
    %109 = vector.load %arg1[%108, %c0_40, %c0_41] : memref<30x8x1xf32, #tpu.memory_space<vmem>>, vector<1x8x1xf32>
    %110 = vector.shape_cast %109 : vector<1x8x1xf32> to vector<8x1xf32>
    %111 = vector.broadcast %110 : vector<8x1xf32> to vector<8x128xf32>
    %112 = vector.broadcast %1 : vector<1x128xf32> to vector<8x128xf32>
    %113 = arith.mulf %111, %112 : vector<8x128xf32>
    %114 = vector.broadcast %3 : vector<1x128xf32> to vector<8x128xf32>
    %115 = arith.addf %113, %114 : vector<8x128xf32>
    %cst_42 = arith.constant dense<0.000000e+00> : vector<8x128xf32>
    %116 = tpu.matmul %101, %4, %cst_42 {dimension_numbers = #tpu.dot_dimension_numbers<[1], [0], [0], [1], [0, 0, 1, 1], [], []>} : vector<8x18xf32>, vector<18x128xf32>, vector<8x128xf32> -> vector<8x128xf32>
    %117 = arith.addf %115, %116 : vector<8x128xf32>
    %c110_i32_43 = arith.constant 110 : i32
    %118 = tpu.dynamic_rotate %117 by %c110_i32_43 dim 1 : vector<8x128xf32>, i32 -> vector<8x128xf32>
    %c92_i32_44 = arith.constant 92 : i32
    %119 = tpu.dynamic_rotate %117 by %c92_i32_44 dim 1 : vector<8x128xf32>, i32 -> vector<8x128xf32>
    %c74_i32_45 = arith.constant 74 : i32
    %120 = tpu.dynamic_rotate %117 by %c74_i32_45 dim 1 : vector<8x128xf32>, i32 -> vector<8x128xf32>
    %121 = vector.extract_strided_slice %117 {offsets = [0, 0], sizes = [8, 18], strides = [1, 1]} : vector<8x128xf32> to vector<8x18xf32>
    %cst_46 = arith.constant 5.000000e-01 : f32
    %122 = vector.broadcast %cst_46 : f32 to vector<8x18xf32>
    %123 = arith.mulf %122, %121 : vector<8x18xf32>
    %124 = math.tanh %123 : vector<8x18xf32>
    %cst_47 = arith.constant 5.000000e-01 : f32
    %125 = vector.broadcast %cst_47 : f32 to vector<8x18xf32>
    %126 = arith.mulf %125, %124 : vector<8x18xf32>
    %cst_48 = arith.constant 5.000000e-01 : f32
    %127 = vector.broadcast %cst_48 : f32 to vector<8x18xf32>
    %128 = arith.addf %126, %127 : vector<8x18xf32>
    %129 = vector.extract_strided_slice %118 {offsets = [0, 0], sizes = [8, 18], strides = [1, 1]} : vector<8x128xf32> to vector<8x18xf32>
    %cst_49 = arith.constant 5.000000e-01 : f32
    %130 = vector.broadcast %cst_49 : f32 to vector<8x18xf32>
    %131 = arith.mulf %130, %129 : vector<8x18xf32>
    %132 = math.tanh %131 : vector<8x18xf32>
    %cst_50 = arith.constant 5.000000e-01 : f32
    %133 = vector.broadcast %cst_50 : f32 to vector<8x18xf32>
    %134 = arith.mulf %133, %132 : vector<8x18xf32>
    %cst_51 = arith.constant 5.000000e-01 : f32
    %135 = vector.broadcast %cst_51 : f32 to vector<8x18xf32>
    %136 = arith.addf %134, %135 : vector<8x18xf32>
    %137 = vector.extract_strided_slice %119 {offsets = [0, 0], sizes = [8, 18], strides = [1, 1]} : vector<8x128xf32> to vector<8x18xf32>
    %138 = math.tanh %137 : vector<8x18xf32>
    %139 = vector.extract_strided_slice %120 {offsets = [0, 0], sizes = [8, 18], strides = [1, 1]} : vector<8x128xf32> to vector<8x18xf32>
    %cst_52 = arith.constant 5.000000e-01 : f32
    %140 = vector.broadcast %cst_52 : f32 to vector<8x18xf32>
    %141 = arith.mulf %140, %139 : vector<8x18xf32>
    %142 = math.tanh %141 : vector<8x18xf32>
    %cst_53 = arith.constant 5.000000e-01 : f32
    %143 = vector.broadcast %cst_53 : f32 to vector<8x18xf32>
    %144 = arith.mulf %143, %142 : vector<8x18xf32>
    %cst_54 = arith.constant 5.000000e-01 : f32
    %145 = vector.broadcast %cst_54 : f32 to vector<8x18xf32>
    %146 = arith.addf %144, %145 : vector<8x18xf32>
    %147 = arith.mulf %136, %99 : vector<8x18xf32>
    %148 = arith.mulf %128, %138 : vector<8x18xf32>
    %149 = arith.addf %147, %148 : vector<8x18xf32>
    %150 = math.tanh %149 : vector<8x18xf32>
    %151 = arith.mulf %146, %150 : vector<8x18xf32>
    %152 = arith.index_cast %c2_i32 : i32 to index
    %c0_55 = arith.constant 0 : index
    %c0_56 = arith.constant 0 : index
    %153 = vector.load %arg5[%152, %c0_55, %c0_56] : memref<30x1x18xf32, #tpu.memory_space<vmem>>, vector<1x1x18xf32>
    %154 = vector.shape_cast %153 : vector<1x1x18xf32> to vector<1x18xf32>
    %155 = vector.broadcast %154 : vector<1x18xf32> to vector<8x18xf32>
    %156 = arith.mulf %151, %155 : vector<8x18xf32>
    %157 = arith.addf %107, %156 : vector<8x18xf32>
    %c3_i32 = arith.constant 3 : i32
    %158 = arith.index_cast %c3_i32 : i32 to index
    %c0_57 = arith.constant 0 : index
    %c0_58 = arith.constant 0 : index
    %159 = vector.load %arg1[%158, %c0_57, %c0_58] : memref<30x8x1xf32, #tpu.memory_space<vmem>>, vector<1x8x1xf32>
    %160 = vector.shape_cast %159 : vector<1x8x1xf32> to vector<8x1xf32>
    %161 = vector.broadcast %160 : vector<8x1xf32> to vector<8x128xf32>
    %162 = vector.broadcast %1 : vector<1x128xf32> to vector<8x128xf32>
    %163 = arith.mulf %161, %162 : vector<8x128xf32>
    %164 = vector.broadcast %3 : vector<1x128xf32> to vector<8x128xf32>
    %165 = arith.addf %163, %164 : vector<8x128xf32>
    %cst_59 = arith.constant dense<0.000000e+00> : vector<8x128xf32>
    %166 = tpu.matmul %151, %4, %cst_59 {dimension_numbers = #tpu.dot_dimension_numbers<[1], [0], [0], [1], [0, 0, 1, 1], [], []>} : vector<8x18xf32>, vector<18x128xf32>, vector<8x128xf32> -> vector<8x128xf32>
    %167 = arith.addf %165, %166 : vector<8x128xf32>
    %c110_i32_60 = arith.constant 110 : i32
    %168 = tpu.dynamic_rotate %167 by %c110_i32_60 dim 1 : vector<8x128xf32>, i32 -> vector<8x128xf32>
    %c92_i32_61 = arith.constant 92 : i32
    %169 = tpu.dynamic_rotate %167 by %c92_i32_61 dim 1 : vector<8x128xf32>, i32 -> vector<8x128xf32>
    %c74_i32_62 = arith.constant 74 : i32
    %170 = tpu.dynamic_rotate %167 by %c74_i32_62 dim 1 : vector<8x128xf32>, i32 -> vector<8x128xf32>
    %171 = vector.extract_strided_slice %167 {offsets = [0, 0], sizes = [8, 18], strides = [1, 1]} : vector<8x128xf32> to vector<8x18xf32>
    %cst_63 = arith.constant 5.000000e-01 : f32
    %172 = vector.broadcast %cst_63 : f32 to vector<8x18xf32>
    %173 = arith.mulf %172, %171 : vector<8x18xf32>
    %174 = math.tanh %173 : vector<8x18xf32>
    %cst_64 = arith.constant 5.000000e-01 : f32
    %175 = vector.broadcast %cst_64 : f32 to vector<8x18xf32>
    %176 = arith.mulf %175, %174 : vector<8x18xf32>
    %cst_65 = arith.constant 5.000000e-01 : f32
    %177 = vector.broadcast %cst_65 : f32 to vector<8x18xf32>
    %178 = arith.addf %176, %177 : vector<8x18xf32>
    %179 = vector.extract_strided_slice %168 {offsets = [0, 0], sizes = [8, 18], strides = [1, 1]} : vector<8x128xf32> to vector<8x18xf32>
    %cst_66 = arith.constant 5.000000e-01 : f32
    %180 = vector.broadcast %cst_66 : f32 to vector<8x18xf32>
    %181 = arith.mulf %180, %179 : vector<8x18xf32>
    %182 = math.tanh %181 : vector<8x18xf32>
    %cst_67 = arith.constant 5.000000e-01 : f32
    %183 = vector.broadcast %cst_67 : f32 to vector<8x18xf32>
    %184 = arith.mulf %183, %182 : vector<8x18xf32>
    %cst_68 = arith.constant 5.000000e-01 : f32
    %185 = vector.broadcast %cst_68 : f32 to vector<8x18xf32>
    %186 = arith.addf %184, %185 : vector<8x18xf32>
    %187 = vector.extract_strided_slice %169 {offsets = [0, 0], sizes = [8, 18], strides = [1, 1]} : vector<8x128xf32> to vector<8x18xf32>
    %188 = math.tanh %187 : vector<8x18xf32>
    %189 = vector.extract_strided_slice %170 {offsets = [0, 0], sizes = [8, 18], strides = [1, 1]} : vector<8x128xf32> to vector<8x18xf32>
    %cst_69 = arith.constant 5.000000e-01 : f32
    %190 = vector.broadcast %cst_69 : f32 to vector<8x18xf32>
    %191 = arith.mulf %190, %189 : vector<8x18xf32>
    %192 = math.tanh %191 : vector<8x18xf32>
    %cst_70 = arith.constant 5.000000e-01 : f32
    %193 = vector.broadcast %cst_70 : f32 to vector<8x18xf32>
    %194 = arith.mulf %193, %192 : vector<8x18xf32>
    %cst_71 = arith.constant 5.000000e-01 : f32
    %195 = vector.broadcast %cst_71 : f32 to vector<8x18xf32>
    %196 = arith.addf %194, %195 : vector<8x18xf32>
    %197 = arith.mulf %186, %149 : vector<8x18xf32>
    %198 = arith.mulf %178, %188 : vector<8x18xf32>
    %199 = arith.addf %197, %198 : vector<8x18xf32>
    %200 = math.tanh %199 : vector<8x18xf32>
    %201 = arith.mulf %196, %200 : vector<8x18xf32>
    %202 = arith.index_cast %c3_i32 : i32 to index
    %c0_72 = arith.constant 0 : index
    %c0_73 = arith.constant 0 : index
    %203 = vector.load %arg5[%202, %c0_72, %c0_73] : memref<30x1x18xf32, #tpu.memory_space<vmem>>, vector<1x1x18xf32>
    %204 = vector.shape_cast %203 : vector<1x1x18xf32> to vector<1x18xf32>
    %205 = vector.broadcast %204 : vector<1x18xf32> to vector<8x18xf32>
    %206 = arith.mulf %201, %205 : vector<8x18xf32>
    %207 = arith.addf %157, %206 : vector<8x18xf32>
    %c4_i32 = arith.constant 4 : i32
    %208 = arith.index_cast %c4_i32 : i32 to index
    %c0_74 = arith.constant 0 : index
    %c0_75 = arith.constant 0 : index
    %209 = vector.load %arg1[%208, %c0_74, %c0_75] : memref<30x8x1xf32, #tpu.memory_space<vmem>>, vector<1x8x1xf32>
    %210 = vector.shape_cast %209 : vector<1x8x1xf32> to vector<8x1xf32>
    %211 = vector.broadcast %210 : vector<8x1xf32> to vector<8x128xf32>
    %212 = vector.broadcast %1 : vector<1x128xf32> to vector<8x128xf32>
    %213 = arith.mulf %211, %212 : vector<8x128xf32>
    %214 = vector.broadcast %3 : vector<1x128xf32> to vector<8x128xf32>
    %215 = arith.addf %213, %214 : vector<8x128xf32>
    %cst_76 = arith.constant dense<0.000000e+00> : vector<8x128xf32>
    %216 = tpu.matmul %201, %4, %cst_76 {dimension_numbers = #tpu.dot_dimension_numbers<[1], [0], [0], [1], [0, 0, 1, 1], [], []>} : vector<8x18xf32>, vector<18x128xf32>, vector<8x128xf32> -> vector<8x128xf32>
    %217 = arith.addf %215, %216 : vector<8x128xf32>
    %c110_i32_77 = arith.constant 110 : i32
    %218 = tpu.dynamic_rotate %217 by %c110_i32_77 dim 1 : vector<8x128xf32>, i32 -> vector<8x128xf32>
    %c92_i32_78 = arith.constant 92 : i32
    %219 = tpu.dynamic_rotate %217 by %c92_i32_78 dim 1 : vector<8x128xf32>, i32 -> vector<8x128xf32>
    %c74_i32_79 = arith.constant 74 : i32
    %220 = tpu.dynamic_rotate %217 by %c74_i32_79 dim 1 : vector<8x128xf32>, i32 -> vector<8x128xf32>
    %221 = vector.extract_strided_slice %217 {offsets = [0, 0], sizes = [8, 18], strides = [1, 1]} : vector<8x128xf32> to vector<8x18xf32>
    %cst_80 = arith.constant 5.000000e-01 : f32
    %222 = vector.broadcast %cst_80 : f32 to vector<8x18xf32>
    %223 = arith.mulf %222, %221 : vector<8x18xf32>
    %224 = math.tanh %223 : vector<8x18xf32>
    %cst_81 = arith.constant 5.000000e-01 : f32
    %225 = vector.broadcast %cst_81 : f32 to vector<8x18xf32>
    %226 = arith.mulf %225, %224 : vector<8x18xf32>
    %cst_82 = arith.constant 5.000000e-01 : f32
    %227 = vector.broadcast %cst_82 : f32 to vector<8x18xf32>
    %228 = arith.addf %226, %227 : vector<8x18xf32>
    %229 = vector.extract_strided_slice %218 {offsets = [0, 0], sizes = [8, 18], strides = [1, 1]} : vector<8x128xf32> to vector<8x18xf32>
    %cst_83 = arith.constant 5.000000e-01 : f32
    %230 = vector.broadcast %cst_83 : f32 to vector<8x18xf32>
    %231 = arith.mulf %230, %229 : vector<8x18xf32>
    %232 = math.tanh %231 : vector<8x18xf32>
    %cst_84 = arith.constant 5.000000e-01 : f32
    %233 = vector.broadcast %cst_84 : f32 to vector<8x18xf32>
    %234 = arith.mulf %233, %232 : vector<8x18xf32>
    %cst_85 = arith.constant 5.000000e-01 : f32
    %235 = vector.broadcast %cst_85 : f32 to vector<8x18xf32>
    %236 = arith.addf %234, %235 : vector<8x18xf32>
    %237 = vector.extract_strided_slice %219 {offsets = [0, 0], sizes = [8, 18], strides = [1, 1]} : vector<8x128xf32> to vector<8x18xf32>
    %238 = math.tanh %237 : vector<8x18xf32>
    %239 = vector.extract_strided_slice %220 {offsets = [0, 0], sizes = [8, 18], strides = [1, 1]} : vector<8x128xf32> to vector<8x18xf32>
    %cst_86 = arith.constant 5.000000e-01 : f32
    %240 = vector.broadcast %cst_86 : f32 to vector<8x18xf32>
    %241 = arith.mulf %240, %239 : vector<8x18xf32>
    %242 = math.tanh %241 : vector<8x18xf32>
    %cst_87 = arith.constant 5.000000e-01 : f32
    %243 = vector.broadcast %cst_87 : f32 to vector<8x18xf32>
    %244 = arith.mulf %243, %242 : vector<8x18xf32>
    %cst_88 = arith.constant 5.000000e-01 : f32
    %245 = vector.broadcast %cst_88 : f32 to vector<8x18xf32>
    %246 = arith.addf %244, %245 : vector<8x18xf32>
    %247 = arith.mulf %236, %199 : vector<8x18xf32>
    %248 = arith.mulf %228, %238 : vector<8x18xf32>
    %249 = arith.addf %247, %248 : vector<8x18xf32>
    %250 = math.tanh %249 : vector<8x18xf32>
    %251 = arith.mulf %246, %250 : vector<8x18xf32>
    %252 = arith.index_cast %c4_i32 : i32 to index
    %c0_89 = arith.constant 0 : index
    %c0_90 = arith.constant 0 : index
    %253 = vector.load %arg5[%252, %c0_89, %c0_90] : memref<30x1x18xf32, #tpu.memory_space<vmem>>, vector<1x1x18xf32>
    %254 = vector.shape_cast %253 : vector<1x1x18xf32> to vector<1x18xf32>
    %255 = vector.broadcast %254 : vector<1x18xf32> to vector<8x18xf32>
    %256 = arith.mulf %251, %255 : vector<8x18xf32>
    %257 = arith.addf %207, %256 : vector<8x18xf32>
    %c5_i32 = arith.constant 5 : i32
    %258 = arith.index_cast %c5_i32 : i32 to index
    %c0_91 = arith.constant 0 : index
    %c0_92 = arith.constant 0 : index
    %259 = vector.load %arg1[%258, %c0_91, %c0_92] : memref<30x8x1xf32, #tpu.memory_space<vmem>>, vector<1x8x1xf32>
    %260 = vector.shape_cast %259 : vector<1x8x1xf32> to vector<8x1xf32>
    %261 = vector.broadcast %260 : vector<8x1xf32> to vector<8x128xf32>
    %262 = vector.broadcast %1 : vector<1x128xf32> to vector<8x128xf32>
    %263 = arith.mulf %261, %262 : vector<8x128xf32>
    %264 = vector.broadcast %3 : vector<1x128xf32> to vector<8x128xf32>
    %265 = arith.addf %263, %264 : vector<8x128xf32>
    %cst_93 = arith.constant dense<0.000000e+00> : vector<8x128xf32>
    %266 = tpu.matmul %251, %4, %cst_93 {dimension_numbers = #tpu.dot_dimension_numbers<[1], [0], [0], [1], [0, 0, 1, 1], [], []>} : vector<8x18xf32>, vector<18x128xf32>, vector<8x128xf32> -> vector<8x128xf32>
    %267 = arith.addf %265, %266 : vector<8x128xf32>
    %c110_i32_94 = arith.constant 110 : i32
    %268 = tpu.dynamic_rotate %267 by %c110_i32_94 dim 1 : vector<8x128xf32>, i32 -> vector<8x128xf32>
    %c92_i32_95 = arith.constant 92 : i32
    %269 = tpu.dynamic_rotate %267 by %c92_i32_95 dim 1 : vector<8x128xf32>, i32 -> vector<8x128xf32>
    %c74_i32_96 = arith.constant 74 : i32
    %270 = tpu.dynamic_rotate %267 by %c74_i32_96 dim 1 : vector<8x128xf32>, i32 -> vector<8x128xf32>
    %271 = vector.extract_strided_slice %267 {offsets = [0, 0], sizes = [8, 18], strides = [1, 1]} : vector<8x128xf32> to vector<8x18xf32>
    %cst_97 = arith.constant 5.000000e-01 : f32
    %272 = vector.broadcast %cst_97 : f32 to vector<8x18xf32>
    %273 = arith.mulf %272, %271 : vector<8x18xf32>
    %274 = math.tanh %273 : vector<8x18xf32>
    %cst_98 = arith.constant 5.000000e-01 : f32
    %275 = vector.broadcast %cst_98 : f32 to vector<8x18xf32>
    %276 = arith.mulf %275, %274 : vector<8x18xf32>
    %cst_99 = arith.constant 5.000000e-01 : f32
    %277 = vector.broadcast %cst_99 : f32 to vector<8x18xf32>
    %278 = arith.addf %276, %277 : vector<8x18xf32>
    %279 = vector.extract_strided_slice %268 {offsets = [0, 0], sizes = [8, 18], strides = [1, 1]} : vector<8x128xf32> to vector<8x18xf32>
    %cst_100 = arith.constant 5.000000e-01 : f32
    %280 = vector.broadcast %cst_100 : f32 to vector<8x18xf32>
    %281 = arith.mulf %280, %279 : vector<8x18xf32>
    %282 = math.tanh %281 : vector<8x18xf32>
    %cst_101 = arith.constant 5.000000e-01 : f32
    %283 = vector.broadcast %cst_101 : f32 to vector<8x18xf32>
    %284 = arith.mulf %283, %282 : vector<8x18xf32>
    %cst_102 = arith.constant 5.000000e-01 : f32
    %285 = vector.broadcast %cst_102 : f32 to vector<8x18xf32>
    %286 = arith.addf %284, %285 : vector<8x18xf32>
    %287 = vector.extract_strided_slice %269 {offsets = [0, 0], sizes = [8, 18], strides = [1, 1]} : vector<8x128xf32> to vector<8x18xf32>
    %288 = math.tanh %287 : vector<8x18xf32>
    %289 = vector.extract_strided_slice %270 {offsets = [0, 0], sizes = [8, 18], strides = [1, 1]} : vector<8x128xf32> to vector<8x18xf32>
    %cst_103 = arith.constant 5.000000e-01 : f32
    %290 = vector.broadcast %cst_103 : f32 to vector<8x18xf32>
    %291 = arith.mulf %290, %289 : vector<8x18xf32>
    %292 = math.tanh %291 : vector<8x18xf32>
    %cst_104 = arith.constant 5.000000e-01 : f32
    %293 = vector.broadcast %cst_104 : f32 to vector<8x18xf32>
    %294 = arith.mulf %293, %292 : vector<8x18xf32>
    %cst_105 = arith.constant 5.000000e-01 : f32
    %295 = vector.broadcast %cst_105 : f32 to vector<8x18xf32>
    %296 = arith.addf %294, %295 : vector<8x18xf32>
    %297 = arith.mulf %286, %249 : vector<8x18xf32>
    %298 = arith.mulf %278, %288 : vector<8x18xf32>
    %299 = arith.addf %297, %298 : vector<8x18xf32>
    %300 = math.tanh %299 : vector<8x18xf32>
    %301 = arith.mulf %296, %300 : vector<8x18xf32>
    %302 = arith.index_cast %c5_i32 : i32 to index
    %c0_106 = arith.constant 0 : index
    %c0_107 = arith.constant 0 : index
    %303 = vector.load %arg5[%302, %c0_106, %c0_107] : memref<30x1x18xf32, #tpu.memory_space<vmem>>, vector<1x1x18xf32>
    %304 = vector.shape_cast %303 : vector<1x1x18xf32> to vector<1x18xf32>
    %305 = vector.broadcast %304 : vector<1x18xf32> to vector<8x18xf32>
    %306 = arith.mulf %301, %305 : vector<8x18xf32>
    %307 = arith.addf %257, %306 : vector<8x18xf32>
    %c6_i32 = arith.constant 6 : i32
    %308 = arith.index_cast %c6_i32 : i32 to index
    %c0_108 = arith.constant 0 : index
    %c0_109 = arith.constant 0 : index
    %309 = vector.load %arg1[%308, %c0_108, %c0_109] : memref<30x8x1xf32, #tpu.memory_space<vmem>>, vector<1x8x1xf32>
    %310 = vector.shape_cast %309 : vector<1x8x1xf32> to vector<8x1xf32>
    %311 = vector.broadcast %310 : vector<8x1xf32> to vector<8x128xf32>
    %312 = vector.broadcast %1 : vector<1x128xf32> to vector<8x128xf32>
    %313 = arith.mulf %311, %312 : vector<8x128xf32>
    %314 = vector.broadcast %3 : vector<1x128xf32> to vector<8x128xf32>
    %315 = arith.addf %313, %314 : vector<8x128xf32>
    %cst_110 = arith.constant dense<0.000000e+00> : vector<8x128xf32>
    %316 = tpu.matmul %301, %4, %cst_110 {dimension_numbers = #tpu.dot_dimension_numbers<[1], [0], [0], [1], [0, 0, 1, 1], [], []>} : vector<8x18xf32>, vector<18x128xf32>, vector<8x128xf32> -> vector<8x128xf32>
    %317 = arith.addf %315, %316 : vector<8x128xf32>
    %c110_i32_111 = arith.constant 110 : i32
    %318 = tpu.dynamic_rotate %317 by %c110_i32_111 dim 1 : vector<8x128xf32>, i32 -> vector<8x128xf32>
    %c92_i32_112 = arith.constant 92 : i32
    %319 = tpu.dynamic_rotate %317 by %c92_i32_112 dim 1 : vector<8x128xf32>, i32 -> vector<8x128xf32>
    %c74_i32_113 = arith.constant 74 : i32
    %320 = tpu.dynamic_rotate %317 by %c74_i32_113 dim 1 : vector<8x128xf32>, i32 -> vector<8x128xf32>
    %321 = vector.extract_strided_slice %317 {offsets = [0, 0], sizes = [8, 18], strides = [1, 1]} : vector<8x128xf32> to vector<8x18xf32>
    %cst_114 = arith.constant 5.000000e-01 : f32
    %322 = vector.broadcast %cst_114 : f32 to vector<8x18xf32>
    %323 = arith.mulf %322, %321 : vector<8x18xf32>
    %324 = math.tanh %323 : vector<8x18xf32>
    %cst_115 = arith.constant 5.000000e-01 : f32
    %325 = vector.broadcast %cst_115 : f32 to vector<8x18xf32>
    %326 = arith.mulf %325, %324 : vector<8x18xf32>
    %cst_116 = arith.constant 5.000000e-01 : f32
    %327 = vector.broadcast %cst_116 : f32 to vector<8x18xf32>
    %328 = arith.addf %326, %327 : vector<8x18xf32>
    %329 = vector.extract_strided_slice %318 {offsets = [0, 0], sizes = [8, 18], strides = [1, 1]} : vector<8x128xf32> to vector<8x18xf32>
    %cst_117 = arith.constant 5.000000e-01 : f32
    %330 = vector.broadcast %cst_117 : f32 to vector<8x18xf32>
    %331 = arith.mulf %330, %329 : vector<8x18xf32>
    %332 = math.tanh %331 : vector<8x18xf32>
    %cst_118 = arith.constant 5.000000e-01 : f32
    %333 = vector.broadcast %cst_118 : f32 to vector<8x18xf32>
    %334 = arith.mulf %333, %332 : vector<8x18xf32>
    %cst_119 = arith.constant 5.000000e-01 : f32
    %335 = vector.broadcast %cst_119 : f32 to vector<8x18xf32>
    %336 = arith.addf %334, %335 : vector<8x18xf32>
    %337 = vector.extract_strided_slice %319 {offsets = [0, 0], sizes = [8, 18], strides = [1, 1]} : vector<8x128xf32> to vector<8x18xf32>
    %338 = math.tanh %337 : vector<8x18xf32>
    %339 = vector.extract_strided_slice %320 {offsets = [0, 0], sizes = [8, 18], strides = [1, 1]} : vector<8x128xf32> to vector<8x18xf32>
    %cst_120 = arith.constant 5.000000e-01 : f32
    %340 = vector.broadcast %cst_120 : f32 to vector<8x18xf32>
    %341 = arith.mulf %340, %339 : vector<8x18xf32>
    %342 = math.tanh %341 : vector<8x18xf32>
    %cst_121 = arith.constant 5.000000e-01 : f32
    %343 = vector.broadcast %cst_121 : f32 to vector<8x18xf32>
    %344 = arith.mulf %343, %342 : vector<8x18xf32>
    %cst_122 = arith.constant 5.000000e-01 : f32
    %345 = vector.broadcast %cst_122 : f32 to vector<8x18xf32>
    %346 = arith.addf %344, %345 : vector<8x18xf32>
    %347 = arith.mulf %336, %299 : vector<8x18xf32>
    %348 = arith.mulf %328, %338 : vector<8x18xf32>
    %349 = arith.addf %347, %348 : vector<8x18xf32>
    %350 = math.tanh %349 : vector<8x18xf32>
    %351 = arith.mulf %346, %350 : vector<8x18xf32>
    %352 = arith.index_cast %c6_i32 : i32 to index
    %c0_123 = arith.constant 0 : index
    %c0_124 = arith.constant 0 : index
    %353 = vector.load %arg5[%352, %c0_123, %c0_124] : memref<30x1x18xf32, #tpu.memory_space<vmem>>, vector<1x1x18xf32>
    %354 = vector.shape_cast %353 : vector<1x1x18xf32> to vector<1x18xf32>
    %355 = vector.broadcast %354 : vector<1x18xf32> to vector<8x18xf32>
    %356 = arith.mulf %351, %355 : vector<8x18xf32>
    %357 = arith.addf %307, %356 : vector<8x18xf32>
    %c7_i32 = arith.constant 7 : i32
    %358 = arith.index_cast %c7_i32 : i32 to index
    %c0_125 = arith.constant 0 : index
    %c0_126 = arith.constant 0 : index
    %359 = vector.load %arg1[%358, %c0_125, %c0_126] : memref<30x8x1xf32, #tpu.memory_space<vmem>>, vector<1x8x1xf32>
    %360 = vector.shape_cast %359 : vector<1x8x1xf32> to vector<8x1xf32>
    %361 = vector.broadcast %360 : vector<8x1xf32> to vector<8x128xf32>
    %362 = vector.broadcast %1 : vector<1x128xf32> to vector<8x128xf32>
    %363 = arith.mulf %361, %362 : vector<8x128xf32>
    %364 = vector.broadcast %3 : vector<1x128xf32> to vector<8x128xf32>
    %365 = arith.addf %363, %364 : vector<8x128xf32>
    %cst_127 = arith.constant dense<0.000000e+00> : vector<8x128xf32>
    %366 = tpu.matmul %351, %4, %cst_127 {dimension_numbers = #tpu.dot_dimension_numbers<[1], [0], [0], [1], [0, 0, 1, 1], [], []>} : vector<8x18xf32>, vector<18x128xf32>, vector<8x128xf32> -> vector<8x128xf32>
    %367 = arith.addf %365, %366 : vector<8x128xf32>
    %c110_i32_128 = arith.constant 110 : i32
    %368 = tpu.dynamic_rotate %367 by %c110_i32_128 dim 1 : vector<8x128xf32>, i32 -> vector<8x128xf32>
    %c92_i32_129 = arith.constant 92 : i32
    %369 = tpu.dynamic_rotate %367 by %c92_i32_129 dim 1 : vector<8x128xf32>, i32 -> vector<8x128xf32>
    %c74_i32_130 = arith.constant 74 : i32
    %370 = tpu.dynamic_rotate %367 by %c74_i32_130 dim 1 : vector<8x128xf32>, i32 -> vector<8x128xf32>
    %371 = vector.extract_strided_slice %367 {offsets = [0, 0], sizes = [8, 18], strides = [1, 1]} : vector<8x128xf32> to vector<8x18xf32>
    %cst_131 = arith.constant 5.000000e-01 : f32
    %372 = vector.broadcast %cst_131 : f32 to vector<8x18xf32>
    %373 = arith.mulf %372, %371 : vector<8x18xf32>
    %374 = math.tanh %373 : vector<8x18xf32>
    %cst_132 = arith.constant 5.000000e-01 : f32
    %375 = vector.broadcast %cst_132 : f32 to vector<8x18xf32>
    %376 = arith.mulf %375, %374 : vector<8x18xf32>
    %cst_133 = arith.constant 5.000000e-01 : f32
    %377 = vector.broadcast %cst_133 : f32 to vector<8x18xf32>
    %378 = arith.addf %376, %377 : vector<8x18xf32>
    %379 = vector.extract_strided_slice %368 {offsets = [0, 0], sizes = [8, 18], strides = [1, 1]} : vector<8x128xf32> to vector<8x18xf32>
    %cst_134 = arith.constant 5.000000e-01 : f32
    %380 = vector.broadcast %cst_134 : f32 to vector<8x18xf32>
    %381 = arith.mulf %380, %379 : vector<8x18xf32>
    %382 = math.tanh %381 : vector<8x18xf32>
    %cst_135 = arith.constant 5.000000e-01 : f32
    %383 = vector.broadcast %cst_135 : f32 to vector<8x18xf32>
    %384 = arith.mulf %383, %382 : vector<8x18xf32>
    %cst_136 = arith.constant 5.000000e-01 : f32
    %385 = vector.broadcast %cst_136 : f32 to vector<8x18xf32>
    %386 = arith.addf %384, %385 : vector<8x18xf32>
    %387 = vector.extract_strided_slice %369 {offsets = [0, 0], sizes = [8, 18], strides = [1, 1]} : vector<8x128xf32> to vector<8x18xf32>
    %388 = math.tanh %387 : vector<8x18xf32>
    %389 = vector.extract_strided_slice %370 {offsets = [0, 0], sizes = [8, 18], strides = [1, 1]} : vector<8x128xf32> to vector<8x18xf32>
    %cst_137 = arith.constant 5.000000e-01 : f32
    %390 = vector.broadcast %cst_137 : f32 to vector<8x18xf32>
    %391 = arith.mulf %390, %389 : vector<8x18xf32>
    %392 = math.tanh %391 : vector<8x18xf32>
    %cst_138 = arith.constant 5.000000e-01 : f32
    %393 = vector.broadcast %cst_138 : f32 to vector<8x18xf32>
    %394 = arith.mulf %393, %392 : vector<8x18xf32>
    %cst_139 = arith.constant 5.000000e-01 : f32
    %395 = vector.broadcast %cst_139 : f32 to vector<8x18xf32>
    %396 = arith.addf %394, %395 : vector<8x18xf32>
    %397 = arith.mulf %386, %349 : vector<8x18xf32>
    %398 = arith.mulf %378, %388 : vector<8x18xf32>
    %399 = arith.addf %397, %398 : vector<8x18xf32>
    %400 = math.tanh %399 : vector<8x18xf32>
    %401 = arith.mulf %396, %400 : vector<8x18xf32>
    %402 = arith.index_cast %c7_i32 : i32 to index
    %c0_140 = arith.constant 0 : index
    %c0_141 = arith.constant 0 : index
    %403 = vector.load %arg5[%402, %c0_140, %c0_141] : memref<30x1x18xf32, #tpu.memory_space<vmem>>, vector<1x1x18xf32>
    %404 = vector.shape_cast %403 : vector<1x1x18xf32> to vector<1x18xf32>
    %405 = vector.broadcast %404 : vector<1x18xf32> to vector<8x18xf32>
    %406 = arith.mulf %401, %405 : vector<8x18xf32>
    %407 = arith.addf %357, %406 : vector<8x18xf32>
    %c8_i32 = arith.constant 8 : i32
    %408 = arith.index_cast %c8_i32 : i32 to index
    %c0_142 = arith.constant 0 : index
    %c0_143 = arith.constant 0 : index
    %409 = vector.load %arg1[%408, %c0_142, %c0_143] : memref<30x8x1xf32, #tpu.memory_space<vmem>>, vector<1x8x1xf32>
    %410 = vector.shape_cast %409 : vector<1x8x1xf32> to vector<8x1xf32>
    %411 = vector.broadcast %410 : vector<8x1xf32> to vector<8x128xf32>
    %412 = vector.broadcast %1 : vector<1x128xf32> to vector<8x128xf32>
    %413 = arith.mulf %411, %412 : vector<8x128xf32>
    %414 = vector.broadcast %3 : vector<1x128xf32> to vector<8x128xf32>
    %415 = arith.addf %413, %414 : vector<8x128xf32>
    %cst_144 = arith.constant dense<0.000000e+00> : vector<8x128xf32>
    %416 = tpu.matmul %401, %4, %cst_144 {dimension_numbers = #tpu.dot_dimension_numbers<[1], [0], [0], [1], [0, 0, 1, 1], [], []>} : vector<8x18xf32>, vector<18x128xf32>, vector<8x128xf32> -> vector<8x128xf32>
    %417 = arith.addf %415, %416 : vector<8x128xf32>
    %c110_i32_145 = arith.constant 110 : i32
    %418 = tpu.dynamic_rotate %417 by %c110_i32_145 dim 1 : vector<8x128xf32>, i32 -> vector<8x128xf32>
    %c92_i32_146 = arith.constant 92 : i32
    %419 = tpu.dynamic_rotate %417 by %c92_i32_146 dim 1 : vector<8x128xf32>, i32 -> vector<8x128xf32>
    %c74_i32_147 = arith.constant 74 : i32
    %420 = tpu.dynamic_rotate %417 by %c74_i32_147 dim 1 : vector<8x128xf32>, i32 -> vector<8x128xf32>
    %421 = vector.extract_strided_slice %417 {offsets = [0, 0], sizes = [8, 18], strides = [1, 1]} : vector<8x128xf32> to vector<8x18xf32>
    %cst_148 = arith.constant 5.000000e-01 : f32
    %422 = vector.broadcast %cst_148 : f32 to vector<8x18xf32>
    %423 = arith.mulf %422, %421 : vector<8x18xf32>
    %424 = math.tanh %423 : vector<8x18xf32>
    %cst_149 = arith.constant 5.000000e-01 : f32
    %425 = vector.broadcast %cst_149 : f32 to vector<8x18xf32>
    %426 = arith.mulf %425, %424 : vector<8x18xf32>
    %cst_150 = arith.constant 5.000000e-01 : f32
    %427 = vector.broadcast %cst_150 : f32 to vector<8x18xf32>
    %428 = arith.addf %426, %427 : vector<8x18xf32>
    %429 = vector.extract_strided_slice %418 {offsets = [0, 0], sizes = [8, 18], strides = [1, 1]} : vector<8x128xf32> to vector<8x18xf32>
    %cst_151 = arith.constant 5.000000e-01 : f32
    %430 = vector.broadcast %cst_151 : f32 to vector<8x18xf32>
    %431 = arith.mulf %430, %429 : vector<8x18xf32>
    %432 = math.tanh %431 : vector<8x18xf32>
    %cst_152 = arith.constant 5.000000e-01 : f32
    %433 = vector.broadcast %cst_152 : f32 to vector<8x18xf32>
    %434 = arith.mulf %433, %432 : vector<8x18xf32>
    %cst_153 = arith.constant 5.000000e-01 : f32
    %435 = vector.broadcast %cst_153 : f32 to vector<8x18xf32>
    %436 = arith.addf %434, %435 : vector<8x18xf32>
    %437 = vector.extract_strided_slice %419 {offsets = [0, 0], sizes = [8, 18], strides = [1, 1]} : vector<8x128xf32> to vector<8x18xf32>
    %438 = math.tanh %437 : vector<8x18xf32>
    %439 = vector.extract_strided_slice %420 {offsets = [0, 0], sizes = [8, 18], strides = [1, 1]} : vector<8x128xf32> to vector<8x18xf32>
    %cst_154 = arith.constant 5.000000e-01 : f32
    %440 = vector.broadcast %cst_154 : f32 to vector<8x18xf32>
    %441 = arith.mulf %440, %439 : vector<8x18xf32>
    %442 = math.tanh %441 : vector<8x18xf32>
    %cst_155 = arith.constant 5.000000e-01 : f32
    %443 = vector.broadcast %cst_155 : f32 to vector<8x18xf32>
    %444 = arith.mulf %443, %442 : vector<8x18xf32>
    %cst_156 = arith.constant 5.000000e-01 : f32
    %445 = vector.broadcast %cst_156 : f32 to vector<8x18xf32>
    %446 = arith.addf %444, %445 : vector<8x18xf32>
    %447 = arith.mulf %436, %399 : vector<8x18xf32>
    %448 = arith.mulf %428, %438 : vector<8x18xf32>
    %449 = arith.addf %447, %448 : vector<8x18xf32>
    %450 = math.tanh %449 : vector<8x18xf32>
    %451 = arith.mulf %446, %450 : vector<8x18xf32>
    %452 = arith.index_cast %c8_i32 : i32 to index
    %c0_157 = arith.constant 0 : index
    %c0_158 = arith.constant 0 : index
    %453 = vector.load %arg5[%452, %c0_157, %c0_158] : memref<30x1x18xf32, #tpu.memory_space<vmem>>, vector<1x1x18xf32>
    %454 = vector.shape_cast %453 : vector<1x1x18xf32> to vector<1x18xf32>
    %455 = vector.broadcast %454 : vector<1x18xf32> to vector<8x18xf32>
    %456 = arith.mulf %451, %455 : vector<8x18xf32>
    %457 = arith.addf %407, %456 : vector<8x18xf32>
    %c9_i32 = arith.constant 9 : i32
    %458 = arith.index_cast %c9_i32 : i32 to index
    %c0_159 = arith.constant 0 : index
    %c0_160 = arith.constant 0 : index
    %459 = vector.load %arg1[%458, %c0_159, %c0_160] : memref<30x8x1xf32, #tpu.memory_space<vmem>>, vector<1x8x1xf32>
    %460 = vector.shape_cast %459 : vector<1x8x1xf32> to vector<8x1xf32>
    %461 = vector.broadcast %460 : vector<8x1xf32> to vector<8x128xf32>
    %462 = vector.broadcast %1 : vector<1x128xf32> to vector<8x128xf32>
    %463 = arith.mulf %461, %462 : vector<8x128xf32>
    %464 = vector.broadcast %3 : vector<1x128xf32> to vector<8x128xf32>
    %465 = arith.addf %463, %464 : vector<8x128xf32>
    %cst_161 = arith.constant dense<0.000000e+00> : vector<8x128xf32>
    %466 = tpu.matmul %451, %4, %cst_161 {dimension_numbers = #tpu.dot_dimension_numbers<[1], [0], [0], [1], [0, 0, 1, 1], [], []>} : vector<8x18xf32>, vector<18x128xf32>, vector<8x128xf32> -> vector<8x128xf32>
    %467 = arith.addf %465, %466 : vector<8x128xf32>
    %c110_i32_162 = arith.constant 110 : i32
    %468 = tpu.dynamic_rotate %467 by %c110_i32_162 dim 1 : vector<8x128xf32>, i32 -> vector<8x128xf32>
    %c92_i32_163 = arith.constant 92 : i32
    %469 = tpu.dynamic_rotate %467 by %c92_i32_163 dim 1 : vector<8x128xf32>, i32 -> vector<8x128xf32>
    %c74_i32_164 = arith.constant 74 : i32
    %470 = tpu.dynamic_rotate %467 by %c74_i32_164 dim 1 : vector<8x128xf32>, i32 -> vector<8x128xf32>
    %471 = vector.extract_strided_slice %467 {offsets = [0, 0], sizes = [8, 18], strides = [1, 1]} : vector<8x128xf32> to vector<8x18xf32>
    %cst_165 = arith.constant 5.000000e-01 : f32
    %472 = vector.broadcast %cst_165 : f32 to vector<8x18xf32>
    %473 = arith.mulf %472, %471 : vector<8x18xf32>
    %474 = math.tanh %473 : vector<8x18xf32>
    %cst_166 = arith.constant 5.000000e-01 : f32
    %475 = vector.broadcast %cst_166 : f32 to vector<8x18xf32>
    %476 = arith.mulf %475, %474 : vector<8x18xf32>
    %cst_167 = arith.constant 5.000000e-01 : f32
    %477 = vector.broadcast %cst_167 : f32 to vector<8x18xf32>
    %478 = arith.addf %476, %477 : vector<8x18xf32>
    %479 = vector.extract_strided_slice %468 {offsets = [0, 0], sizes = [8, 18], strides = [1, 1]} : vector<8x128xf32> to vector<8x18xf32>
    %cst_168 = arith.constant 5.000000e-01 : f32
    %480 = vector.broadcast %cst_168 : f32 to vector<8x18xf32>
    %481 = arith.mulf %480, %479 : vector<8x18xf32>
    %482 = math.tanh %481 : vector<8x18xf32>
    %cst_169 = arith.constant 5.000000e-01 : f32
    %483 = vector.broadcast %cst_169 : f32 to vector<8x18xf32>
    %484 = arith.mulf %483, %482 : vector<8x18xf32>
    %cst_170 = arith.constant 5.000000e-01 : f32
    %485 = vector.broadcast %cst_170 : f32 to vector<8x18xf32>
    %486 = arith.addf %484, %485 : vector<8x18xf32>
    %487 = vector.extract_strided_slice %469 {offsets = [0, 0], sizes = [8, 18], strides = [1, 1]} : vector<8x128xf32> to vector<8x18xf32>
    %488 = math.tanh %487 : vector<8x18xf32>
    %489 = vector.extract_strided_slice %470 {offsets = [0, 0], sizes = [8, 18], strides = [1, 1]} : vector<8x128xf32> to vector<8x18xf32>
    %cst_171 = arith.constant 5.000000e-01 : f32
    %490 = vector.broadcast %cst_171 : f32 to vector<8x18xf32>
    %491 = arith.mulf %490, %489 : vector<8x18xf32>
    %492 = math.tanh %491 : vector<8x18xf32>
    %cst_172 = arith.constant 5.000000e-01 : f32
    %493 = vector.broadcast %cst_172 : f32 to vector<8x18xf32>
    %494 = arith.mulf %493, %492 : vector<8x18xf32>
    %cst_173 = arith.constant 5.000000e-01 : f32
    %495 = vector.broadcast %cst_173 : f32 to vector<8x18xf32>
    %496 = arith.addf %494, %495 : vector<8x18xf32>
    %497 = arith.mulf %486, %449 : vector<8x18xf32>
    %498 = arith.mulf %478, %488 : vector<8x18xf32>
    %499 = arith.addf %497, %498 : vector<8x18xf32>
    %500 = math.tanh %499 : vector<8x18xf32>
    %501 = arith.mulf %496, %500 : vector<8x18xf32>
    %502 = arith.index_cast %c9_i32 : i32 to index
    %c0_174 = arith.constant 0 : index
    %c0_175 = arith.constant 0 : index
    %503 = vector.load %arg5[%502, %c0_174, %c0_175] : memref<30x1x18xf32, #tpu.memory_space<vmem>>, vector<1x1x18xf32>
    %504 = vector.shape_cast %503 : vector<1x1x18xf32> to vector<1x18xf32>
    %505 = vector.broadcast %504 : vector<1x18xf32> to vector<8x18xf32>
    %506 = arith.mulf %501, %505 : vector<8x18xf32>
    %507 = arith.addf %457, %506 : vector<8x18xf32>
    %c10_i32 = arith.constant 10 : i32
    %508 = arith.index_cast %c10_i32 : i32 to index
    %c0_176 = arith.constant 0 : index
    %c0_177 = arith.constant 0 : index
    %509 = vector.load %arg1[%508, %c0_176, %c0_177] : memref<30x8x1xf32, #tpu.memory_space<vmem>>, vector<1x8x1xf32>
    %510 = vector.shape_cast %509 : vector<1x8x1xf32> to vector<8x1xf32>
    %511 = vector.broadcast %510 : vector<8x1xf32> to vector<8x128xf32>
    %512 = vector.broadcast %1 : vector<1x128xf32> to vector<8x128xf32>
    %513 = arith.mulf %511, %512 : vector<8x128xf32>
    %514 = vector.broadcast %3 : vector<1x128xf32> to vector<8x128xf32>
    %515 = arith.addf %513, %514 : vector<8x128xf32>
    %cst_178 = arith.constant dense<0.000000e+00> : vector<8x128xf32>
    %516 = tpu.matmul %501, %4, %cst_178 {dimension_numbers = #tpu.dot_dimension_numbers<[1], [0], [0], [1], [0, 0, 1, 1], [], []>} : vector<8x18xf32>, vector<18x128xf32>, vector<8x128xf32> -> vector<8x128xf32>
    %517 = arith.addf %515, %516 : vector<8x128xf32>
    %c110_i32_179 = arith.constant 110 : i32
    %518 = tpu.dynamic_rotate %517 by %c110_i32_179 dim 1 : vector<8x128xf32>, i32 -> vector<8x128xf32>
    %c92_i32_180 = arith.constant 92 : i32
    %519 = tpu.dynamic_rotate %517 by %c92_i32_180 dim 1 : vector<8x128xf32>, i32 -> vector<8x128xf32>
    %c74_i32_181 = arith.constant 74 : i32
    %520 = tpu.dynamic_rotate %517 by %c74_i32_181 dim 1 : vector<8x128xf32>, i32 -> vector<8x128xf32>
    %521 = vector.extract_strided_slice %517 {offsets = [0, 0], sizes = [8, 18], strides = [1, 1]} : vector<8x128xf32> to vector<8x18xf32>
    %cst_182 = arith.constant 5.000000e-01 : f32
    %522 = vector.broadcast %cst_182 : f32 to vector<8x18xf32>
    %523 = arith.mulf %522, %521 : vector<8x18xf32>
    %524 = math.tanh %523 : vector<8x18xf32>
    %cst_183 = arith.constant 5.000000e-01 : f32
    %525 = vector.broadcast %cst_183 : f32 to vector<8x18xf32>
    %526 = arith.mulf %525, %524 : vector<8x18xf32>
    %cst_184 = arith.constant 5.000000e-01 : f32
    %527 = vector.broadcast %cst_184 : f32 to vector<8x18xf32>
    %528 = arith.addf %526, %527 : vector<8x18xf32>
    %529 = vector.extract_strided_slice %518 {offsets = [0, 0], sizes = [8, 18], strides = [1, 1]} : vector<8x128xf32> to vector<8x18xf32>
    %cst_185 = arith.constant 5.000000e-01 : f32
    %530 = vector.broadcast %cst_185 : f32 to vector<8x18xf32>
    %531 = arith.mulf %530, %529 : vector<8x18xf32>
    %532 = math.tanh %531 : vector<8x18xf32>
    %cst_186 = arith.constant 5.000000e-01 : f32
    %533 = vector.broadcast %cst_186 : f32 to vector<8x18xf32>
    %534 = arith.mulf %533, %532 : vector<8x18xf32>
    %cst_187 = arith.constant 5.000000e-01 : f32
    %535 = vector.broadcast %cst_187 : f32 to vector<8x18xf32>
    %536 = arith.addf %534, %535 : vector<8x18xf32>
    %537 = vector.extract_strided_slice %519 {offsets = [0, 0], sizes = [8, 18], strides = [1, 1]} : vector<8x128xf32> to vector<8x18xf32>
    %538 = math.tanh %537 : vector<8x18xf32>
    %539 = vector.extract_strided_slice %520 {offsets = [0, 0], sizes = [8, 18], strides = [1, 1]} : vector<8x128xf32> to vector<8x18xf32>
    %cst_188 = arith.constant 5.000000e-01 : f32
    %540 = vector.broadcast %cst_188 : f32 to vector<8x18xf32>
    %541 = arith.mulf %540, %539 : vector<8x18xf32>
    %542 = math.tanh %541 : vector<8x18xf32>
    %cst_189 = arith.constant 5.000000e-01 : f32
    %543 = vector.broadcast %cst_189 : f32 to vector<8x18xf32>
    %544 = arith.mulf %543, %542 : vector<8x18xf32>
    %cst_190 = arith.constant 5.000000e-01 : f32
    %545 = vector.broadcast %cst_190 : f32 to vector<8x18xf32>
    %546 = arith.addf %544, %545 : vector<8x18xf32>
    %547 = arith.mulf %536, %499 : vector<8x18xf32>
    %548 = arith.mulf %528, %538 : vector<8x18xf32>
    %549 = arith.addf %547, %548 : vector<8x18xf32>
    %550 = math.tanh %549 : vector<8x18xf32>
    %551 = arith.mulf %546, %550 : vector<8x18xf32>
    %552 = arith.index_cast %c10_i32 : i32 to index
    %c0_191 = arith.constant 0 : index
    %c0_192 = arith.constant 0 : index
    %553 = vector.load %arg5[%552, %c0_191, %c0_192] : memref<30x1x18xf32, #tpu.memory_space<vmem>>, vector<1x1x18xf32>
    %554 = vector.shape_cast %553 : vector<1x1x18xf32> to vector<1x18xf32>
    %555 = vector.broadcast %554 : vector<1x18xf32> to vector<8x18xf32>
    %556 = arith.mulf %551, %555 : vector<8x18xf32>
    %557 = arith.addf %507, %556 : vector<8x18xf32>
    %c11_i32 = arith.constant 11 : i32
    %558 = arith.index_cast %c11_i32 : i32 to index
    %c0_193 = arith.constant 0 : index
    %c0_194 = arith.constant 0 : index
    %559 = vector.load %arg1[%558, %c0_193, %c0_194] : memref<30x8x1xf32, #tpu.memory_space<vmem>>, vector<1x8x1xf32>
    %560 = vector.shape_cast %559 : vector<1x8x1xf32> to vector<8x1xf32>
    %561 = vector.broadcast %560 : vector<8x1xf32> to vector<8x128xf32>
    %562 = vector.broadcast %1 : vector<1x128xf32> to vector<8x128xf32>
    %563 = arith.mulf %561, %562 : vector<8x128xf32>
    %564 = vector.broadcast %3 : vector<1x128xf32> to vector<8x128xf32>
    %565 = arith.addf %563, %564 : vector<8x128xf32>
    %cst_195 = arith.constant dense<0.000000e+00> : vector<8x128xf32>
    %566 = tpu.matmul %551, %4, %cst_195 {dimension_numbers = #tpu.dot_dimension_numbers<[1], [0], [0], [1], [0, 0, 1, 1], [], []>} : vector<8x18xf32>, vector<18x128xf32>, vector<8x128xf32> -> vector<8x128xf32>
    %567 = arith.addf %565, %566 : vector<8x128xf32>
    %c110_i32_196 = arith.constant 110 : i32
    %568 = tpu.dynamic_rotate %567 by %c110_i32_196 dim 1 : vector<8x128xf32>, i32 -> vector<8x128xf32>
    %c92_i32_197 = arith.constant 92 : i32
    %569 = tpu.dynamic_rotate %567 by %c92_i32_197 dim 1 : vector<8x128xf32>, i32 -> vector<8x128xf32>
    %c74_i32_198 = arith.constant 74 : i32
    %570 = tpu.dynamic_rotate %567 by %c74_i32_198 dim 1 : vector<8x128xf32>, i32 -> vector<8x128xf32>
    %571 = vector.extract_strided_slice %567 {offsets = [0, 0], sizes = [8, 18], strides = [1, 1]} : vector<8x128xf32> to vector<8x18xf32>
    %cst_199 = arith.constant 5.000000e-01 : f32
    %572 = vector.broadcast %cst_199 : f32 to vector<8x18xf32>
    %573 = arith.mulf %572, %571 : vector<8x18xf32>
    %574 = math.tanh %573 : vector<8x18xf32>
    %cst_200 = arith.constant 5.000000e-01 : f32
    %575 = vector.broadcast %cst_200 : f32 to vector<8x18xf32>
    %576 = arith.mulf %575, %574 : vector<8x18xf32>
    %cst_201 = arith.constant 5.000000e-01 : f32
    %577 = vector.broadcast %cst_201 : f32 to vector<8x18xf32>
    %578 = arith.addf %576, %577 : vector<8x18xf32>
    %579 = vector.extract_strided_slice %568 {offsets = [0, 0], sizes = [8, 18], strides = [1, 1]} : vector<8x128xf32> to vector<8x18xf32>
    %cst_202 = arith.constant 5.000000e-01 : f32
    %580 = vector.broadcast %cst_202 : f32 to vector<8x18xf32>
    %581 = arith.mulf %580, %579 : vector<8x18xf32>
    %582 = math.tanh %581 : vector<8x18xf32>
    %cst_203 = arith.constant 5.000000e-01 : f32
    %583 = vector.broadcast %cst_203 : f32 to vector<8x18xf32>
    %584 = arith.mulf %583, %582 : vector<8x18xf32>
    %cst_204 = arith.constant 5.000000e-01 : f32
    %585 = vector.broadcast %cst_204 : f32 to vector<8x18xf32>
    %586 = arith.addf %584, %585 : vector<8x18xf32>
    %587 = vector.extract_strided_slice %569 {offsets = [0, 0], sizes = [8, 18], strides = [1, 1]} : vector<8x128xf32> to vector<8x18xf32>
    %588 = math.tanh %587 : vector<8x18xf32>
    %589 = vector.extract_strided_slice %570 {offsets = [0, 0], sizes = [8, 18], strides = [1, 1]} : vector<8x128xf32> to vector<8x18xf32>
    %cst_205 = arith.constant 5.000000e-01 : f32
    %590 = vector.broadcast %cst_205 : f32 to vector<8x18xf32>
    %591 = arith.mulf %590, %589 : vector<8x18xf32>
    %592 = math.tanh %591 : vector<8x18xf32>
    %cst_206 = arith.constant 5.000000e-01 : f32
    %593 = vector.broadcast %cst_206 : f32 to vector<8x18xf32>
    %594 = arith.mulf %593, %592 : vector<8x18xf32>
    %cst_207 = arith.constant 5.000000e-01 : f32
    %595 = vector.broadcast %cst_207 : f32 to vector<8x18xf32>
    %596 = arith.addf %594, %595 : vector<8x18xf32>
    %597 = arith.mulf %586, %549 : vector<8x18xf32>
    %598 = arith.mulf %578, %588 : vector<8x18xf32>
    %599 = arith.addf %597, %598 : vector<8x18xf32>
    %600 = math.tanh %599 : vector<8x18xf32>
    %601 = arith.mulf %596, %600 : vector<8x18xf32>
    %602 = arith.index_cast %c11_i32 : i32 to index
    %c0_208 = arith.constant 0 : index
    %c0_209 = arith.constant 0 : index
    %603 = vector.load %arg5[%602, %c0_208, %c0_209] : memref<30x1x18xf32, #tpu.memory_space<vmem>>, vector<1x1x18xf32>
    %604 = vector.shape_cast %603 : vector<1x1x18xf32> to vector<1x18xf32>
    %605 = vector.broadcast %604 : vector<1x18xf32> to vector<8x18xf32>
    %606 = arith.mulf %601, %605 : vector<8x18xf32>
    %607 = arith.addf %557, %606 : vector<8x18xf32>
    %c12_i32 = arith.constant 12 : i32
    %608 = arith.index_cast %c12_i32 : i32 to index
    %c0_210 = arith.constant 0 : index
    %c0_211 = arith.constant 0 : index
    %609 = vector.load %arg1[%608, %c0_210, %c0_211] : memref<30x8x1xf32, #tpu.memory_space<vmem>>, vector<1x8x1xf32>
    %610 = vector.shape_cast %609 : vector<1x8x1xf32> to vector<8x1xf32>
    %611 = vector.broadcast %610 : vector<8x1xf32> to vector<8x128xf32>
    %612 = vector.broadcast %1 : vector<1x128xf32> to vector<8x128xf32>
    %613 = arith.mulf %611, %612 : vector<8x128xf32>
    %614 = vector.broadcast %3 : vector<1x128xf32> to vector<8x128xf32>
    %615 = arith.addf %613, %614 : vector<8x128xf32>
    %cst_212 = arith.constant dense<0.000000e+00> : vector<8x128xf32>
    %616 = tpu.matmul %601, %4, %cst_212 {dimension_numbers = #tpu.dot_dimension_numbers<[1], [0], [0], [1], [0, 0, 1, 1], [], []>} : vector<8x18xf32>, vector<18x128xf32>, vector<8x128xf32> -> vector<8x128xf32>
    %617 = arith.addf %615, %616 : vector<8x128xf32>
    %c110_i32_213 = arith.constant 110 : i32
    %618 = tpu.dynamic_rotate %617 by %c110_i32_213 dim 1 : vector<8x128xf32>, i32 -> vector<8x128xf32>
    %c92_i32_214 = arith.constant 92 : i32
    %619 = tpu.dynamic_rotate %617 by %c92_i32_214 dim 1 : vector<8x128xf32>, i32 -> vector<8x128xf32>
    %c74_i32_215 = arith.constant 74 : i32
    %620 = tpu.dynamic_rotate %617 by %c74_i32_215 dim 1 : vector<8x128xf32>, i32 -> vector<8x128xf32>
    %621 = vector.extract_strided_slice %617 {offsets = [0, 0], sizes = [8, 18], strides = [1, 1]} : vector<8x128xf32> to vector<8x18xf32>
    %cst_216 = arith.constant 5.000000e-01 : f32
    %622 = vector.broadcast %cst_216 : f32 to vector<8x18xf32>
    %623 = arith.mulf %622, %621 : vector<8x18xf32>
    %624 = math.tanh %623 : vector<8x18xf32>
    %cst_217 = arith.constant 5.000000e-01 : f32
    %625 = vector.broadcast %cst_217 : f32 to vector<8x18xf32>
    %626 = arith.mulf %625, %624 : vector<8x18xf32>
    %cst_218 = arith.constant 5.000000e-01 : f32
    %627 = vector.broadcast %cst_218 : f32 to vector<8x18xf32>
    %628 = arith.addf %626, %627 : vector<8x18xf32>
    %629 = vector.extract_strided_slice %618 {offsets = [0, 0], sizes = [8, 18], strides = [1, 1]} : vector<8x128xf32> to vector<8x18xf32>
    %cst_219 = arith.constant 5.000000e-01 : f32
    %630 = vector.broadcast %cst_219 : f32 to vector<8x18xf32>
    %631 = arith.mulf %630, %629 : vector<8x18xf32>
    %632 = math.tanh %631 : vector<8x18xf32>
    %cst_220 = arith.constant 5.000000e-01 : f32
    %633 = vector.broadcast %cst_220 : f32 to vector<8x18xf32>
    %634 = arith.mulf %633, %632 : vector<8x18xf32>
    %cst_221 = arith.constant 5.000000e-01 : f32
    %635 = vector.broadcast %cst_221 : f32 to vector<8x18xf32>
    %636 = arith.addf %634, %635 : vector<8x18xf32>
    %637 = vector.extract_strided_slice %619 {offsets = [0, 0], sizes = [8, 18], strides = [1, 1]} : vector<8x128xf32> to vector<8x18xf32>
    %638 = math.tanh %637 : vector<8x18xf32>
    %639 = vector.extract_strided_slice %620 {offsets = [0, 0], sizes = [8, 18], strides = [1, 1]} : vector<8x128xf32> to vector<8x18xf32>
    %cst_222 = arith.constant 5.000000e-01 : f32
    %640 = vector.broadcast %cst_222 : f32 to vector<8x18xf32>
    %641 = arith.mulf %640, %639 : vector<8x18xf32>
    %642 = math.tanh %641 : vector<8x18xf32>
    %cst_223 = arith.constant 5.000000e-01 : f32
    %643 = vector.broadcast %cst_223 : f32 to vector<8x18xf32>
    %644 = arith.mulf %643, %642 : vector<8x18xf32>
    %cst_224 = arith.constant 5.000000e-01 : f32
    %645 = vector.broadcast %cst_224 : f32 to vector<8x18xf32>
    %646 = arith.addf %644, %645 : vector<8x18xf32>
    %647 = arith.mulf %636, %599 : vector<8x18xf32>
    %648 = arith.mulf %628, %638 : vector<8x18xf32>
    %649 = arith.addf %647, %648 : vector<8x18xf32>
    %650 = math.tanh %649 : vector<8x18xf32>
    %651 = arith.mulf %646, %650 : vector<8x18xf32>
    %652 = arith.index_cast %c12_i32 : i32 to index
    %c0_225 = arith.constant 0 : index
    %c0_226 = arith.constant 0 : index
    %653 = vector.load %arg5[%652, %c0_225, %c0_226] : memref<30x1x18xf32, #tpu.memory_space<vmem>>, vector<1x1x18xf32>
    %654 = vector.shape_cast %653 : vector<1x1x18xf32> to vector<1x18xf32>
    %655 = vector.broadcast %654 : vector<1x18xf32> to vector<8x18xf32>
    %656 = arith.mulf %651, %655 : vector<8x18xf32>
    %657 = arith.addf %607, %656 : vector<8x18xf32>
    %c13_i32 = arith.constant 13 : i32
    %658 = arith.index_cast %c13_i32 : i32 to index
    %c0_227 = arith.constant 0 : index
    %c0_228 = arith.constant 0 : index
    %659 = vector.load %arg1[%658, %c0_227, %c0_228] : memref<30x8x1xf32, #tpu.memory_space<vmem>>, vector<1x8x1xf32>
    %660 = vector.shape_cast %659 : vector<1x8x1xf32> to vector<8x1xf32>
    %661 = vector.broadcast %660 : vector<8x1xf32> to vector<8x128xf32>
    %662 = vector.broadcast %1 : vector<1x128xf32> to vector<8x128xf32>
    %663 = arith.mulf %661, %662 : vector<8x128xf32>
    %664 = vector.broadcast %3 : vector<1x128xf32> to vector<8x128xf32>
    %665 = arith.addf %663, %664 : vector<8x128xf32>
    %cst_229 = arith.constant dense<0.000000e+00> : vector<8x128xf32>
    %666 = tpu.matmul %651, %4, %cst_229 {dimension_numbers = #tpu.dot_dimension_numbers<[1], [0], [0], [1], [0, 0, 1, 1], [], []>} : vector<8x18xf32>, vector<18x128xf32>, vector<8x128xf32> -> vector<8x128xf32>
    %667 = arith.addf %665, %666 : vector<8x128xf32>
    %c110_i32_230 = arith.constant 110 : i32
    %668 = tpu.dynamic_rotate %667 by %c110_i32_230 dim 1 : vector<8x128xf32>, i32 -> vector<8x128xf32>
    %c92_i32_231 = arith.constant 92 : i32
    %669 = tpu.dynamic_rotate %667 by %c92_i32_231 dim 1 : vector<8x128xf32>, i32 -> vector<8x128xf32>
    %c74_i32_232 = arith.constant 74 : i32
    %670 = tpu.dynamic_rotate %667 by %c74_i32_232 dim 1 : vector<8x128xf32>, i32 -> vector<8x128xf32>
    %671 = vector.extract_strided_slice %667 {offsets = [0, 0], sizes = [8, 18], strides = [1, 1]} : vector<8x128xf32> to vector<8x18xf32>
    %cst_233 = arith.constant 5.000000e-01 : f32
    %672 = vector.broadcast %cst_233 : f32 to vector<8x18xf32>
    %673 = arith.mulf %672, %671 : vector<8x18xf32>
    %674 = math.tanh %673 : vector<8x18xf32>
    %cst_234 = arith.constant 5.000000e-01 : f32
    %675 = vector.broadcast %cst_234 : f32 to vector<8x18xf32>
    %676 = arith.mulf %675, %674 : vector<8x18xf32>
    %cst_235 = arith.constant 5.000000e-01 : f32
    %677 = vector.broadcast %cst_235 : f32 to vector<8x18xf32>
    %678 = arith.addf %676, %677 : vector<8x18xf32>
    %679 = vector.extract_strided_slice %668 {offsets = [0, 0], sizes = [8, 18], strides = [1, 1]} : vector<8x128xf32> to vector<8x18xf32>
    %cst_236 = arith.constant 5.000000e-01 : f32
    %680 = vector.broadcast %cst_236 : f32 to vector<8x18xf32>
    %681 = arith.mulf %680, %679 : vector<8x18xf32>
    %682 = math.tanh %681 : vector<8x18xf32>
    %cst_237 = arith.constant 5.000000e-01 : f32
    %683 = vector.broadcast %cst_237 : f32 to vector<8x18xf32>
    %684 = arith.mulf %683, %682 : vector<8x18xf32>
    %cst_238 = arith.constant 5.000000e-01 : f32
    %685 = vector.broadcast %cst_238 : f32 to vector<8x18xf32>
    %686 = arith.addf %684, %685 : vector<8x18xf32>
    %687 = vector.extract_strided_slice %669 {offsets = [0, 0], sizes = [8, 18], strides = [1, 1]} : vector<8x128xf32> to vector<8x18xf32>
    %688 = math.tanh %687 : vector<8x18xf32>
    %689 = vector.extract_strided_slice %670 {offsets = [0, 0], sizes = [8, 18], strides = [1, 1]} : vector<8x128xf32> to vector<8x18xf32>
    %cst_239 = arith.constant 5.000000e-01 : f32
    %690 = vector.broadcast %cst_239 : f32 to vector<8x18xf32>
    %691 = arith.mulf %690, %689 : vector<8x18xf32>
    %692 = math.tanh %691 : vector<8x18xf32>
    %cst_240 = arith.constant 5.000000e-01 : f32
    %693 = vector.broadcast %cst_240 : f32 to vector<8x18xf32>
    %694 = arith.mulf %693, %692 : vector<8x18xf32>
    %cst_241 = arith.constant 5.000000e-01 : f32
    %695 = vector.broadcast %cst_241 : f32 to vector<8x18xf32>
    %696 = arith.addf %694, %695 : vector<8x18xf32>
    %697 = arith.mulf %686, %649 : vector<8x18xf32>
    %698 = arith.mulf %678, %688 : vector<8x18xf32>
    %699 = arith.addf %697, %698 : vector<8x18xf32>
    %700 = math.tanh %699 : vector<8x18xf32>
    %701 = arith.mulf %696, %700 : vector<8x18xf32>
    %702 = arith.index_cast %c13_i32 : i32 to index
    %c0_242 = arith.constant 0 : index
    %c0_243 = arith.constant 0 : index
    %703 = vector.load %arg5[%702, %c0_242, %c0_243] : memref<30x1x18xf32, #tpu.memory_space<vmem>>, vector<1x1x18xf32>
    %704 = vector.shape_cast %703 : vector<1x1x18xf32> to vector<1x18xf32>
    %705 = vector.broadcast %704 : vector<1x18xf32> to vector<8x18xf32>
    %706 = arith.mulf %701, %705 : vector<8x18xf32>
    %707 = arith.addf %657, %706 : vector<8x18xf32>
    %c14_i32 = arith.constant 14 : i32
    %708 = arith.index_cast %c14_i32 : i32 to index
    %c0_244 = arith.constant 0 : index
    %c0_245 = arith.constant 0 : index
    %709 = vector.load %arg1[%708, %c0_244, %c0_245] : memref<30x8x1xf32, #tpu.memory_space<vmem>>, vector<1x8x1xf32>
    %710 = vector.shape_cast %709 : vector<1x8x1xf32> to vector<8x1xf32>
    %711 = vector.broadcast %710 : vector<8x1xf32> to vector<8x128xf32>
    %712 = vector.broadcast %1 : vector<1x128xf32> to vector<8x128xf32>
    %713 = arith.mulf %711, %712 : vector<8x128xf32>
    %714 = vector.broadcast %3 : vector<1x128xf32> to vector<8x128xf32>
    %715 = arith.addf %713, %714 : vector<8x128xf32>
    %cst_246 = arith.constant dense<0.000000e+00> : vector<8x128xf32>
    %716 = tpu.matmul %701, %4, %cst_246 {dimension_numbers = #tpu.dot_dimension_numbers<[1], [0], [0], [1], [0, 0, 1, 1], [], []>} : vector<8x18xf32>, vector<18x128xf32>, vector<8x128xf32> -> vector<8x128xf32>
    %717 = arith.addf %715, %716 : vector<8x128xf32>
    %c110_i32_247 = arith.constant 110 : i32
    %718 = tpu.dynamic_rotate %717 by %c110_i32_247 dim 1 : vector<8x128xf32>, i32 -> vector<8x128xf32>
    %c92_i32_248 = arith.constant 92 : i32
    %719 = tpu.dynamic_rotate %717 by %c92_i32_248 dim 1 : vector<8x128xf32>, i32 -> vector<8x128xf32>
    %c74_i32_249 = arith.constant 74 : i32
    %720 = tpu.dynamic_rotate %717 by %c74_i32_249 dim 1 : vector<8x128xf32>, i32 -> vector<8x128xf32>
    %721 = vector.extract_strided_slice %717 {offsets = [0, 0], sizes = [8, 18], strides = [1, 1]} : vector<8x128xf32> to vector<8x18xf32>
    %cst_250 = arith.constant 5.000000e-01 : f32
    %722 = vector.broadcast %cst_250 : f32 to vector<8x18xf32>
    %723 = arith.mulf %722, %721 : vector<8x18xf32>
    %724 = math.tanh %723 : vector<8x18xf32>
    %cst_251 = arith.constant 5.000000e-01 : f32
    %725 = vector.broadcast %cst_251 : f32 to vector<8x18xf32>
    %726 = arith.mulf %725, %724 : vector<8x18xf32>
    %cst_252 = arith.constant 5.000000e-01 : f32
    %727 = vector.broadcast %cst_252 : f32 to vector<8x18xf32>
    %728 = arith.addf %726, %727 : vector<8x18xf32>
    %729 = vector.extract_strided_slice %718 {offsets = [0, 0], sizes = [8, 18], strides = [1, 1]} : vector<8x128xf32> to vector<8x18xf32>
    %cst_253 = arith.constant 5.000000e-01 : f32
    %730 = vector.broadcast %cst_253 : f32 to vector<8x18xf32>
    %731 = arith.mulf %730, %729 : vector<8x18xf32>
    %732 = math.tanh %731 : vector<8x18xf32>
    %cst_254 = arith.constant 5.000000e-01 : f32
    %733 = vector.broadcast %cst_254 : f32 to vector<8x18xf32>
    %734 = arith.mulf %733, %732 : vector<8x18xf32>
    %cst_255 = arith.constant 5.000000e-01 : f32
    %735 = vector.broadcast %cst_255 : f32 to vector<8x18xf32>
    %736 = arith.addf %734, %735 : vector<8x18xf32>
    %737 = vector.extract_strided_slice %719 {offsets = [0, 0], sizes = [8, 18], strides = [1, 1]} : vector<8x128xf32> to vector<8x18xf32>
    %738 = math.tanh %737 : vector<8x18xf32>
    %739 = vector.extract_strided_slice %720 {offsets = [0, 0], sizes = [8, 18], strides = [1, 1]} : vector<8x128xf32> to vector<8x18xf32>
    %cst_256 = arith.constant 5.000000e-01 : f32
    %740 = vector.broadcast %cst_256 : f32 to vector<8x18xf32>
    %741 = arith.mulf %740, %739 : vector<8x18xf32>
    %742 = math.tanh %741 : vector<8x18xf32>
    %cst_257 = arith.constant 5.000000e-01 : f32
    %743 = vector.broadcast %cst_257 : f32 to vector<8x18xf32>
    %744 = arith.mulf %743, %742 : vector<8x18xf32>
    %cst_258 = arith.constant 5.000000e-01 : f32
    %745 = vector.broadcast %cst_258 : f32 to vector<8x18xf32>
    %746 = arith.addf %744, %745 : vector<8x18xf32>
    %747 = arith.mulf %736, %699 : vector<8x18xf32>
    %748 = arith.mulf %728, %738 : vector<8x18xf32>
    %749 = arith.addf %747, %748 : vector<8x18xf32>
    %750 = math.tanh %749 : vector<8x18xf32>
    %751 = arith.mulf %746, %750 : vector<8x18xf32>
    %752 = arith.index_cast %c14_i32 : i32 to index
    %c0_259 = arith.constant 0 : index
    %c0_260 = arith.constant 0 : index
    %753 = vector.load %arg5[%752, %c0_259, %c0_260] : memref<30x1x18xf32, #tpu.memory_space<vmem>>, vector<1x1x18xf32>
    %754 = vector.shape_cast %753 : vector<1x1x18xf32> to vector<1x18xf32>
    %755 = vector.broadcast %754 : vector<1x18xf32> to vector<8x18xf32>
    %756 = arith.mulf %751, %755 : vector<8x18xf32>
    %757 = arith.addf %707, %756 : vector<8x18xf32>
    %c15_i32 = arith.constant 15 : i32
    %758 = arith.index_cast %c15_i32 : i32 to index
    %c0_261 = arith.constant 0 : index
    %c0_262 = arith.constant 0 : index
    %759 = vector.load %arg1[%758, %c0_261, %c0_262] : memref<30x8x1xf32, #tpu.memory_space<vmem>>, vector<1x8x1xf32>
    %760 = vector.shape_cast %759 : vector<1x8x1xf32> to vector<8x1xf32>
    %761 = vector.broadcast %760 : vector<8x1xf32> to vector<8x128xf32>
    %762 = vector.broadcast %1 : vector<1x128xf32> to vector<8x128xf32>
    %763 = arith.mulf %761, %762 : vector<8x128xf32>
    %764 = vector.broadcast %3 : vector<1x128xf32> to vector<8x128xf32>
    %765 = arith.addf %763, %764 : vector<8x128xf32>
    %cst_263 = arith.constant dense<0.000000e+00> : vector<8x128xf32>
    %766 = tpu.matmul %751, %4, %cst_263 {dimension_numbers = #tpu.dot_dimension_numbers<[1], [0], [0], [1], [0, 0, 1, 1], [], []>} : vector<8x18xf32>, vector<18x128xf32>, vector<8x128xf32> -> vector<8x128xf32>
    %767 = arith.addf %765, %766 : vector<8x128xf32>
    %c110_i32_264 = arith.constant 110 : i32
    %768 = tpu.dynamic_rotate %767 by %c110_i32_264 dim 1 : vector<8x128xf32>, i32 -> vector<8x128xf32>
    %c92_i32_265 = arith.constant 92 : i32
    %769 = tpu.dynamic_rotate %767 by %c92_i32_265 dim 1 : vector<8x128xf32>, i32 -> vector<8x128xf32>
    %c74_i32_266 = arith.constant 74 : i32
    %770 = tpu.dynamic_rotate %767 by %c74_i32_266 dim 1 : vector<8x128xf32>, i32 -> vector<8x128xf32>
    %771 = vector.extract_strided_slice %767 {offsets = [0, 0], sizes = [8, 18], strides = [1, 1]} : vector<8x128xf32> to vector<8x18xf32>
    %cst_267 = arith.constant 5.000000e-01 : f32
    %772 = vector.broadcast %cst_267 : f32 to vector<8x18xf32>
    %773 = arith.mulf %772, %771 : vector<8x18xf32>
    %774 = math.tanh %773 : vector<8x18xf32>
    %cst_268 = arith.constant 5.000000e-01 : f32
    %775 = vector.broadcast %cst_268 : f32 to vector<8x18xf32>
    %776 = arith.mulf %775, %774 : vector<8x18xf32>
    %cst_269 = arith.constant 5.000000e-01 : f32
    %777 = vector.broadcast %cst_269 : f32 to vector<8x18xf32>
    %778 = arith.addf %776, %777 : vector<8x18xf32>
    %779 = vector.extract_strided_slice %768 {offsets = [0, 0], sizes = [8, 18], strides = [1, 1]} : vector<8x128xf32> to vector<8x18xf32>
    %cst_270 = arith.constant 5.000000e-01 : f32
    %780 = vector.broadcast %cst_270 : f32 to vector<8x18xf32>
    %781 = arith.mulf %780, %779 : vector<8x18xf32>
    %782 = math.tanh %781 : vector<8x18xf32>
    %cst_271 = arith.constant 5.000000e-01 : f32
    %783 = vector.broadcast %cst_271 : f32 to vector<8x18xf32>
    %784 = arith.mulf %783, %782 : vector<8x18xf32>
    %cst_272 = arith.constant 5.000000e-01 : f32
    %785 = vector.broadcast %cst_272 : f32 to vector<8x18xf32>
    %786 = arith.addf %784, %785 : vector<8x18xf32>
    %787 = vector.extract_strided_slice %769 {offsets = [0, 0], sizes = [8, 18], strides = [1, 1]} : vector<8x128xf32> to vector<8x18xf32>
    %788 = math.tanh %787 : vector<8x18xf32>
    %789 = vector.extract_strided_slice %770 {offsets = [0, 0], sizes = [8, 18], strides = [1, 1]} : vector<8x128xf32> to vector<8x18xf32>
    %cst_273 = arith.constant 5.000000e-01 : f32
    %790 = vector.broadcast %cst_273 : f32 to vector<8x18xf32>
    %791 = arith.mulf %790, %789 : vector<8x18xf32>
    %792 = math.tanh %791 : vector<8x18xf32>
    %cst_274 = arith.constant 5.000000e-01 : f32
    %793 = vector.broadcast %cst_274 : f32 to vector<8x18xf32>
    %794 = arith.mulf %793, %792 : vector<8x18xf32>
    %cst_275 = arith.constant 5.000000e-01 : f32
    %795 = vector.broadcast %cst_275 : f32 to vector<8x18xf32>
    %796 = arith.addf %794, %795 : vector<8x18xf32>
    %797 = arith.mulf %786, %749 : vector<8x18xf32>
    %798 = arith.mulf %778, %788 : vector<8x18xf32>
    %799 = arith.addf %797, %798 : vector<8x18xf32>
    %800 = math.tanh %799 : vector<8x18xf32>
    %801 = arith.mulf %796, %800 : vector<8x18xf32>
    %802 = arith.index_cast %c15_i32 : i32 to index
    %c0_276 = arith.constant 0 : index
    %c0_277 = arith.constant 0 : index
    %803 = vector.load %arg5[%802, %c0_276, %c0_277] : memref<30x1x18xf32, #tpu.memory_space<vmem>>, vector<1x1x18xf32>
    %804 = vector.shape_cast %803 : vector<1x1x18xf32> to vector<1x18xf32>
    %805 = vector.broadcast %804 : vector<1x18xf32> to vector<8x18xf32>
    %806 = arith.mulf %801, %805 : vector<8x18xf32>
    %807 = arith.addf %757, %806 : vector<8x18xf32>
    %c16_i32 = arith.constant 16 : i32
    %808 = arith.index_cast %c16_i32 : i32 to index
    %c0_278 = arith.constant 0 : index
    %c0_279 = arith.constant 0 : index
    %809 = vector.load %arg1[%808, %c0_278, %c0_279] : memref<30x8x1xf32, #tpu.memory_space<vmem>>, vector<1x8x1xf32>
    %810 = vector.shape_cast %809 : vector<1x8x1xf32> to vector<8x1xf32>
    %811 = vector.broadcast %810 : vector<8x1xf32> to vector<8x128xf32>
    %812 = vector.broadcast %1 : vector<1x128xf32> to vector<8x128xf32>
    %813 = arith.mulf %811, %812 : vector<8x128xf32>
    %814 = vector.broadcast %3 : vector<1x128xf32> to vector<8x128xf32>
    %815 = arith.addf %813, %814 : vector<8x128xf32>
    %cst_280 = arith.constant dense<0.000000e+00> : vector<8x128xf32>
    %816 = tpu.matmul %801, %4, %cst_280 {dimension_numbers = #tpu.dot_dimension_numbers<[1], [0], [0], [1], [0, 0, 1, 1], [], []>} : vector<8x18xf32>, vector<18x128xf32>, vector<8x128xf32> -> vector<8x128xf32>
    %817 = arith.addf %815, %816 : vector<8x128xf32>
    %c110_i32_281 = arith.constant 110 : i32
    %818 = tpu.dynamic_rotate %817 by %c110_i32_281 dim 1 : vector<8x128xf32>, i32 -> vector<8x128xf32>
    %c92_i32_282 = arith.constant 92 : i32
    %819 = tpu.dynamic_rotate %817 by %c92_i32_282 dim 1 : vector<8x128xf32>, i32 -> vector<8x128xf32>
    %c74_i32_283 = arith.constant 74 : i32
    %820 = tpu.dynamic_rotate %817 by %c74_i32_283 dim 1 : vector<8x128xf32>, i32 -> vector<8x128xf32>
    %821 = vector.extract_strided_slice %817 {offsets = [0, 0], sizes = [8, 18], strides = [1, 1]} : vector<8x128xf32> to vector<8x18xf32>
    %cst_284 = arith.constant 5.000000e-01 : f32
    %822 = vector.broadcast %cst_284 : f32 to vector<8x18xf32>
    %823 = arith.mulf %822, %821 : vector<8x18xf32>
    %824 = math.tanh %823 : vector<8x18xf32>
    %cst_285 = arith.constant 5.000000e-01 : f32
    %825 = vector.broadcast %cst_285 : f32 to vector<8x18xf32>
    %826 = arith.mulf %825, %824 : vector<8x18xf32>
    %cst_286 = arith.constant 5.000000e-01 : f32
    %827 = vector.broadcast %cst_286 : f32 to vector<8x18xf32>
    %828 = arith.addf %826, %827 : vector<8x18xf32>
    %829 = vector.extract_strided_slice %818 {offsets = [0, 0], sizes = [8, 18], strides = [1, 1]} : vector<8x128xf32> to vector<8x18xf32>
    %cst_287 = arith.constant 5.000000e-01 : f32
    %830 = vector.broadcast %cst_287 : f32 to vector<8x18xf32>
    %831 = arith.mulf %830, %829 : vector<8x18xf32>
    %832 = math.tanh %831 : vector<8x18xf32>
    %cst_288 = arith.constant 5.000000e-01 : f32
    %833 = vector.broadcast %cst_288 : f32 to vector<8x18xf32>
    %834 = arith.mulf %833, %832 : vector<8x18xf32>
    %cst_289 = arith.constant 5.000000e-01 : f32
    %835 = vector.broadcast %cst_289 : f32 to vector<8x18xf32>
    %836 = arith.addf %834, %835 : vector<8x18xf32>
    %837 = vector.extract_strided_slice %819 {offsets = [0, 0], sizes = [8, 18], strides = [1, 1]} : vector<8x128xf32> to vector<8x18xf32>
    %838 = math.tanh %837 : vector<8x18xf32>
    %839 = vector.extract_strided_slice %820 {offsets = [0, 0], sizes = [8, 18], strides = [1, 1]} : vector<8x128xf32> to vector<8x18xf32>
    %cst_290 = arith.constant 5.000000e-01 : f32
    %840 = vector.broadcast %cst_290 : f32 to vector<8x18xf32>
    %841 = arith.mulf %840, %839 : vector<8x18xf32>
    %842 = math.tanh %841 : vector<8x18xf32>
    %cst_291 = arith.constant 5.000000e-01 : f32
    %843 = vector.broadcast %cst_291 : f32 to vector<8x18xf32>
    %844 = arith.mulf %843, %842 : vector<8x18xf32>
    %cst_292 = arith.constant 5.000000e-01 : f32
    %845 = vector.broadcast %cst_292 : f32 to vector<8x18xf32>
    %846 = arith.addf %844, %845 : vector<8x18xf32>
    %847 = arith.mulf %836, %799 : vector<8x18xf32>
    %848 = arith.mulf %828, %838 : vector<8x18xf32>
    %849 = arith.addf %847, %848 : vector<8x18xf32>
    %850 = math.tanh %849 : vector<8x18xf32>
    %851 = arith.mulf %846, %850 : vector<8x18xf32>
    %852 = arith.index_cast %c16_i32 : i32 to index
    %c0_293 = arith.constant 0 : index
    %c0_294 = arith.constant 0 : index
    %853 = vector.load %arg5[%852, %c0_293, %c0_294] : memref<30x1x18xf32, #tpu.memory_space<vmem>>, vector<1x1x18xf32>
    %854 = vector.shape_cast %853 : vector<1x1x18xf32> to vector<1x18xf32>
    %855 = vector.broadcast %854 : vector<1x18xf32> to vector<8x18xf32>
    %856 = arith.mulf %851, %855 : vector<8x18xf32>
    %857 = arith.addf %807, %856 : vector<8x18xf32>
    %c17_i32 = arith.constant 17 : i32
    %858 = arith.index_cast %c17_i32 : i32 to index
    %c0_295 = arith.constant 0 : index
    %c0_296 = arith.constant 0 : index
    %859 = vector.load %arg1[%858, %c0_295, %c0_296] : memref<30x8x1xf32, #tpu.memory_space<vmem>>, vector<1x8x1xf32>
    %860 = vector.shape_cast %859 : vector<1x8x1xf32> to vector<8x1xf32>
    %861 = vector.broadcast %860 : vector<8x1xf32> to vector<8x128xf32>
    %862 = vector.broadcast %1 : vector<1x128xf32> to vector<8x128xf32>
    %863 = arith.mulf %861, %862 : vector<8x128xf32>
    %864 = vector.broadcast %3 : vector<1x128xf32> to vector<8x128xf32>
    %865 = arith.addf %863, %864 : vector<8x128xf32>
    %cst_297 = arith.constant dense<0.000000e+00> : vector<8x128xf32>
    %866 = tpu.matmul %851, %4, %cst_297 {dimension_numbers = #tpu.dot_dimension_numbers<[1], [0], [0], [1], [0, 0, 1, 1], [], []>} : vector<8x18xf32>, vector<18x128xf32>, vector<8x128xf32> -> vector<8x128xf32>
    %867 = arith.addf %865, %866 : vector<8x128xf32>
    %c110_i32_298 = arith.constant 110 : i32
    %868 = tpu.dynamic_rotate %867 by %c110_i32_298 dim 1 : vector<8x128xf32>, i32 -> vector<8x128xf32>
    %c92_i32_299 = arith.constant 92 : i32
    %869 = tpu.dynamic_rotate %867 by %c92_i32_299 dim 1 : vector<8x128xf32>, i32 -> vector<8x128xf32>
    %c74_i32_300 = arith.constant 74 : i32
    %870 = tpu.dynamic_rotate %867 by %c74_i32_300 dim 1 : vector<8x128xf32>, i32 -> vector<8x128xf32>
    %871 = vector.extract_strided_slice %867 {offsets = [0, 0], sizes = [8, 18], strides = [1, 1]} : vector<8x128xf32> to vector<8x18xf32>
    %cst_301 = arith.constant 5.000000e-01 : f32
    %872 = vector.broadcast %cst_301 : f32 to vector<8x18xf32>
    %873 = arith.mulf %872, %871 : vector<8x18xf32>
    %874 = math.tanh %873 : vector<8x18xf32>
    %cst_302 = arith.constant 5.000000e-01 : f32
    %875 = vector.broadcast %cst_302 : f32 to vector<8x18xf32>
    %876 = arith.mulf %875, %874 : vector<8x18xf32>
    %cst_303 = arith.constant 5.000000e-01 : f32
    %877 = vector.broadcast %cst_303 : f32 to vector<8x18xf32>
    %878 = arith.addf %876, %877 : vector<8x18xf32>
    %879 = vector.extract_strided_slice %868 {offsets = [0, 0], sizes = [8, 18], strides = [1, 1]} : vector<8x128xf32> to vector<8x18xf32>
    %cst_304 = arith.constant 5.000000e-01 : f32
    %880 = vector.broadcast %cst_304 : f32 to vector<8x18xf32>
    %881 = arith.mulf %880, %879 : vector<8x18xf32>
    %882 = math.tanh %881 : vector<8x18xf32>
    %cst_305 = arith.constant 5.000000e-01 : f32
    %883 = vector.broadcast %cst_305 : f32 to vector<8x18xf32>
    %884 = arith.mulf %883, %882 : vector<8x18xf32>
    %cst_306 = arith.constant 5.000000e-01 : f32
    %885 = vector.broadcast %cst_306 : f32 to vector<8x18xf32>
    %886 = arith.addf %884, %885 : vector<8x18xf32>
    %887 = vector.extract_strided_slice %869 {offsets = [0, 0], sizes = [8, 18], strides = [1, 1]} : vector<8x128xf32> to vector<8x18xf32>
    %888 = math.tanh %887 : vector<8x18xf32>
    %889 = vector.extract_strided_slice %870 {offsets = [0, 0], sizes = [8, 18], strides = [1, 1]} : vector<8x128xf32> to vector<8x18xf32>
    %cst_307 = arith.constant 5.000000e-01 : f32
    %890 = vector.broadcast %cst_307 : f32 to vector<8x18xf32>
    %891 = arith.mulf %890, %889 : vector<8x18xf32>
    %892 = math.tanh %891 : vector<8x18xf32>
    %cst_308 = arith.constant 5.000000e-01 : f32
    %893 = vector.broadcast %cst_308 : f32 to vector<8x18xf32>
    %894 = arith.mulf %893, %892 : vector<8x18xf32>
    %cst_309 = arith.constant 5.000000e-01 : f32
    %895 = vector.broadcast %cst_309 : f32 to vector<8x18xf32>
    %896 = arith.addf %894, %895 : vector<8x18xf32>
    %897 = arith.mulf %886, %849 : vector<8x18xf32>
    %898 = arith.mulf %878, %888 : vector<8x18xf32>
    %899 = arith.addf %897, %898 : vector<8x18xf32>
    %900 = math.tanh %899 : vector<8x18xf32>
    %901 = arith.mulf %896, %900 : vector<8x18xf32>
    %902 = arith.index_cast %c17_i32 : i32 to index
    %c0_310 = arith.constant 0 : index
    %c0_311 = arith.constant 0 : index
    %903 = vector.load %arg5[%902, %c0_310, %c0_311] : memref<30x1x18xf32, #tpu.memory_space<vmem>>, vector<1x1x18xf32>
    %904 = vector.shape_cast %903 : vector<1x1x18xf32> to vector<1x18xf32>
    %905 = vector.broadcast %904 : vector<1x18xf32> to vector<8x18xf32>
    %906 = arith.mulf %901, %905 : vector<8x18xf32>
    %907 = arith.addf %857, %906 : vector<8x18xf32>
    %c18_i32 = arith.constant 18 : i32
    %908 = arith.index_cast %c18_i32 : i32 to index
    %c0_312 = arith.constant 0 : index
    %c0_313 = arith.constant 0 : index
    %909 = vector.load %arg1[%908, %c0_312, %c0_313] : memref<30x8x1xf32, #tpu.memory_space<vmem>>, vector<1x8x1xf32>
    %910 = vector.shape_cast %909 : vector<1x8x1xf32> to vector<8x1xf32>
    %911 = vector.broadcast %910 : vector<8x1xf32> to vector<8x128xf32>
    %912 = vector.broadcast %1 : vector<1x128xf32> to vector<8x128xf32>
    %913 = arith.mulf %911, %912 : vector<8x128xf32>
    %914 = vector.broadcast %3 : vector<1x128xf32> to vector<8x128xf32>
    %915 = arith.addf %913, %914 : vector<8x128xf32>
    %cst_314 = arith.constant dense<0.000000e+00> : vector<8x128xf32>
    %916 = tpu.matmul %901, %4, %cst_314 {dimension_numbers = #tpu.dot_dimension_numbers<[1], [0], [0], [1], [0, 0, 1, 1], [], []>} : vector<8x18xf32>, vector<18x128xf32>, vector<8x128xf32> -> vector<8x128xf32>
    %917 = arith.addf %915, %916 : vector<8x128xf32>
    %c110_i32_315 = arith.constant 110 : i32
    %918 = tpu.dynamic_rotate %917 by %c110_i32_315 dim 1 : vector<8x128xf32>, i32 -> vector<8x128xf32>
    %c92_i32_316 = arith.constant 92 : i32
    %919 = tpu.dynamic_rotate %917 by %c92_i32_316 dim 1 : vector<8x128xf32>, i32 -> vector<8x128xf32>
    %c74_i32_317 = arith.constant 74 : i32
    %920 = tpu.dynamic_rotate %917 by %c74_i32_317 dim 1 : vector<8x128xf32>, i32 -> vector<8x128xf32>
    %921 = vector.extract_strided_slice %917 {offsets = [0, 0], sizes = [8, 18], strides = [1, 1]} : vector<8x128xf32> to vector<8x18xf32>
    %cst_318 = arith.constant 5.000000e-01 : f32
    %922 = vector.broadcast %cst_318 : f32 to vector<8x18xf32>
    %923 = arith.mulf %922, %921 : vector<8x18xf32>
    %924 = math.tanh %923 : vector<8x18xf32>
    %cst_319 = arith.constant 5.000000e-01 : f32
    %925 = vector.broadcast %cst_319 : f32 to vector<8x18xf32>
    %926 = arith.mulf %925, %924 : vector<8x18xf32>
    %cst_320 = arith.constant 5.000000e-01 : f32
    %927 = vector.broadcast %cst_320 : f32 to vector<8x18xf32>
    %928 = arith.addf %926, %927 : vector<8x18xf32>
    %929 = vector.extract_strided_slice %918 {offsets = [0, 0], sizes = [8, 18], strides = [1, 1]} : vector<8x128xf32> to vector<8x18xf32>
    %cst_321 = arith.constant 5.000000e-01 : f32
    %930 = vector.broadcast %cst_321 : f32 to vector<8x18xf32>
    %931 = arith.mulf %930, %929 : vector<8x18xf32>
    %932 = math.tanh %931 : vector<8x18xf32>
    %cst_322 = arith.constant 5.000000e-01 : f32
    %933 = vector.broadcast %cst_322 : f32 to vector<8x18xf32>
    %934 = arith.mulf %933, %932 : vector<8x18xf32>
    %cst_323 = arith.constant 5.000000e-01 : f32
    %935 = vector.broadcast %cst_323 : f32 to vector<8x18xf32>
    %936 = arith.addf %934, %935 : vector<8x18xf32>
    %937 = vector.extract_strided_slice %919 {offsets = [0, 0], sizes = [8, 18], strides = [1, 1]} : vector<8x128xf32> to vector<8x18xf32>
    %938 = math.tanh %937 : vector<8x18xf32>
    %939 = vector.extract_strided_slice %920 {offsets = [0, 0], sizes = [8, 18], strides = [1, 1]} : vector<8x128xf32> to vector<8x18xf32>
    %cst_324 = arith.constant 5.000000e-01 : f32
    %940 = vector.broadcast %cst_324 : f32 to vector<8x18xf32>
    %941 = arith.mulf %940, %939 : vector<8x18xf32>
    %942 = math.tanh %941 : vector<8x18xf32>
    %cst_325 = arith.constant 5.000000e-01 : f32
    %943 = vector.broadcast %cst_325 : f32 to vector<8x18xf32>
    %944 = arith.mulf %943, %942 : vector<8x18xf32>
    %cst_326 = arith.constant 5.000000e-01 : f32
    %945 = vector.broadcast %cst_326 : f32 to vector<8x18xf32>
    %946 = arith.addf %944, %945 : vector<8x18xf32>
    %947 = arith.mulf %936, %899 : vector<8x18xf32>
    %948 = arith.mulf %928, %938 : vector<8x18xf32>
    %949 = arith.addf %947, %948 : vector<8x18xf32>
    %950 = math.tanh %949 : vector<8x18xf32>
    %951 = arith.mulf %946, %950 : vector<8x18xf32>
    %952 = arith.index_cast %c18_i32 : i32 to index
    %c0_327 = arith.constant 0 : index
    %c0_328 = arith.constant 0 : index
    %953 = vector.load %arg5[%952, %c0_327, %c0_328] : memref<30x1x18xf32, #tpu.memory_space<vmem>>, vector<1x1x18xf32>
    %954 = vector.shape_cast %953 : vector<1x1x18xf32> to vector<1x18xf32>
    %955 = vector.broadcast %954 : vector<1x18xf32> to vector<8x18xf32>
    %956 = arith.mulf %951, %955 : vector<8x18xf32>
    %957 = arith.addf %907, %956 : vector<8x18xf32>
    %c19_i32 = arith.constant 19 : i32
    %958 = arith.index_cast %c19_i32 : i32 to index
    %c0_329 = arith.constant 0 : index
    %c0_330 = arith.constant 0 : index
    %959 = vector.load %arg1[%958, %c0_329, %c0_330] : memref<30x8x1xf32, #tpu.memory_space<vmem>>, vector<1x8x1xf32>
    %960 = vector.shape_cast %959 : vector<1x8x1xf32> to vector<8x1xf32>
    %961 = vector.broadcast %960 : vector<8x1xf32> to vector<8x128xf32>
    %962 = vector.broadcast %1 : vector<1x128xf32> to vector<8x128xf32>
    %963 = arith.mulf %961, %962 : vector<8x128xf32>
    %964 = vector.broadcast %3 : vector<1x128xf32> to vector<8x128xf32>
    %965 = arith.addf %963, %964 : vector<8x128xf32>
    %cst_331 = arith.constant dense<0.000000e+00> : vector<8x128xf32>
    %966 = tpu.matmul %951, %4, %cst_331 {dimension_numbers = #tpu.dot_dimension_numbers<[1], [0], [0], [1], [0, 0, 1, 1], [], []>} : vector<8x18xf32>, vector<18x128xf32>, vector<8x128xf32> -> vector<8x128xf32>
    %967 = arith.addf %965, %966 : vector<8x128xf32>
    %c110_i32_332 = arith.constant 110 : i32
    %968 = tpu.dynamic_rotate %967 by %c110_i32_332 dim 1 : vector<8x128xf32>, i32 -> vector<8x128xf32>
    %c92_i32_333 = arith.constant 92 : i32
    %969 = tpu.dynamic_rotate %967 by %c92_i32_333 dim 1 : vector<8x128xf32>, i32 -> vector<8x128xf32>
    %c74_i32_334 = arith.constant 74 : i32
    %970 = tpu.dynamic_rotate %967 by %c74_i32_334 dim 1 : vector<8x128xf32>, i32 -> vector<8x128xf32>
    %971 = vector.extract_strided_slice %967 {offsets = [0, 0], sizes = [8, 18], strides = [1, 1]} : vector<8x128xf32> to vector<8x18xf32>
    %cst_335 = arith.constant 5.000000e-01 : f32
    %972 = vector.broadcast %cst_335 : f32 to vector<8x18xf32>
    %973 = arith.mulf %972, %971 : vector<8x18xf32>
    %974 = math.tanh %973 : vector<8x18xf32>
    %cst_336 = arith.constant 5.000000e-01 : f32
    %975 = vector.broadcast %cst_336 : f32 to vector<8x18xf32>
    %976 = arith.mulf %975, %974 : vector<8x18xf32>
    %cst_337 = arith.constant 5.000000e-01 : f32
    %977 = vector.broadcast %cst_337 : f32 to vector<8x18xf32>
    %978 = arith.addf %976, %977 : vector<8x18xf32>
    %979 = vector.extract_strided_slice %968 {offsets = [0, 0], sizes = [8, 18], strides = [1, 1]} : vector<8x128xf32> to vector<8x18xf32>
    %cst_338 = arith.constant 5.000000e-01 : f32
    %980 = vector.broadcast %cst_338 : f32 to vector<8x18xf32>
    %981 = arith.mulf %980, %979 : vector<8x18xf32>
    %982 = math.tanh %981 : vector<8x18xf32>
    %cst_339 = arith.constant 5.000000e-01 : f32
    %983 = vector.broadcast %cst_339 : f32 to vector<8x18xf32>
    %984 = arith.mulf %983, %982 : vector<8x18xf32>
    %cst_340 = arith.constant 5.000000e-01 : f32
    %985 = vector.broadcast %cst_340 : f32 to vector<8x18xf32>
    %986 = arith.addf %984, %985 : vector<8x18xf32>
    %987 = vector.extract_strided_slice %969 {offsets = [0, 0], sizes = [8, 18], strides = [1, 1]} : vector<8x128xf32> to vector<8x18xf32>
    %988 = math.tanh %987 : vector<8x18xf32>
    %989 = vector.extract_strided_slice %970 {offsets = [0, 0], sizes = [8, 18], strides = [1, 1]} : vector<8x128xf32> to vector<8x18xf32>
    %cst_341 = arith.constant 5.000000e-01 : f32
    %990 = vector.broadcast %cst_341 : f32 to vector<8x18xf32>
    %991 = arith.mulf %990, %989 : vector<8x18xf32>
    %992 = math.tanh %991 : vector<8x18xf32>
    %cst_342 = arith.constant 5.000000e-01 : f32
    %993 = vector.broadcast %cst_342 : f32 to vector<8x18xf32>
    %994 = arith.mulf %993, %992 : vector<8x18xf32>
    %cst_343 = arith.constant 5.000000e-01 : f32
    %995 = vector.broadcast %cst_343 : f32 to vector<8x18xf32>
    %996 = arith.addf %994, %995 : vector<8x18xf32>
    %997 = arith.mulf %986, %949 : vector<8x18xf32>
    %998 = arith.mulf %978, %988 : vector<8x18xf32>
    %999 = arith.addf %997, %998 : vector<8x18xf32>
    %1000 = math.tanh %999 : vector<8x18xf32>
    %1001 = arith.mulf %996, %1000 : vector<8x18xf32>
    %1002 = arith.index_cast %c19_i32 : i32 to index
    %c0_344 = arith.constant 0 : index
    %c0_345 = arith.constant 0 : index
    %1003 = vector.load %arg5[%1002, %c0_344, %c0_345] : memref<30x1x18xf32, #tpu.memory_space<vmem>>, vector<1x1x18xf32>
    %1004 = vector.shape_cast %1003 : vector<1x1x18xf32> to vector<1x18xf32>
    %1005 = vector.broadcast %1004 : vector<1x18xf32> to vector<8x18xf32>
    %1006 = arith.mulf %1001, %1005 : vector<8x18xf32>
    %1007 = arith.addf %957, %1006 : vector<8x18xf32>
    %c20_i32 = arith.constant 20 : i32
    %1008 = arith.index_cast %c20_i32 : i32 to index
    %c0_346 = arith.constant 0 : index
    %c0_347 = arith.constant 0 : index
    %1009 = vector.load %arg1[%1008, %c0_346, %c0_347] : memref<30x8x1xf32, #tpu.memory_space<vmem>>, vector<1x8x1xf32>
    %1010 = vector.shape_cast %1009 : vector<1x8x1xf32> to vector<8x1xf32>
    %1011 = vector.broadcast %1010 : vector<8x1xf32> to vector<8x128xf32>
    %1012 = vector.broadcast %1 : vector<1x128xf32> to vector<8x128xf32>
    %1013 = arith.mulf %1011, %1012 : vector<8x128xf32>
    %1014 = vector.broadcast %3 : vector<1x128xf32> to vector<8x128xf32>
    %1015 = arith.addf %1013, %1014 : vector<8x128xf32>
    %cst_348 = arith.constant dense<0.000000e+00> : vector<8x128xf32>
    %1016 = tpu.matmul %1001, %4, %cst_348 {dimension_numbers = #tpu.dot_dimension_numbers<[1], [0], [0], [1], [0, 0, 1, 1], [], []>} : vector<8x18xf32>, vector<18x128xf32>, vector<8x128xf32> -> vector<8x128xf32>
    %1017 = arith.addf %1015, %1016 : vector<8x128xf32>
    %c110_i32_349 = arith.constant 110 : i32
    %1018 = tpu.dynamic_rotate %1017 by %c110_i32_349 dim 1 : vector<8x128xf32>, i32 -> vector<8x128xf32>
    %c92_i32_350 = arith.constant 92 : i32
    %1019 = tpu.dynamic_rotate %1017 by %c92_i32_350 dim 1 : vector<8x128xf32>, i32 -> vector<8x128xf32>
    %c74_i32_351 = arith.constant 74 : i32
    %1020 = tpu.dynamic_rotate %1017 by %c74_i32_351 dim 1 : vector<8x128xf32>, i32 -> vector<8x128xf32>
    %1021 = vector.extract_strided_slice %1017 {offsets = [0, 0], sizes = [8, 18], strides = [1, 1]} : vector<8x128xf32> to vector<8x18xf32>
    %cst_352 = arith.constant 5.000000e-01 : f32
    %1022 = vector.broadcast %cst_352 : f32 to vector<8x18xf32>
    %1023 = arith.mulf %1022, %1021 : vector<8x18xf32>
    %1024 = math.tanh %1023 : vector<8x18xf32>
    %cst_353 = arith.constant 5.000000e-01 : f32
    %1025 = vector.broadcast %cst_353 : f32 to vector<8x18xf32>
    %1026 = arith.mulf %1025, %1024 : vector<8x18xf32>
    %cst_354 = arith.constant 5.000000e-01 : f32
    %1027 = vector.broadcast %cst_354 : f32 to vector<8x18xf32>
    %1028 = arith.addf %1026, %1027 : vector<8x18xf32>
    %1029 = vector.extract_strided_slice %1018 {offsets = [0, 0], sizes = [8, 18], strides = [1, 1]} : vector<8x128xf32> to vector<8x18xf32>
    %cst_355 = arith.constant 5.000000e-01 : f32
    %1030 = vector.broadcast %cst_355 : f32 to vector<8x18xf32>
    %1031 = arith.mulf %1030, %1029 : vector<8x18xf32>
    %1032 = math.tanh %1031 : vector<8x18xf32>
    %cst_356 = arith.constant 5.000000e-01 : f32
    %1033 = vector.broadcast %cst_356 : f32 to vector<8x18xf32>
    %1034 = arith.mulf %1033, %1032 : vector<8x18xf32>
    %cst_357 = arith.constant 5.000000e-01 : f32
    %1035 = vector.broadcast %cst_357 : f32 to vector<8x18xf32>
    %1036 = arith.addf %1034, %1035 : vector<8x18xf32>
    %1037 = vector.extract_strided_slice %1019 {offsets = [0, 0], sizes = [8, 18], strides = [1, 1]} : vector<8x128xf32> to vector<8x18xf32>
    %1038 = math.tanh %1037 : vector<8x18xf32>
    %1039 = vector.extract_strided_slice %1020 {offsets = [0, 0], sizes = [8, 18], strides = [1, 1]} : vector<8x128xf32> to vector<8x18xf32>
    %cst_358 = arith.constant 5.000000e-01 : f32
    %1040 = vector.broadcast %cst_358 : f32 to vector<8x18xf32>
    %1041 = arith.mulf %1040, %1039 : vector<8x18xf32>
    %1042 = math.tanh %1041 : vector<8x18xf32>
    %cst_359 = arith.constant 5.000000e-01 : f32
    %1043 = vector.broadcast %cst_359 : f32 to vector<8x18xf32>
    %1044 = arith.mulf %1043, %1042 : vector<8x18xf32>
    %cst_360 = arith.constant 5.000000e-01 : f32
    %1045 = vector.broadcast %cst_360 : f32 to vector<8x18xf32>
    %1046 = arith.addf %1044, %1045 : vector<8x18xf32>
    %1047 = arith.mulf %1036, %999 : vector<8x18xf32>
    %1048 = arith.mulf %1028, %1038 : vector<8x18xf32>
    %1049 = arith.addf %1047, %1048 : vector<8x18xf32>
    %1050 = math.tanh %1049 : vector<8x18xf32>
    %1051 = arith.mulf %1046, %1050 : vector<8x18xf32>
    %1052 = arith.index_cast %c20_i32 : i32 to index
    %c0_361 = arith.constant 0 : index
    %c0_362 = arith.constant 0 : index
    %1053 = vector.load %arg5[%1052, %c0_361, %c0_362] : memref<30x1x18xf32, #tpu.memory_space<vmem>>, vector<1x1x18xf32>
    %1054 = vector.shape_cast %1053 : vector<1x1x18xf32> to vector<1x18xf32>
    %1055 = vector.broadcast %1054 : vector<1x18xf32> to vector<8x18xf32>
    %1056 = arith.mulf %1051, %1055 : vector<8x18xf32>
    %1057 = arith.addf %1007, %1056 : vector<8x18xf32>
    %c21_i32 = arith.constant 21 : i32
    %1058 = arith.index_cast %c21_i32 : i32 to index
    %c0_363 = arith.constant 0 : index
    %c0_364 = arith.constant 0 : index
    %1059 = vector.load %arg1[%1058, %c0_363, %c0_364] : memref<30x8x1xf32, #tpu.memory_space<vmem>>, vector<1x8x1xf32>
    %1060 = vector.shape_cast %1059 : vector<1x8x1xf32> to vector<8x1xf32>
    %1061 = vector.broadcast %1060 : vector<8x1xf32> to vector<8x128xf32>
    %1062 = vector.broadcast %1 : vector<1x128xf32> to vector<8x128xf32>
    %1063 = arith.mulf %1061, %1062 : vector<8x128xf32>
    %1064 = vector.broadcast %3 : vector<1x128xf32> to vector<8x128xf32>
    %1065 = arith.addf %1063, %1064 : vector<8x128xf32>
    %cst_365 = arith.constant dense<0.000000e+00> : vector<8x128xf32>
    %1066 = tpu.matmul %1051, %4, %cst_365 {dimension_numbers = #tpu.dot_dimension_numbers<[1], [0], [0], [1], [0, 0, 1, 1], [], []>} : vector<8x18xf32>, vector<18x128xf32>, vector<8x128xf32> -> vector<8x128xf32>
    %1067 = arith.addf %1065, %1066 : vector<8x128xf32>
    %c110_i32_366 = arith.constant 110 : i32
    %1068 = tpu.dynamic_rotate %1067 by %c110_i32_366 dim 1 : vector<8x128xf32>, i32 -> vector<8x128xf32>
    %c92_i32_367 = arith.constant 92 : i32
    %1069 = tpu.dynamic_rotate %1067 by %c92_i32_367 dim 1 : vector<8x128xf32>, i32 -> vector<8x128xf32>
    %c74_i32_368 = arith.constant 74 : i32
    %1070 = tpu.dynamic_rotate %1067 by %c74_i32_368 dim 1 : vector<8x128xf32>, i32 -> vector<8x128xf32>
    %1071 = vector.extract_strided_slice %1067 {offsets = [0, 0], sizes = [8, 18], strides = [1, 1]} : vector<8x128xf32> to vector<8x18xf32>
    %cst_369 = arith.constant 5.000000e-01 : f32
    %1072 = vector.broadcast %cst_369 : f32 to vector<8x18xf32>
    %1073 = arith.mulf %1072, %1071 : vector<8x18xf32>
    %1074 = math.tanh %1073 : vector<8x18xf32>
    %cst_370 = arith.constant 5.000000e-01 : f32
    %1075 = vector.broadcast %cst_370 : f32 to vector<8x18xf32>
    %1076 = arith.mulf %1075, %1074 : vector<8x18xf32>
    %cst_371 = arith.constant 5.000000e-01 : f32
    %1077 = vector.broadcast %cst_371 : f32 to vector<8x18xf32>
    %1078 = arith.addf %1076, %1077 : vector<8x18xf32>
    %1079 = vector.extract_strided_slice %1068 {offsets = [0, 0], sizes = [8, 18], strides = [1, 1]} : vector<8x128xf32> to vector<8x18xf32>
    %cst_372 = arith.constant 5.000000e-01 : f32
    %1080 = vector.broadcast %cst_372 : f32 to vector<8x18xf32>
    %1081 = arith.mulf %1080, %1079 : vector<8x18xf32>
    %1082 = math.tanh %1081 : vector<8x18xf32>
    %cst_373 = arith.constant 5.000000e-01 : f32
    %1083 = vector.broadcast %cst_373 : f32 to vector<8x18xf32>
    %1084 = arith.mulf %1083, %1082 : vector<8x18xf32>
    %cst_374 = arith.constant 5.000000e-01 : f32
    %1085 = vector.broadcast %cst_374 : f32 to vector<8x18xf32>
    %1086 = arith.addf %1084, %1085 : vector<8x18xf32>
    %1087 = vector.extract_strided_slice %1069 {offsets = [0, 0], sizes = [8, 18], strides = [1, 1]} : vector<8x128xf32> to vector<8x18xf32>
    %1088 = math.tanh %1087 : vector<8x18xf32>
    %1089 = vector.extract_strided_slice %1070 {offsets = [0, 0], sizes = [8, 18], strides = [1, 1]} : vector<8x128xf32> to vector<8x18xf32>
    %cst_375 = arith.constant 5.000000e-01 : f32
    %1090 = vector.broadcast %cst_375 : f32 to vector<8x18xf32>
    %1091 = arith.mulf %1090, %1089 : vector<8x18xf32>
    %1092 = math.tanh %1091 : vector<8x18xf32>
    %cst_376 = arith.constant 5.000000e-01 : f32
    %1093 = vector.broadcast %cst_376 : f32 to vector<8x18xf32>
    %1094 = arith.mulf %1093, %1092 : vector<8x18xf32>
    %cst_377 = arith.constant 5.000000e-01 : f32
    %1095 = vector.broadcast %cst_377 : f32 to vector<8x18xf32>
    %1096 = arith.addf %1094, %1095 : vector<8x18xf32>
    %1097 = arith.mulf %1086, %1049 : vector<8x18xf32>
    %1098 = arith.mulf %1078, %1088 : vector<8x18xf32>
    %1099 = arith.addf %1097, %1098 : vector<8x18xf32>
    %1100 = math.tanh %1099 : vector<8x18xf32>
    %1101 = arith.mulf %1096, %1100 : vector<8x18xf32>
    %1102 = arith.index_cast %c21_i32 : i32 to index
    %c0_378 = arith.constant 0 : index
    %c0_379 = arith.constant 0 : index
    %1103 = vector.load %arg5[%1102, %c0_378, %c0_379] : memref<30x1x18xf32, #tpu.memory_space<vmem>>, vector<1x1x18xf32>
    %1104 = vector.shape_cast %1103 : vector<1x1x18xf32> to vector<1x18xf32>
    %1105 = vector.broadcast %1104 : vector<1x18xf32> to vector<8x18xf32>
    %1106 = arith.mulf %1101, %1105 : vector<8x18xf32>
    %1107 = arith.addf %1057, %1106 : vector<8x18xf32>
    %c22_i32 = arith.constant 22 : i32
    %1108 = arith.index_cast %c22_i32 : i32 to index
    %c0_380 = arith.constant 0 : index
    %c0_381 = arith.constant 0 : index
    %1109 = vector.load %arg1[%1108, %c0_380, %c0_381] : memref<30x8x1xf32, #tpu.memory_space<vmem>>, vector<1x8x1xf32>
    %1110 = vector.shape_cast %1109 : vector<1x8x1xf32> to vector<8x1xf32>
    %1111 = vector.broadcast %1110 : vector<8x1xf32> to vector<8x128xf32>
    %1112 = vector.broadcast %1 : vector<1x128xf32> to vector<8x128xf32>
    %1113 = arith.mulf %1111, %1112 : vector<8x128xf32>
    %1114 = vector.broadcast %3 : vector<1x128xf32> to vector<8x128xf32>
    %1115 = arith.addf %1113, %1114 : vector<8x128xf32>
    %cst_382 = arith.constant dense<0.000000e+00> : vector<8x128xf32>
    %1116 = tpu.matmul %1101, %4, %cst_382 {dimension_numbers = #tpu.dot_dimension_numbers<[1], [0], [0], [1], [0, 0, 1, 1], [], []>} : vector<8x18xf32>, vector<18x128xf32>, vector<8x128xf32> -> vector<8x128xf32>
    %1117 = arith.addf %1115, %1116 : vector<8x128xf32>
    %c110_i32_383 = arith.constant 110 : i32
    %1118 = tpu.dynamic_rotate %1117 by %c110_i32_383 dim 1 : vector<8x128xf32>, i32 -> vector<8x128xf32>
    %c92_i32_384 = arith.constant 92 : i32
    %1119 = tpu.dynamic_rotate %1117 by %c92_i32_384 dim 1 : vector<8x128xf32>, i32 -> vector<8x128xf32>
    %c74_i32_385 = arith.constant 74 : i32
    %1120 = tpu.dynamic_rotate %1117 by %c74_i32_385 dim 1 : vector<8x128xf32>, i32 -> vector<8x128xf32>
    %1121 = vector.extract_strided_slice %1117 {offsets = [0, 0], sizes = [8, 18], strides = [1, 1]} : vector<8x128xf32> to vector<8x18xf32>
    %cst_386 = arith.constant 5.000000e-01 : f32
    %1122 = vector.broadcast %cst_386 : f32 to vector<8x18xf32>
    %1123 = arith.mulf %1122, %1121 : vector<8x18xf32>
    %1124 = math.tanh %1123 : vector<8x18xf32>
    %cst_387 = arith.constant 5.000000e-01 : f32
    %1125 = vector.broadcast %cst_387 : f32 to vector<8x18xf32>
    %1126 = arith.mulf %1125, %1124 : vector<8x18xf32>
    %cst_388 = arith.constant 5.000000e-01 : f32
    %1127 = vector.broadcast %cst_388 : f32 to vector<8x18xf32>
    %1128 = arith.addf %1126, %1127 : vector<8x18xf32>
    %1129 = vector.extract_strided_slice %1118 {offsets = [0, 0], sizes = [8, 18], strides = [1, 1]} : vector<8x128xf32> to vector<8x18xf32>
    %cst_389 = arith.constant 5.000000e-01 : f32
    %1130 = vector.broadcast %cst_389 : f32 to vector<8x18xf32>
    %1131 = arith.mulf %1130, %1129 : vector<8x18xf32>
    %1132 = math.tanh %1131 : vector<8x18xf32>
    %cst_390 = arith.constant 5.000000e-01 : f32
    %1133 = vector.broadcast %cst_390 : f32 to vector<8x18xf32>
    %1134 = arith.mulf %1133, %1132 : vector<8x18xf32>
    %cst_391 = arith.constant 5.000000e-01 : f32
    %1135 = vector.broadcast %cst_391 : f32 to vector<8x18xf32>
    %1136 = arith.addf %1134, %1135 : vector<8x18xf32>
    %1137 = vector.extract_strided_slice %1119 {offsets = [0, 0], sizes = [8, 18], strides = [1, 1]} : vector<8x128xf32> to vector<8x18xf32>
    %1138 = math.tanh %1137 : vector<8x18xf32>
    %1139 = vector.extract_strided_slice %1120 {offsets = [0, 0], sizes = [8, 18], strides = [1, 1]} : vector<8x128xf32> to vector<8x18xf32>
    %cst_392 = arith.constant 5.000000e-01 : f32
    %1140 = vector.broadcast %cst_392 : f32 to vector<8x18xf32>
    %1141 = arith.mulf %1140, %1139 : vector<8x18xf32>
    %1142 = math.tanh %1141 : vector<8x18xf32>
    %cst_393 = arith.constant 5.000000e-01 : f32
    %1143 = vector.broadcast %cst_393 : f32 to vector<8x18xf32>
    %1144 = arith.mulf %1143, %1142 : vector<8x18xf32>
    %cst_394 = arith.constant 5.000000e-01 : f32
    %1145 = vector.broadcast %cst_394 : f32 to vector<8x18xf32>
    %1146 = arith.addf %1144, %1145 : vector<8x18xf32>
    %1147 = arith.mulf %1136, %1099 : vector<8x18xf32>
    %1148 = arith.mulf %1128, %1138 : vector<8x18xf32>
    %1149 = arith.addf %1147, %1148 : vector<8x18xf32>
    %1150 = math.tanh %1149 : vector<8x18xf32>
    %1151 = arith.mulf %1146, %1150 : vector<8x18xf32>
    %1152 = arith.index_cast %c22_i32 : i32 to index
    %c0_395 = arith.constant 0 : index
    %c0_396 = arith.constant 0 : index
    %1153 = vector.load %arg5[%1152, %c0_395, %c0_396] : memref<30x1x18xf32, #tpu.memory_space<vmem>>, vector<1x1x18xf32>
    %1154 = vector.shape_cast %1153 : vector<1x1x18xf32> to vector<1x18xf32>
    %1155 = vector.broadcast %1154 : vector<1x18xf32> to vector<8x18xf32>
    %1156 = arith.mulf %1151, %1155 : vector<8x18xf32>
    %1157 = arith.addf %1107, %1156 : vector<8x18xf32>
    %c23_i32 = arith.constant 23 : i32
    %1158 = arith.index_cast %c23_i32 : i32 to index
    %c0_397 = arith.constant 0 : index
    %c0_398 = arith.constant 0 : index
    %1159 = vector.load %arg1[%1158, %c0_397, %c0_398] : memref<30x8x1xf32, #tpu.memory_space<vmem>>, vector<1x8x1xf32>
    %1160 = vector.shape_cast %1159 : vector<1x8x1xf32> to vector<8x1xf32>
    %1161 = vector.broadcast %1160 : vector<8x1xf32> to vector<8x128xf32>
    %1162 = vector.broadcast %1 : vector<1x128xf32> to vector<8x128xf32>
    %1163 = arith.mulf %1161, %1162 : vector<8x128xf32>
    %1164 = vector.broadcast %3 : vector<1x128xf32> to vector<8x128xf32>
    %1165 = arith.addf %1163, %1164 : vector<8x128xf32>
    %cst_399 = arith.constant dense<0.000000e+00> : vector<8x128xf32>
    %1166 = tpu.matmul %1151, %4, %cst_399 {dimension_numbers = #tpu.dot_dimension_numbers<[1], [0], [0], [1], [0, 0, 1, 1], [], []>} : vector<8x18xf32>, vector<18x128xf32>, vector<8x128xf32> -> vector<8x128xf32>
    %1167 = arith.addf %1165, %1166 : vector<8x128xf32>
    %c110_i32_400 = arith.constant 110 : i32
    %1168 = tpu.dynamic_rotate %1167 by %c110_i32_400 dim 1 : vector<8x128xf32>, i32 -> vector<8x128xf32>
    %c92_i32_401 = arith.constant 92 : i32
    %1169 = tpu.dynamic_rotate %1167 by %c92_i32_401 dim 1 : vector<8x128xf32>, i32 -> vector<8x128xf32>
    %c74_i32_402 = arith.constant 74 : i32
    %1170 = tpu.dynamic_rotate %1167 by %c74_i32_402 dim 1 : vector<8x128xf32>, i32 -> vector<8x128xf32>
    %1171 = vector.extract_strided_slice %1167 {offsets = [0, 0], sizes = [8, 18], strides = [1, 1]} : vector<8x128xf32> to vector<8x18xf32>
    %cst_403 = arith.constant 5.000000e-01 : f32
    %1172 = vector.broadcast %cst_403 : f32 to vector<8x18xf32>
    %1173 = arith.mulf %1172, %1171 : vector<8x18xf32>
    %1174 = math.tanh %1173 : vector<8x18xf32>
    %cst_404 = arith.constant 5.000000e-01 : f32
    %1175 = vector.broadcast %cst_404 : f32 to vector<8x18xf32>
    %1176 = arith.mulf %1175, %1174 : vector<8x18xf32>
    %cst_405 = arith.constant 5.000000e-01 : f32
    %1177 = vector.broadcast %cst_405 : f32 to vector<8x18xf32>
    %1178 = arith.addf %1176, %1177 : vector<8x18xf32>
    %1179 = vector.extract_strided_slice %1168 {offsets = [0, 0], sizes = [8, 18], strides = [1, 1]} : vector<8x128xf32> to vector<8x18xf32>
    %cst_406 = arith.constant 5.000000e-01 : f32
    %1180 = vector.broadcast %cst_406 : f32 to vector<8x18xf32>
    %1181 = arith.mulf %1180, %1179 : vector<8x18xf32>
    %1182 = math.tanh %1181 : vector<8x18xf32>
    %cst_407 = arith.constant 5.000000e-01 : f32
    %1183 = vector.broadcast %cst_407 : f32 to vector<8x18xf32>
    %1184 = arith.mulf %1183, %1182 : vector<8x18xf32>
    %cst_408 = arith.constant 5.000000e-01 : f32
    %1185 = vector.broadcast %cst_408 : f32 to vector<8x18xf32>
    %1186 = arith.addf %1184, %1185 : vector<8x18xf32>
    %1187 = vector.extract_strided_slice %1169 {offsets = [0, 0], sizes = [8, 18], strides = [1, 1]} : vector<8x128xf32> to vector<8x18xf32>
    %1188 = math.tanh %1187 : vector<8x18xf32>
    %1189 = vector.extract_strided_slice %1170 {offsets = [0, 0], sizes = [8, 18], strides = [1, 1]} : vector<8x128xf32> to vector<8x18xf32>
    %cst_409 = arith.constant 5.000000e-01 : f32
    %1190 = vector.broadcast %cst_409 : f32 to vector<8x18xf32>
    %1191 = arith.mulf %1190, %1189 : vector<8x18xf32>
    %1192 = math.tanh %1191 : vector<8x18xf32>
    %cst_410 = arith.constant 5.000000e-01 : f32
    %1193 = vector.broadcast %cst_410 : f32 to vector<8x18xf32>
    %1194 = arith.mulf %1193, %1192 : vector<8x18xf32>
    %cst_411 = arith.constant 5.000000e-01 : f32
    %1195 = vector.broadcast %cst_411 : f32 to vector<8x18xf32>
    %1196 = arith.addf %1194, %1195 : vector<8x18xf32>
    %1197 = arith.mulf %1186, %1149 : vector<8x18xf32>
    %1198 = arith.mulf %1178, %1188 : vector<8x18xf32>
    %1199 = arith.addf %1197, %1198 : vector<8x18xf32>
    %1200 = math.tanh %1199 : vector<8x18xf32>
    %1201 = arith.mulf %1196, %1200 : vector<8x18xf32>
    %1202 = arith.index_cast %c23_i32 : i32 to index
    %c0_412 = arith.constant 0 : index
    %c0_413 = arith.constant 0 : index
    %1203 = vector.load %arg5[%1202, %c0_412, %c0_413] : memref<30x1x18xf32, #tpu.memory_space<vmem>>, vector<1x1x18xf32>
    %1204 = vector.shape_cast %1203 : vector<1x1x18xf32> to vector<1x18xf32>
    %1205 = vector.broadcast %1204 : vector<1x18xf32> to vector<8x18xf32>
    %1206 = arith.mulf %1201, %1205 : vector<8x18xf32>
    %1207 = arith.addf %1157, %1206 : vector<8x18xf32>
    %c24_i32 = arith.constant 24 : i32
    %1208 = arith.index_cast %c24_i32 : i32 to index
    %c0_414 = arith.constant 0 : index
    %c0_415 = arith.constant 0 : index
    %1209 = vector.load %arg1[%1208, %c0_414, %c0_415] : memref<30x8x1xf32, #tpu.memory_space<vmem>>, vector<1x8x1xf32>
    %1210 = vector.shape_cast %1209 : vector<1x8x1xf32> to vector<8x1xf32>
    %1211 = vector.broadcast %1210 : vector<8x1xf32> to vector<8x128xf32>
    %1212 = vector.broadcast %1 : vector<1x128xf32> to vector<8x128xf32>
    %1213 = arith.mulf %1211, %1212 : vector<8x128xf32>
    %1214 = vector.broadcast %3 : vector<1x128xf32> to vector<8x128xf32>
    %1215 = arith.addf %1213, %1214 : vector<8x128xf32>
    %cst_416 = arith.constant dense<0.000000e+00> : vector<8x128xf32>
    %1216 = tpu.matmul %1201, %4, %cst_416 {dimension_numbers = #tpu.dot_dimension_numbers<[1], [0], [0], [1], [0, 0, 1, 1], [], []>} : vector<8x18xf32>, vector<18x128xf32>, vector<8x128xf32> -> vector<8x128xf32>
    %1217 = arith.addf %1215, %1216 : vector<8x128xf32>
    %c110_i32_417 = arith.constant 110 : i32
    %1218 = tpu.dynamic_rotate %1217 by %c110_i32_417 dim 1 : vector<8x128xf32>, i32 -> vector<8x128xf32>
    %c92_i32_418 = arith.constant 92 : i32
    %1219 = tpu.dynamic_rotate %1217 by %c92_i32_418 dim 1 : vector<8x128xf32>, i32 -> vector<8x128xf32>
    %c74_i32_419 = arith.constant 74 : i32
    %1220 = tpu.dynamic_rotate %1217 by %c74_i32_419 dim 1 : vector<8x128xf32>, i32 -> vector<8x128xf32>
    %1221 = vector.extract_strided_slice %1217 {offsets = [0, 0], sizes = [8, 18], strides = [1, 1]} : vector<8x128xf32> to vector<8x18xf32>
    %cst_420 = arith.constant 5.000000e-01 : f32
    %1222 = vector.broadcast %cst_420 : f32 to vector<8x18xf32>
    %1223 = arith.mulf %1222, %1221 : vector<8x18xf32>
    %1224 = math.tanh %1223 : vector<8x18xf32>
    %cst_421 = arith.constant 5.000000e-01 : f32
    %1225 = vector.broadcast %cst_421 : f32 to vector<8x18xf32>
    %1226 = arith.mulf %1225, %1224 : vector<8x18xf32>
    %cst_422 = arith.constant 5.000000e-01 : f32
    %1227 = vector.broadcast %cst_422 : f32 to vector<8x18xf32>
    %1228 = arith.addf %1226, %1227 : vector<8x18xf32>
    %1229 = vector.extract_strided_slice %1218 {offsets = [0, 0], sizes = [8, 18], strides = [1, 1]} : vector<8x128xf32> to vector<8x18xf32>
    %cst_423 = arith.constant 5.000000e-01 : f32
    %1230 = vector.broadcast %cst_423 : f32 to vector<8x18xf32>
    %1231 = arith.mulf %1230, %1229 : vector<8x18xf32>
    %1232 = math.tanh %1231 : vector<8x18xf32>
    %cst_424 = arith.constant 5.000000e-01 : f32
    %1233 = vector.broadcast %cst_424 : f32 to vector<8x18xf32>
    %1234 = arith.mulf %1233, %1232 : vector<8x18xf32>
    %cst_425 = arith.constant 5.000000e-01 : f32
    %1235 = vector.broadcast %cst_425 : f32 to vector<8x18xf32>
    %1236 = arith.addf %1234, %1235 : vector<8x18xf32>
    %1237 = vector.extract_strided_slice %1219 {offsets = [0, 0], sizes = [8, 18], strides = [1, 1]} : vector<8x128xf32> to vector<8x18xf32>
    %1238 = math.tanh %1237 : vector<8x18xf32>
    %1239 = vector.extract_strided_slice %1220 {offsets = [0, 0], sizes = [8, 18], strides = [1, 1]} : vector<8x128xf32> to vector<8x18xf32>
    %cst_426 = arith.constant 5.000000e-01 : f32
    %1240 = vector.broadcast %cst_426 : f32 to vector<8x18xf32>
    %1241 = arith.mulf %1240, %1239 : vector<8x18xf32>
    %1242 = math.tanh %1241 : vector<8x18xf32>
    %cst_427 = arith.constant 5.000000e-01 : f32
    %1243 = vector.broadcast %cst_427 : f32 to vector<8x18xf32>
    %1244 = arith.mulf %1243, %1242 : vector<8x18xf32>
    %cst_428 = arith.constant 5.000000e-01 : f32
    %1245 = vector.broadcast %cst_428 : f32 to vector<8x18xf32>
    %1246 = arith.addf %1244, %1245 : vector<8x18xf32>
    %1247 = arith.mulf %1236, %1199 : vector<8x18xf32>
    %1248 = arith.mulf %1228, %1238 : vector<8x18xf32>
    %1249 = arith.addf %1247, %1248 : vector<8x18xf32>
    %1250 = math.tanh %1249 : vector<8x18xf32>
    %1251 = arith.mulf %1246, %1250 : vector<8x18xf32>
    %1252 = arith.index_cast %c24_i32 : i32 to index
    %c0_429 = arith.constant 0 : index
    %c0_430 = arith.constant 0 : index
    %1253 = vector.load %arg5[%1252, %c0_429, %c0_430] : memref<30x1x18xf32, #tpu.memory_space<vmem>>, vector<1x1x18xf32>
    %1254 = vector.shape_cast %1253 : vector<1x1x18xf32> to vector<1x18xf32>
    %1255 = vector.broadcast %1254 : vector<1x18xf32> to vector<8x18xf32>
    %1256 = arith.mulf %1251, %1255 : vector<8x18xf32>
    %1257 = arith.addf %1207, %1256 : vector<8x18xf32>
    %c25_i32 = arith.constant 25 : i32
    %1258 = arith.index_cast %c25_i32 : i32 to index
    %c0_431 = arith.constant 0 : index
    %c0_432 = arith.constant 0 : index
    %1259 = vector.load %arg1[%1258, %c0_431, %c0_432] : memref<30x8x1xf32, #tpu.memory_space<vmem>>, vector<1x8x1xf32>
    %1260 = vector.shape_cast %1259 : vector<1x8x1xf32> to vector<8x1xf32>
    %1261 = vector.broadcast %1260 : vector<8x1xf32> to vector<8x128xf32>
    %1262 = vector.broadcast %1 : vector<1x128xf32> to vector<8x128xf32>
    %1263 = arith.mulf %1261, %1262 : vector<8x128xf32>
    %1264 = vector.broadcast %3 : vector<1x128xf32> to vector<8x128xf32>
    %1265 = arith.addf %1263, %1264 : vector<8x128xf32>
    %cst_433 = arith.constant dense<0.000000e+00> : vector<8x128xf32>
    %1266 = tpu.matmul %1251, %4, %cst_433 {dimension_numbers = #tpu.dot_dimension_numbers<[1], [0], [0], [1], [0, 0, 1, 1], [], []>} : vector<8x18xf32>, vector<18x128xf32>, vector<8x128xf32> -> vector<8x128xf32>
    %1267 = arith.addf %1265, %1266 : vector<8x128xf32>
    %c110_i32_434 = arith.constant 110 : i32
    %1268 = tpu.dynamic_rotate %1267 by %c110_i32_434 dim 1 : vector<8x128xf32>, i32 -> vector<8x128xf32>
    %c92_i32_435 = arith.constant 92 : i32
    %1269 = tpu.dynamic_rotate %1267 by %c92_i32_435 dim 1 : vector<8x128xf32>, i32 -> vector<8x128xf32>
    %c74_i32_436 = arith.constant 74 : i32
    %1270 = tpu.dynamic_rotate %1267 by %c74_i32_436 dim 1 : vector<8x128xf32>, i32 -> vector<8x128xf32>
    %1271 = vector.extract_strided_slice %1267 {offsets = [0, 0], sizes = [8, 18], strides = [1, 1]} : vector<8x128xf32> to vector<8x18xf32>
    %cst_437 = arith.constant 5.000000e-01 : f32
    %1272 = vector.broadcast %cst_437 : f32 to vector<8x18xf32>
    %1273 = arith.mulf %1272, %1271 : vector<8x18xf32>
    %1274 = math.tanh %1273 : vector<8x18xf32>
    %cst_438 = arith.constant 5.000000e-01 : f32
    %1275 = vector.broadcast %cst_438 : f32 to vector<8x18xf32>
    %1276 = arith.mulf %1275, %1274 : vector<8x18xf32>
    %cst_439 = arith.constant 5.000000e-01 : f32
    %1277 = vector.broadcast %cst_439 : f32 to vector<8x18xf32>
    %1278 = arith.addf %1276, %1277 : vector<8x18xf32>
    %1279 = vector.extract_strided_slice %1268 {offsets = [0, 0], sizes = [8, 18], strides = [1, 1]} : vector<8x128xf32> to vector<8x18xf32>
    %cst_440 = arith.constant 5.000000e-01 : f32
    %1280 = vector.broadcast %cst_440 : f32 to vector<8x18xf32>
    %1281 = arith.mulf %1280, %1279 : vector<8x18xf32>
    %1282 = math.tanh %1281 : vector<8x18xf32>
    %cst_441 = arith.constant 5.000000e-01 : f32
    %1283 = vector.broadcast %cst_441 : f32 to vector<8x18xf32>
    %1284 = arith.mulf %1283, %1282 : vector<8x18xf32>
    %cst_442 = arith.constant 5.000000e-01 : f32
    %1285 = vector.broadcast %cst_442 : f32 to vector<8x18xf32>
    %1286 = arith.addf %1284, %1285 : vector<8x18xf32>
    %1287 = vector.extract_strided_slice %1269 {offsets = [0, 0], sizes = [8, 18], strides = [1, 1]} : vector<8x128xf32> to vector<8x18xf32>
    %1288 = math.tanh %1287 : vector<8x18xf32>
    %1289 = vector.extract_strided_slice %1270 {offsets = [0, 0], sizes = [8, 18], strides = [1, 1]} : vector<8x128xf32> to vector<8x18xf32>
    %cst_443 = arith.constant 5.000000e-01 : f32
    %1290 = vector.broadcast %cst_443 : f32 to vector<8x18xf32>
    %1291 = arith.mulf %1290, %1289 : vector<8x18xf32>
    %1292 = math.tanh %1291 : vector<8x18xf32>
    %cst_444 = arith.constant 5.000000e-01 : f32
    %1293 = vector.broadcast %cst_444 : f32 to vector<8x18xf32>
    %1294 = arith.mulf %1293, %1292 : vector<8x18xf32>
    %cst_445 = arith.constant 5.000000e-01 : f32
    %1295 = vector.broadcast %cst_445 : f32 to vector<8x18xf32>
    %1296 = arith.addf %1294, %1295 : vector<8x18xf32>
    %1297 = arith.mulf %1286, %1249 : vector<8x18xf32>
    %1298 = arith.mulf %1278, %1288 : vector<8x18xf32>
    %1299 = arith.addf %1297, %1298 : vector<8x18xf32>
    %1300 = math.tanh %1299 : vector<8x18xf32>
    %1301 = arith.mulf %1296, %1300 : vector<8x18xf32>
    %1302 = arith.index_cast %c25_i32 : i32 to index
    %c0_446 = arith.constant 0 : index
    %c0_447 = arith.constant 0 : index
    %1303 = vector.load %arg5[%1302, %c0_446, %c0_447] : memref<30x1x18xf32, #tpu.memory_space<vmem>>, vector<1x1x18xf32>
    %1304 = vector.shape_cast %1303 : vector<1x1x18xf32> to vector<1x18xf32>
    %1305 = vector.broadcast %1304 : vector<1x18xf32> to vector<8x18xf32>
    %1306 = arith.mulf %1301, %1305 : vector<8x18xf32>
    %1307 = arith.addf %1257, %1306 : vector<8x18xf32>
    %c26_i32 = arith.constant 26 : i32
    %1308 = arith.index_cast %c26_i32 : i32 to index
    %c0_448 = arith.constant 0 : index
    %c0_449 = arith.constant 0 : index
    %1309 = vector.load %arg1[%1308, %c0_448, %c0_449] : memref<30x8x1xf32, #tpu.memory_space<vmem>>, vector<1x8x1xf32>
    %1310 = vector.shape_cast %1309 : vector<1x8x1xf32> to vector<8x1xf32>
    %1311 = vector.broadcast %1310 : vector<8x1xf32> to vector<8x128xf32>
    %1312 = vector.broadcast %1 : vector<1x128xf32> to vector<8x128xf32>
    %1313 = arith.mulf %1311, %1312 : vector<8x128xf32>
    %1314 = vector.broadcast %3 : vector<1x128xf32> to vector<8x128xf32>
    %1315 = arith.addf %1313, %1314 : vector<8x128xf32>
    %cst_450 = arith.constant dense<0.000000e+00> : vector<8x128xf32>
    %1316 = tpu.matmul %1301, %4, %cst_450 {dimension_numbers = #tpu.dot_dimension_numbers<[1], [0], [0], [1], [0, 0, 1, 1], [], []>} : vector<8x18xf32>, vector<18x128xf32>, vector<8x128xf32> -> vector<8x128xf32>
    %1317 = arith.addf %1315, %1316 : vector<8x128xf32>
    %c110_i32_451 = arith.constant 110 : i32
    %1318 = tpu.dynamic_rotate %1317 by %c110_i32_451 dim 1 : vector<8x128xf32>, i32 -> vector<8x128xf32>
    %c92_i32_452 = arith.constant 92 : i32
    %1319 = tpu.dynamic_rotate %1317 by %c92_i32_452 dim 1 : vector<8x128xf32>, i32 -> vector<8x128xf32>
    %c74_i32_453 = arith.constant 74 : i32
    %1320 = tpu.dynamic_rotate %1317 by %c74_i32_453 dim 1 : vector<8x128xf32>, i32 -> vector<8x128xf32>
    %1321 = vector.extract_strided_slice %1317 {offsets = [0, 0], sizes = [8, 18], strides = [1, 1]} : vector<8x128xf32> to vector<8x18xf32>
    %cst_454 = arith.constant 5.000000e-01 : f32
    %1322 = vector.broadcast %cst_454 : f32 to vector<8x18xf32>
    %1323 = arith.mulf %1322, %1321 : vector<8x18xf32>
    %1324 = math.tanh %1323 : vector<8x18xf32>
    %cst_455 = arith.constant 5.000000e-01 : f32
    %1325 = vector.broadcast %cst_455 : f32 to vector<8x18xf32>
    %1326 = arith.mulf %1325, %1324 : vector<8x18xf32>
    %cst_456 = arith.constant 5.000000e-01 : f32
    %1327 = vector.broadcast %cst_456 : f32 to vector<8x18xf32>
    %1328 = arith.addf %1326, %1327 : vector<8x18xf32>
    %1329 = vector.extract_strided_slice %1318 {offsets = [0, 0], sizes = [8, 18], strides = [1, 1]} : vector<8x128xf32> to vector<8x18xf32>
    %cst_457 = arith.constant 5.000000e-01 : f32
    %1330 = vector.broadcast %cst_457 : f32 to vector<8x18xf32>
    %1331 = arith.mulf %1330, %1329 : vector<8x18xf32>
    %1332 = math.tanh %1331 : vector<8x18xf32>
    %cst_458 = arith.constant 5.000000e-01 : f32
    %1333 = vector.broadcast %cst_458 : f32 to vector<8x18xf32>
    %1334 = arith.mulf %1333, %1332 : vector<8x18xf32>
    %cst_459 = arith.constant 5.000000e-01 : f32
    %1335 = vector.broadcast %cst_459 : f32 to vector<8x18xf32>
    %1336 = arith.addf %1334, %1335 : vector<8x18xf32>
    %1337 = vector.extract_strided_slice %1319 {offsets = [0, 0], sizes = [8, 18], strides = [1, 1]} : vector<8x128xf32> to vector<8x18xf32>
    %1338 = math.tanh %1337 : vector<8x18xf32>
    %1339 = vector.extract_strided_slice %1320 {offsets = [0, 0], sizes = [8, 18], strides = [1, 1]} : vector<8x128xf32> to vector<8x18xf32>
    %cst_460 = arith.constant 5.000000e-01 : f32
    %1340 = vector.broadcast %cst_460 : f32 to vector<8x18xf32>
    %1341 = arith.mulf %1340, %1339 : vector<8x18xf32>
    %1342 = math.tanh %1341 : vector<8x18xf32>
    %cst_461 = arith.constant 5.000000e-01 : f32
    %1343 = vector.broadcast %cst_461 : f32 to vector<8x18xf32>
    %1344 = arith.mulf %1343, %1342 : vector<8x18xf32>
    %cst_462 = arith.constant 5.000000e-01 : f32
    %1345 = vector.broadcast %cst_462 : f32 to vector<8x18xf32>
    %1346 = arith.addf %1344, %1345 : vector<8x18xf32>
    %1347 = arith.mulf %1336, %1299 : vector<8x18xf32>
    %1348 = arith.mulf %1328, %1338 : vector<8x18xf32>
    %1349 = arith.addf %1347, %1348 : vector<8x18xf32>
    %1350 = math.tanh %1349 : vector<8x18xf32>
    %1351 = arith.mulf %1346, %1350 : vector<8x18xf32>
    %1352 = arith.index_cast %c26_i32 : i32 to index
    %c0_463 = arith.constant 0 : index
    %c0_464 = arith.constant 0 : index
    %1353 = vector.load %arg5[%1352, %c0_463, %c0_464] : memref<30x1x18xf32, #tpu.memory_space<vmem>>, vector<1x1x18xf32>
    %1354 = vector.shape_cast %1353 : vector<1x1x18xf32> to vector<1x18xf32>
    %1355 = vector.broadcast %1354 : vector<1x18xf32> to vector<8x18xf32>
    %1356 = arith.mulf %1351, %1355 : vector<8x18xf32>
    %1357 = arith.addf %1307, %1356 : vector<8x18xf32>
    %c27_i32 = arith.constant 27 : i32
    %1358 = arith.index_cast %c27_i32 : i32 to index
    %c0_465 = arith.constant 0 : index
    %c0_466 = arith.constant 0 : index
    %1359 = vector.load %arg1[%1358, %c0_465, %c0_466] : memref<30x8x1xf32, #tpu.memory_space<vmem>>, vector<1x8x1xf32>
    %1360 = vector.shape_cast %1359 : vector<1x8x1xf32> to vector<8x1xf32>
    %1361 = vector.broadcast %1360 : vector<8x1xf32> to vector<8x128xf32>
    %1362 = vector.broadcast %1 : vector<1x128xf32> to vector<8x128xf32>
    %1363 = arith.mulf %1361, %1362 : vector<8x128xf32>
    %1364 = vector.broadcast %3 : vector<1x128xf32> to vector<8x128xf32>
    %1365 = arith.addf %1363, %1364 : vector<8x128xf32>
    %cst_467 = arith.constant dense<0.000000e+00> : vector<8x128xf32>
    %1366 = tpu.matmul %1351, %4, %cst_467 {dimension_numbers = #tpu.dot_dimension_numbers<[1], [0], [0], [1], [0, 0, 1, 1], [], []>} : vector<8x18xf32>, vector<18x128xf32>, vector<8x128xf32> -> vector<8x128xf32>
    %1367 = arith.addf %1365, %1366 : vector<8x128xf32>
    %c110_i32_468 = arith.constant 110 : i32
    %1368 = tpu.dynamic_rotate %1367 by %c110_i32_468 dim 1 : vector<8x128xf32>, i32 -> vector<8x128xf32>
    %c92_i32_469 = arith.constant 92 : i32
    %1369 = tpu.dynamic_rotate %1367 by %c92_i32_469 dim 1 : vector<8x128xf32>, i32 -> vector<8x128xf32>
    %c74_i32_470 = arith.constant 74 : i32
    %1370 = tpu.dynamic_rotate %1367 by %c74_i32_470 dim 1 : vector<8x128xf32>, i32 -> vector<8x128xf32>
    %1371 = vector.extract_strided_slice %1367 {offsets = [0, 0], sizes = [8, 18], strides = [1, 1]} : vector<8x128xf32> to vector<8x18xf32>
    %cst_471 = arith.constant 5.000000e-01 : f32
    %1372 = vector.broadcast %cst_471 : f32 to vector<8x18xf32>
    %1373 = arith.mulf %1372, %1371 : vector<8x18xf32>
    %1374 = math.tanh %1373 : vector<8x18xf32>
    %cst_472 = arith.constant 5.000000e-01 : f32
    %1375 = vector.broadcast %cst_472 : f32 to vector<8x18xf32>
    %1376 = arith.mulf %1375, %1374 : vector<8x18xf32>
    %cst_473 = arith.constant 5.000000e-01 : f32
    %1377 = vector.broadcast %cst_473 : f32 to vector<8x18xf32>
    %1378 = arith.addf %1376, %1377 : vector<8x18xf32>
    %1379 = vector.extract_strided_slice %1368 {offsets = [0, 0], sizes = [8, 18], strides = [1, 1]} : vector<8x128xf32> to vector<8x18xf32>
    %cst_474 = arith.constant 5.000000e-01 : f32
    %1380 = vector.broadcast %cst_474 : f32 to vector<8x18xf32>
    %1381 = arith.mulf %1380, %1379 : vector<8x18xf32>
    %1382 = math.tanh %1381 : vector<8x18xf32>
    %cst_475 = arith.constant 5.000000e-01 : f32
    %1383 = vector.broadcast %cst_475 : f32 to vector<8x18xf32>
    %1384 = arith.mulf %1383, %1382 : vector<8x18xf32>
    %cst_476 = arith.constant 5.000000e-01 : f32
    %1385 = vector.broadcast %cst_476 : f32 to vector<8x18xf32>
    %1386 = arith.addf %1384, %1385 : vector<8x18xf32>
    %1387 = vector.extract_strided_slice %1369 {offsets = [0, 0], sizes = [8, 18], strides = [1, 1]} : vector<8x128xf32> to vector<8x18xf32>
    %1388 = math.tanh %1387 : vector<8x18xf32>
    %1389 = vector.extract_strided_slice %1370 {offsets = [0, 0], sizes = [8, 18], strides = [1, 1]} : vector<8x128xf32> to vector<8x18xf32>
    %cst_477 = arith.constant 5.000000e-01 : f32
    %1390 = vector.broadcast %cst_477 : f32 to vector<8x18xf32>
    %1391 = arith.mulf %1390, %1389 : vector<8x18xf32>
    %1392 = math.tanh %1391 : vector<8x18xf32>
    %cst_478 = arith.constant 5.000000e-01 : f32
    %1393 = vector.broadcast %cst_478 : f32 to vector<8x18xf32>
    %1394 = arith.mulf %1393, %1392 : vector<8x18xf32>
    %cst_479 = arith.constant 5.000000e-01 : f32
    %1395 = vector.broadcast %cst_479 : f32 to vector<8x18xf32>
    %1396 = arith.addf %1394, %1395 : vector<8x18xf32>
    %1397 = arith.mulf %1386, %1349 : vector<8x18xf32>
    %1398 = arith.mulf %1378, %1388 : vector<8x18xf32>
    %1399 = arith.addf %1397, %1398 : vector<8x18xf32>
    %1400 = math.tanh %1399 : vector<8x18xf32>
    %1401 = arith.mulf %1396, %1400 : vector<8x18xf32>
    %1402 = arith.index_cast %c27_i32 : i32 to index
    %c0_480 = arith.constant 0 : index
    %c0_481 = arith.constant 0 : index
    %1403 = vector.load %arg5[%1402, %c0_480, %c0_481] : memref<30x1x18xf32, #tpu.memory_space<vmem>>, vector<1x1x18xf32>
    %1404 = vector.shape_cast %1403 : vector<1x1x18xf32> to vector<1x18xf32>
    %1405 = vector.broadcast %1404 : vector<1x18xf32> to vector<8x18xf32>
    %1406 = arith.mulf %1401, %1405 : vector<8x18xf32>
    %1407 = arith.addf %1357, %1406 : vector<8x18xf32>
    %c28_i32 = arith.constant 28 : i32
    %1408 = arith.index_cast %c28_i32 : i32 to index
    %c0_482 = arith.constant 0 : index
    %c0_483 = arith.constant 0 : index
    %1409 = vector.load %arg1[%1408, %c0_482, %c0_483] : memref<30x8x1xf32, #tpu.memory_space<vmem>>, vector<1x8x1xf32>
    %1410 = vector.shape_cast %1409 : vector<1x8x1xf32> to vector<8x1xf32>
    %1411 = vector.broadcast %1410 : vector<8x1xf32> to vector<8x128xf32>
    %1412 = vector.broadcast %1 : vector<1x128xf32> to vector<8x128xf32>
    %1413 = arith.mulf %1411, %1412 : vector<8x128xf32>
    %1414 = vector.broadcast %3 : vector<1x128xf32> to vector<8x128xf32>
    %1415 = arith.addf %1413, %1414 : vector<8x128xf32>
    %cst_484 = arith.constant dense<0.000000e+00> : vector<8x128xf32>
    %1416 = tpu.matmul %1401, %4, %cst_484 {dimension_numbers = #tpu.dot_dimension_numbers<[1], [0], [0], [1], [0, 0, 1, 1], [], []>} : vector<8x18xf32>, vector<18x128xf32>, vector<8x128xf32> -> vector<8x128xf32>
    %1417 = arith.addf %1415, %1416 : vector<8x128xf32>
    %c110_i32_485 = arith.constant 110 : i32
    %1418 = tpu.dynamic_rotate %1417 by %c110_i32_485 dim 1 : vector<8x128xf32>, i32 -> vector<8x128xf32>
    %c92_i32_486 = arith.constant 92 : i32
    %1419 = tpu.dynamic_rotate %1417 by %c92_i32_486 dim 1 : vector<8x128xf32>, i32 -> vector<8x128xf32>
    %c74_i32_487 = arith.constant 74 : i32
    %1420 = tpu.dynamic_rotate %1417 by %c74_i32_487 dim 1 : vector<8x128xf32>, i32 -> vector<8x128xf32>
    %1421 = vector.extract_strided_slice %1417 {offsets = [0, 0], sizes = [8, 18], strides = [1, 1]} : vector<8x128xf32> to vector<8x18xf32>
    %cst_488 = arith.constant 5.000000e-01 : f32
    %1422 = vector.broadcast %cst_488 : f32 to vector<8x18xf32>
    %1423 = arith.mulf %1422, %1421 : vector<8x18xf32>
    %1424 = math.tanh %1423 : vector<8x18xf32>
    %cst_489 = arith.constant 5.000000e-01 : f32
    %1425 = vector.broadcast %cst_489 : f32 to vector<8x18xf32>
    %1426 = arith.mulf %1425, %1424 : vector<8x18xf32>
    %cst_490 = arith.constant 5.000000e-01 : f32
    %1427 = vector.broadcast %cst_490 : f32 to vector<8x18xf32>
    %1428 = arith.addf %1426, %1427 : vector<8x18xf32>
    %1429 = vector.extract_strided_slice %1418 {offsets = [0, 0], sizes = [8, 18], strides = [1, 1]} : vector<8x128xf32> to vector<8x18xf32>
    %cst_491 = arith.constant 5.000000e-01 : f32
    %1430 = vector.broadcast %cst_491 : f32 to vector<8x18xf32>
    %1431 = arith.mulf %1430, %1429 : vector<8x18xf32>
    %1432 = math.tanh %1431 : vector<8x18xf32>
    %cst_492 = arith.constant 5.000000e-01 : f32
    %1433 = vector.broadcast %cst_492 : f32 to vector<8x18xf32>
    %1434 = arith.mulf %1433, %1432 : vector<8x18xf32>
    %cst_493 = arith.constant 5.000000e-01 : f32
    %1435 = vector.broadcast %cst_493 : f32 to vector<8x18xf32>
    %1436 = arith.addf %1434, %1435 : vector<8x18xf32>
    %1437 = vector.extract_strided_slice %1419 {offsets = [0, 0], sizes = [8, 18], strides = [1, 1]} : vector<8x128xf32> to vector<8x18xf32>
    %1438 = math.tanh %1437 : vector<8x18xf32>
    %1439 = vector.extract_strided_slice %1420 {offsets = [0, 0], sizes = [8, 18], strides = [1, 1]} : vector<8x128xf32> to vector<8x18xf32>
    %cst_494 = arith.constant 5.000000e-01 : f32
    %1440 = vector.broadcast %cst_494 : f32 to vector<8x18xf32>
    %1441 = arith.mulf %1440, %1439 : vector<8x18xf32>
    %1442 = math.tanh %1441 : vector<8x18xf32>
    %cst_495 = arith.constant 5.000000e-01 : f32
    %1443 = vector.broadcast %cst_495 : f32 to vector<8x18xf32>
    %1444 = arith.mulf %1443, %1442 : vector<8x18xf32>
    %cst_496 = arith.constant 5.000000e-01 : f32
    %1445 = vector.broadcast %cst_496 : f32 to vector<8x18xf32>
    %1446 = arith.addf %1444, %1445 : vector<8x18xf32>
    %1447 = arith.mulf %1436, %1399 : vector<8x18xf32>
    %1448 = arith.mulf %1428, %1438 : vector<8x18xf32>
    %1449 = arith.addf %1447, %1448 : vector<8x18xf32>
    %1450 = math.tanh %1449 : vector<8x18xf32>
    %1451 = arith.mulf %1446, %1450 : vector<8x18xf32>
    %1452 = arith.index_cast %c28_i32 : i32 to index
    %c0_497 = arith.constant 0 : index
    %c0_498 = arith.constant 0 : index
    %1453 = vector.load %arg5[%1452, %c0_497, %c0_498] : memref<30x1x18xf32, #tpu.memory_space<vmem>>, vector<1x1x18xf32>
    %1454 = vector.shape_cast %1453 : vector<1x1x18xf32> to vector<1x18xf32>
    %1455 = vector.broadcast %1454 : vector<1x18xf32> to vector<8x18xf32>
    %1456 = arith.mulf %1451, %1455 : vector<8x18xf32>
    %1457 = arith.addf %1407, %1456 : vector<8x18xf32>
    %c29_i32 = arith.constant 29 : i32
    %1458 = arith.index_cast %c29_i32 : i32 to index
    %c0_499 = arith.constant 0 : index
    %c0_500 = arith.constant 0 : index
    %1459 = vector.load %arg1[%1458, %c0_499, %c0_500] : memref<30x8x1xf32, #tpu.memory_space<vmem>>, vector<1x8x1xf32>
    %1460 = vector.shape_cast %1459 : vector<1x8x1xf32> to vector<8x1xf32>
    %1461 = vector.broadcast %1460 : vector<8x1xf32> to vector<8x128xf32>
    %1462 = vector.broadcast %1 : vector<1x128xf32> to vector<8x128xf32>
    %1463 = arith.mulf %1461, %1462 : vector<8x128xf32>
    %1464 = vector.broadcast %3 : vector<1x128xf32> to vector<8x128xf32>
    %1465 = arith.addf %1463, %1464 : vector<8x128xf32>
    %cst_501 = arith.constant dense<0.000000e+00> : vector<8x128xf32>
    %1466 = tpu.matmul %1451, %4, %cst_501 {dimension_numbers = #tpu.dot_dimension_numbers<[1], [0], [0], [1], [0, 0, 1, 1], [], []>} : vector<8x18xf32>, vector<18x128xf32>, vector<8x128xf32> -> vector<8x128xf32>
    %1467 = arith.addf %1465, %1466 : vector<8x128xf32>
    %c110_i32_502 = arith.constant 110 : i32
    %1468 = tpu.dynamic_rotate %1467 by %c110_i32_502 dim 1 : vector<8x128xf32>, i32 -> vector<8x128xf32>
    %c92_i32_503 = arith.constant 92 : i32
    %1469 = tpu.dynamic_rotate %1467 by %c92_i32_503 dim 1 : vector<8x128xf32>, i32 -> vector<8x128xf32>
    %c74_i32_504 = arith.constant 74 : i32
    %1470 = tpu.dynamic_rotate %1467 by %c74_i32_504 dim 1 : vector<8x128xf32>, i32 -> vector<8x128xf32>
    %1471 = vector.extract_strided_slice %1467 {offsets = [0, 0], sizes = [8, 18], strides = [1, 1]} : vector<8x128xf32> to vector<8x18xf32>
    %cst_505 = arith.constant 5.000000e-01 : f32
    %1472 = vector.broadcast %cst_505 : f32 to vector<8x18xf32>
    %1473 = arith.mulf %1472, %1471 : vector<8x18xf32>
    %1474 = math.tanh %1473 : vector<8x18xf32>
    %cst_506 = arith.constant 5.000000e-01 : f32
    %1475 = vector.broadcast %cst_506 : f32 to vector<8x18xf32>
    %1476 = arith.mulf %1475, %1474 : vector<8x18xf32>
    %cst_507 = arith.constant 5.000000e-01 : f32
    %1477 = vector.broadcast %cst_507 : f32 to vector<8x18xf32>
    %1478 = arith.addf %1476, %1477 : vector<8x18xf32>
    %1479 = vector.extract_strided_slice %1468 {offsets = [0, 0], sizes = [8, 18], strides = [1, 1]} : vector<8x128xf32> to vector<8x18xf32>
    %cst_508 = arith.constant 5.000000e-01 : f32
    %1480 = vector.broadcast %cst_508 : f32 to vector<8x18xf32>
    %1481 = arith.mulf %1480, %1479 : vector<8x18xf32>
    %1482 = math.tanh %1481 : vector<8x18xf32>
    %cst_509 = arith.constant 5.000000e-01 : f32
    %1483 = vector.broadcast %cst_509 : f32 to vector<8x18xf32>
    %1484 = arith.mulf %1483, %1482 : vector<8x18xf32>
    %cst_510 = arith.constant 5.000000e-01 : f32
    %1485 = vector.broadcast %cst_510 : f32 to vector<8x18xf32>
    %1486 = arith.addf %1484, %1485 : vector<8x18xf32>
    %1487 = vector.extract_strided_slice %1469 {offsets = [0, 0], sizes = [8, 18], strides = [1, 1]} : vector<8x128xf32> to vector<8x18xf32>
    %1488 = math.tanh %1487 : vector<8x18xf32>
    %1489 = vector.extract_strided_slice %1470 {offsets = [0, 0], sizes = [8, 18], strides = [1, 1]} : vector<8x128xf32> to vector<8x18xf32>
    %cst_511 = arith.constant 5.000000e-01 : f32
    %1490 = vector.broadcast %cst_511 : f32 to vector<8x18xf32>
    %1491 = arith.mulf %1490, %1489 : vector<8x18xf32>
    %1492 = math.tanh %1491 : vector<8x18xf32>
    %cst_512 = arith.constant 5.000000e-01 : f32
    %1493 = vector.broadcast %cst_512 : f32 to vector<8x18xf32>
    %1494 = arith.mulf %1493, %1492 : vector<8x18xf32>
    %cst_513 = arith.constant 5.000000e-01 : f32
    %1495 = vector.broadcast %cst_513 : f32 to vector<8x18xf32>
    %1496 = arith.addf %1494, %1495 : vector<8x18xf32>
    %1497 = arith.mulf %1486, %1449 : vector<8x18xf32>
    %1498 = arith.mulf %1478, %1488 : vector<8x18xf32>
    %1499 = arith.addf %1497, %1498 : vector<8x18xf32>
    %1500 = math.tanh %1499 : vector<8x18xf32>
    %1501 = arith.mulf %1496, %1500 : vector<8x18xf32>
    %1502 = arith.index_cast %c29_i32 : i32 to index
    %c0_514 = arith.constant 0 : index
    %c0_515 = arith.constant 0 : index
    %1503 = vector.load %arg5[%1502, %c0_514, %c0_515] : memref<30x1x18xf32, #tpu.memory_space<vmem>>, vector<1x1x18xf32>
    %1504 = vector.shape_cast %1503 : vector<1x1x18xf32> to vector<1x18xf32>
    %1505 = vector.broadcast %1504 : vector<1x18xf32> to vector<8x18xf32>
    %1506 = arith.mulf %1501, %1505 : vector<8x18xf32>
    %1507 = arith.addf %1457, %1506 : vector<8x18xf32>
    %c30_i32 = arith.constant 30 : i32
    %cst_516 = arith.constant dense<0.000000e+00> : vector<8xf32>
    %1508 = vector.multi_reduction <add>, %1507, %cst_516 [1] : vector<8x18xf32> to vector<8xf32>
    %1509 = vector.shape_cast %1508 : vector<8xf32> to vector<8x1xf32>
    %c0_517 = arith.constant 0 : index
    %c0_518 = arith.constant 0 : index
    %1510 = vector.load %arg6[%c0_517, %c0_518] : memref<1x1xf32, #tpu.memory_space<vmem>>, vector<1x1xf32>
    %1511 = vector.broadcast %1510 : vector<1x1xf32> to vector<8x1xf32>
    %1512 = arith.addf %1509, %1511 : vector<8x1xf32>
    %c0_519 = arith.constant 0 : index
    %c0_520 = arith.constant 0 : index
    %1513 = vector.load %arg7[%c0_519, %c0_520] : memref<8x1xf32, #tpu.memory_space<vmem>>, vector<8x1xf32>
    tpu.vector_store %arg7[%c0_519, %c0_520], %1512 {strides = array<i32>} : memref<8x1xf32, #tpu.memory_space<vmem>>, vector<8x1xf32>,
    return
  }
  func.func @transform_0(%arg0: i32) -> (i32, i32, i32) {
    %c0_i32 = arith.constant 0 : i32
    %c0_i32_0 = arith.constant 0 : i32
    %c0_i32_1 = arith.constant 0 : i32
    return %c0_i32, %arg0, %c0_i32_0 : i32, i32, i32
  }
  func.func @transform_1(%arg0: i32) -> (i32, i32, i32) {
    %c0_i32 = arith.constant 0 : i32
    %c0_i32_0 = arith.constant 0 : i32
    %c0_i32_1 = arith.constant 0 : i32
    %c0_i32_2 = arith.constant 0 : i32
    return %c0_i32, %c0_i32_0, %c0_i32_1 : i32, i32, i32
  }
  func.func @transform_2(%arg0: i32) -> (i32, i32) {
    %c0_i32 = arith.constant 0 : i32
    %c0_i32_0 = arith.constant 0 : i32
    %c0_i32_1 = arith.constant 0 : i32
    return %c0_i32, %c0_i32_0 : i32, i32
  }
  func.func @transform_3(%arg0: i32) -> (i32, i32, i32) {
    %c0_i32 = arith.constant 0 : i32
    %c0_i32_0 = arith.constant 0 : i32
    %c0_i32_1 = arith.constant 0 : i32
    %c0_i32_2 = arith.constant 0 : i32
    return %c0_i32, %c0_i32_0, %c0_i32_1 : i32, i32, i32
  }
  func.func @transform_4(%arg0: i32) -> (i32, i32, i32) {
    %c0_i32 = arith.constant 0 : i32
    %c0_i32_0 = arith.constant 0 : i32
    %c0_i32_1 = arith.constant 0 : i32
    %c0_i32_2 = arith.constant 0 : i32
    return %c0_i32, %c0_i32_0, %c0_i32_1 : i32, i32, i32
  }
  func.func @transform_5(%arg0: i32) -> (i32, i32) {
    %c0_i32 = arith.constant 0 : i32
    %c0_i32_0 = arith.constant 0 : i32
    %c0_i32_1 = arith.constant 0 : i32
    return %c0_i32, %c0_i32_0 : i32, i32
  }
  func.func @transform_6(%arg0: i32) -> (i32, i32) {
    %c0_i32 = arith.constant 0 : i32
    %c0_i32_0 = arith.constant 0 : i32
    return %arg0, %c0_i32 : i32, i32
  }
}

</mosaic_0001>

<llo_original>
// kernel: net_forward.1
$region0: #{net_forward.1}
  #allocation0 [shape = 'u32[]', space=smem, size = 0x4, offset = 0x4, fixed_abs, tag = 'smem constant byte address 0x4 - core index']
  #allocation1 [shape = 'u32[144,128]{1,0:T(1,128)}', space=vmem, size = 0x12000, scoped, tag = 'internal scratch']
  #allocation2 [shape = 'f32[1,1]{1,0:T(1,128)S(1)}', space=vmem, size = 0x200, scoped, tag = 'scoped memory for net_forward.1']
  %s0 = inlined_call_operand.vmem [shape: f32[30,8,1], index: 0, kind: input, shape index: {}]
  %s1 = inlined_call_operand.vmem [shape: f32[1,1,128], index: 1, kind: input, shape index: {}]
  %s2 = inlined_call_operand.vmem [shape: f32[18,128], index: 2, kind: input, shape index: {}]
  %s3 = inlined_call_operand.vmem [shape: f32[1,1,128], index: 3, kind: input, shape index: {}]
  %s4 = inlined_call_operand.vmem [shape: f32[30,1,18], index: 4, kind: input, shape index: {}]
  %s5 = inlined_call_operand.<no memory space> [shape: f32[1,1], index: 5, kind: input, shape index: {}]
  %s6 = inlined_call_operand.vmem [shape: f32[8,1], index: 6, kind: output, shape index: {}]
  %s7 = sld [smem:[#allocation0]]
  $region34: #{net_forward.1} parent=0
    _
  %s9 = ssub.s32 1, %s7
  %s10 = scalar_select 0, %s9, %s7
  %v11 = vstv %s5
  %12 = vst [vmem:[#allocation2] sm:$0x1] %v11
  // Predicated region
  $region2: #{net_forward.1} parent=0 // pred_check
    _
  $region3: #{net_forward.1} parent=0 // pred_check_branch
    %14 = sbr.rel (0) target = $region5
  $region4: #{net_forward.1} parent=0 // pred_region
    _
  $region5: #{net_forward.1} parent=0 // pred_fallthru
    _
  // Predicated region
  $region6: #{net_forward.1} parent=0 // pred_check
    _
  $region7: #{net_forward.1} parent=0 // pred_check_branch
    %16 = sbr.rel (0) target = $region9
  $region8: #{net_forward.1} parent=0 // pred_region
    _
  $region9: #{net_forward.1} parent=0 // pred_fallthru
    _
  // Predicated region
  $region10: #{net_forward.1} parent=0 // pred_check
    _
  $region11: #{net_forward.1} parent=0 // pred_check_branch
    %18 = sbr.rel (0) target = $region13
  $region12: #{net_forward.1} parent=0 // pred_region
    _
  $region13: #{net_forward.1} parent=0 // pred_fallthru
    _
  // Predicated region
  $region14: #{net_forward.1} parent=0 // pred_check
    _
  $region15: #{net_forward.1} parent=0 // pred_check_branch
    %20 = sbr.rel (0) target = $region17
  $region16: #{net_forward.1} parent=0 // pred_region
    _
  $region17: #{net_forward.1} parent=0 // pred_fallthru
    _
  // Predicated region
  $region18: #{net_forward.1} parent=0 // pred_check
    _
  $region19: #{net_forward.1} parent=0 // pred_check_branch
    %22 = sbr.rel (0) target = $region21
  $region20: #{net_forward.1} parent=0 // pred_region
    _
  $region21: #{net_forward.1} parent=0 // pred_fallthru
    _
  // Predicated region
  $region22: #{net_forward.1} parent=0 // pred_check
    _
  $region23: #{net_forward.1} parent=0 // pred_check_branch
    %24 = sbr.rel (0) target = $region25
  $region24: #{net_forward.1} parent=0 // pred_region
    _
  $region25: #{net_forward.1} parent=0 // pred_fallthru
    _
  %v25 = vld [vmem:[%s1] sm:$0x1]
  %v26 = vld [vmem:[%s3] sm:$0x1]
  %v27 = vld [vmem:[%s2] sm:$0xff]
  %v28 = vld [vmem:[%s2 + $0x8] sm:$0xff]
  %v29 = vld [vmem:[%s2 + $0x10] sm:$0x3]
  %v30 = vld [vmem:[%s0] sm:$0xff]
  %32 = vset.pattern.permute.xlu0 0
  %33 = vperm.xlu0 %32, %v30
  %v34 = vpop.permute.xlu0 %33
  %v37 = vlaneseq
  %v38 = vshrl.u32 %v37, 7
  %v39 = vsub.s32 0, %v38
  %v40 = vrot.slane %v25, %v39
  %v42 = vmul.f32 %v34, %v40
  %v44 = vlaneseq
  %v45 = vshrl.u32 %v44, 7
  %v46 = vsub.s32 0, %v45
  %v47 = vrot.slane %v26, %v46
  %v49 = vadd.f32 %v42, %v47
  %vm50 = vcmask 146432
  %v52 = vsel %vm50, 0.0, 0
  %vm54 = vcmask 1041408
  %v56 = vsel %vm54, %v29, 0
  %58 = vmatprep.subr.mxu0 0.0
  %59 = vmatpush1.msra.mxu0 %v27
  %60 = vmatprep.subr.mxu0 0.0
  %61 = vmatpush1.msra.mxu0 %v28
  %62 = vmatprep.subr.mxu0 0.0
  %63 = vmatpush1.msra.mxu0 %v56
  %64 = vmatprep.subr.mxu0 0.0
  %65 = vmatpush1.msra.mxu0 0.0
  %66 = vmatprep.subr.mxu0 0.0
  %67 = vmatpush1.msra.mxu0 0.0
  %68 = vmatprep.subr.mxu0 0.0
  %69 = vmatpush1.msra.mxu0 0.0
  %70 = vmatprep.subr.mxu0 0.0
  %71 = vmatpush1.msra.mxu0 0.0
  %72 = vmatprep.subr.mxu0 0.0
  %73 = vmatpush1.msra.mxu0 0.0
  %74 = vmatprep.subr.mxu0 0.0
  %75 = vmatpush1.msra.mxu0 0.0
  %76 = vmatprep.subr.mxu0 0.0
  %77 = vmatpush1.msra.mxu0 0.0
  %78 = vmatprep.subr.mxu0 0.0
  %79 = vmatpush1.msra.mxu0 0.0
  %80 = vmatprep.subr.mxu0 0.0
  %81 = vmatpush1.msra.mxu0 0.0
  %82 = vmatprep.subr.mxu0 0.0
  %83 = vmatpush1.msra.mxu0 0.0
  %84 = vmatprep.subr.mxu0 0.0
  %85 = vmatpush1.msra.mxu0 0.0
  %86 = vmatprep.subr.mxu0 0.0
  %87 = vmatpush1.msra.mxu0 0.0
  %88 = vmatprep.subr.mxu0 0.0
  %89 = vmatpush1.msra.mxu0 0.0
  %90 = vmatprep.subr.mxu0 0.0
  %91 = vmatpush1.msra.mxu0 0.0
  %92 = vmatprep.subr.mxu0 0.0
  %93 = vmatpush1.msra.mxu0 0.0
  %94 = vmatprep.subr.mxu0 0.0
  %95 = vmatpush1.msra.mxu0 0.0
  %96 = vmatprep.subr.mxu0 0.0
  %97 = vmatpush1.msra.mxu0 0.0
  %98 = vmatprep.subr.mxu0 0.0
  %99 = vmatpush1.msra.mxu0 0.0
  %100 = vmatprep.subr.mxu0 0.0
  %101 = vmatpush1.msra.mxu0 0.0
  %102 = vmatprep.subr.mxu0 0.0
  %103 = vmatpush1.msra.mxu0 0.0
  %104 = vmatprep.subr.mxu0 0.0
  %105 = vmatpush1.msra.mxu0 0.0
  %106 = vmatprep.subr.mxu0 0.0
  %107 = vmatpush1.msra.mxu0 0.0
  %108 = vmatprep.subr.mxu0 0.0
  %109 = vmatpush1.msra.mxu0 0.0
  %110 = vmatprep.subr.mxu0 0.0
  %111 = vmatpush1.msra.mxu0 0.0
  %112 = vmatprep.subr.mxu0 0.0
  %113 = vmatpush1.msra.mxu0 0.0
  %114 = vmatprep.subr.mxu0 0.0
  %115 = vmatpush1.msra.mxu0 0.0
  %116 = vmatprep.subr.mxu0 0.0
  %117 = vmatpush1.msra.mxu0 0.0
  %118 = vmatprep.subr.mxu0 0.0
  %119 = vmatpush1.msra.mxu0 0.0
  %120 = vmatprep.subr.mxu0 0.0
  %121 = vmatpush1.msra.mxu0 0.0
  %122 = vmatprep.mubr.f32.mxu0 0.0
  %123 = vmatmul.mubr.f32.gmra.mrb[0].mxu0 %v52
  %v124 = vpop.f32.mrb[0].mxu0
  %v125 = vadd.f32 0.0, %v124
  %v126 = vpop.f32.mrb[0].mxu0
  %127 = vdwg.mxu0
  %v128 = vadd.f32 %v49, %v125
  %129 = vrot.lane.b32.xlu0 %v128, 110
  %v130 = vpop.permute.xlu0 %129
  %131 = vrot.lane.b32.xlu0 %v128, 92
  %v132 = vpop.permute.xlu0 %131
  %133 = vrot.lane.b32.xlu0 %v128, 74
  %v134 = vpop.permute.xlu0 %133
  %v135 = vmul.f32 %v128, 0.5
  %v136 = vtanh.pop %v135
  %v137 = vmul.f32 %v136, 0.5
  %v138 = vadd.f32 %v137, 0.5
  %v139 = vmul.f32 %v130, 0.5
  %v140 = vtanh.pop %v139
  %v141 = vmul.f32 %v140, 0.5
  %v142 = vadd.f32 %v141, 0.5
  %v143 = vtanh.pop %v132
  %v144 = vmul.f32 %v134, 0.5
  %v145 = vtanh.pop %v144
  %v146 = vmul.f32 %v145, 0.5
  %v147 = vadd.f32 %v146, 0.5
  %v148 = vmul.f32 %v142, 0.0
  %v149 = vmul.f32 %v138, %v143
  %v150 = vadd.f32 %v148, %v149
  %v151 = vtanh.pop %v150
  %v152 = vmul.f32 %v147, %v151
  %v153 = vld [vmem:[%s4] sm:$0x1]
  %v155 = vlaneseq
  %v156 = vshrl.u32 %v155, 7
  %v157 = vsub.s32 0, %v156
  %v158 = vrot.slane %v153, %v157
  %v160 = vmul.f32 %v152, %v158
  %v161 = vadd.f32 %v160, 0.0
  %s162 = scalar_lea.vmem %s0, 8
  %v163 = vld [vmem:[%s162] sm:$0xff]
  %165 = vset.pattern.permute.xlu0 0
  %166 = vperm.xlu0 %165, %v163
  %v167 = vpop.permute.xlu0 %166
  %v169 = vmul.f32 %v167, %v40
  %v170 = vadd.f32 %v169, %v47
  %v172 = vsel %vm50, %v152, 0
  %174 = vmatprep.subr.mxu0 0.0
  %175 = vmatpush1.msra.mxu0 %v27
  %176 = vmatprep.subr.mxu0 0.0
  %177 = vmatpush1.msra.mxu0 %v28
  %178 = vmatprep.subr.mxu0 0.0
  %179 = vmatpush1.msra.mxu0 %v56
  %180 = vmatprep.subr.mxu0 0.0
  %181 = vmatpush1.msra.mxu0 0.0
  %182 = vmatprep.subr.mxu0 0.0
  %183 = vmatpush1.msra.mxu0 0.0
  %184 = vmatprep.subr.mxu0 0.0
  %185 = vmatpush1.msra.mxu0 0.0
  %186 = vmatprep.subr.mxu0 0.0
  %187 = vmatpush1.msra.mxu0 0.0
  %188 = vmatprep.subr.mxu0 0.0
  %189 = vmatpush1.msra.mxu0 0.0
  %190 = vmatprep.subr.mxu0 0.0
  %191 = vmatpush1.msra.mxu0 0.0
  %192 = vmatprep.subr.mxu0 0.0
  %193 = vmatpush1.msra.mxu0 0.0
  %194 = vmatprep.subr.mxu0 0.0
  %195 = vmatpush1.msra.mxu0 0.0
  %196 = vmatprep.subr.mxu0 0.0
  %197 = vmatpush1.msra.mxu0 0.0
  %198 = vmatprep.subr.mxu0 0.0
  %199 = vmatpush1.msra.mxu0 0.0
  %200 = vmatprep.subr.mxu0 0.0
  %201 = vmatpush1.msra.mxu0 0.0
  %202 = vmatprep.subr.mxu0 0.0
  %203 = vmatpush1.msra.mxu0 0.0
  %204 = vmatprep.subr.mxu0 0.0
  %205 = vmatpush1.msra.mxu0 0.0
  %206 = vmatprep.subr.mxu0 0.0
  %207 = vmatpush1.msra.mxu0 0.0
  %208 = vmatprep.subr.mxu0 0.0
  %209 = vmatpush1.msra.mxu0 0.0
  %210 = vmatprep.subr.mxu0 0.0
  %211 = vmatpush1.msra.mxu0 0.0
  %212 = vmatprep.subr.mxu0 0.0
  %213 = vmatpush1.msra.mxu0 0.0
  %214 = vmatprep.subr.mxu0 0.0
  %215 = vmatpush1.msra.mxu0 0.0
  %216 = vmatprep.subr.mxu0 0.0
  %217 = vmatpush1.msra.mxu0 0.0
  %218 = vmatprep.subr.mxu0 0.0
  %219 = vmatpush1.msra.mxu0 0.0
  %220 = vmatprep.subr.mxu0 0.0
  %221 = vmatpush1.msra.mxu0 0.0
  %222 = vmatprep.subr.mxu0 0.0
  %223 = vmatpush1.msra.mxu0 0.0
  %224 = vmatprep.subr.mxu0 0.0
  %225 = vmatpush1.msra.mxu0 0.0
  %226 = vmatprep.subr.mxu0 0.0
  %227 = vmatpush1.msra.mxu0 0.0
  %228 = vmatprep.subr.mxu0 0.0
  %229 = vmatpush1.msra.mxu0 0.0
  %230 = vmatprep.subr.mxu0 0.0
  %231 = vmatpush1.msra.mxu0 0.0
  %232 = vmatprep.subr.mxu0 0.0
  %233 = vmatpush1.msra.mxu0 0.0
  %234 = vmatprep.subr.mxu0 0.0
  %235 = vmatpush1.msra.mxu0 0.0
  %236 = vmatprep.subr.mxu0 0.0
  %237 = vmatpush1.msra.mxu0 0.0
  %238 = vmatprep.mubr.f32.mxu0 0.0
  %239 = vmatmul.mubr.f32.gmra.mrb[0].mxu0 %v172
  %v240 = vpop.f32.mrb[0].mxu0
  %v241 = vadd.f32 0.0, %v240
  %v242 = vpop.f32.mrb[0].mxu0
  %243 = vdwg.mxu0
  %v244 = vadd.f32 %v170, %v241
  %245 = vrot.lane.b32.xlu0 %v244, 110
  %v246 = vpop.permute.xlu0 %245
  %247 = vrot.lane.b32.xlu0 %v244, 92
  %v248 = vpop.permute.xlu0 %247
  %249 = vrot.lane.b32.xlu0 %v244, 74
  %v250 = vpop.permute.xlu0 %249
  %v251 = vmul.f32 %v244, 0.5
  %v252 = vtanh.pop %v251
  %v253 = vmul.f32 %v252, 0.5
  %v254 = vadd.f32 %v253, 0.5
  %v255 = vmul.f32 %v246, 0.5
  %v256 = vtanh.pop %v255
  %v257 = vmul.f32 %v256, 0.5
  %v258 = vadd.f32 %v257, 0.5
  %v259 = vtanh.pop %v248
  %v260 = vmul.f32 %v250, 0.5
  %v261 = vtanh.pop %v260
  %v262 = vmul.f32 %v261, 0.5
  %v263 = vadd.f32 %v262, 0.5
  %v264 = vmul.f32 %v258, %v150
  %v265 = vmul.f32 %v254, %v259
  %v266 = vadd.f32 %v264, %v265
  %v267 = vtanh.pop %v266
  %v268 = vmul.f32 %v263, %v267
  %s269 = scalar_lea.vmem %s4, 1
  %v270 = vld [vmem:[%s269] sm:$0x1]
  %v272 = vlaneseq
  %v273 = vshrl.u32 %v272, 7
  %v274 = vsub.s32 0, %v273
  %v275 = vrot.slane %v270, %v274
  %v277 = vmul.f32 %v268, %v275
  %v278 = vadd.f32 %v161, %v277
  %s279 = scalar_lea.vmem %s0, 16
  %v280 = vld [vmem:[%s279] sm:$0xff]
  %282 = vset.pattern.permute.xlu0 0
  %283 = vperm.xlu0 %282, %v280
  %v284 = vpop.permute.xlu0 %283
  %v286 = vmul.f32 %v284, %v40
  %v287 = vadd.f32 %v286, %v47
  %v289 = vsel %vm50, %v268, 0
  %291 = vmatprep.subr.mxu0 0.0
  %292 = vmatpush1.msra.mxu0 %v27
  %293 = vmatprep.subr.mxu0 0.0
  %294 = vmatpush1.msra.mxu0 %v28
  %295 = vmatprep.subr.mxu0 0.0
  %296 = vmatpush1.msra.mxu0 %v56
  %297 = vmatprep.subr.mxu0 0.0
  %298 = vmatpush1.msra.mxu0 0.0
  %299 = vmatprep.subr.mxu0 0.0
  %300 = vmatpush1.msra.mxu0 0.0
  %301 = vmatprep.subr.mxu0 0.0
  %302 = vmatpush1.msra.mxu0 0.0
  %303 = vmatprep.subr.mxu0 0.0
  %304 = vmatpush1.msra.mxu0 0.0
  %305 = vmatprep.subr.mxu0 0.0
  %306 = vmatpush1.msra.mxu0 0.0
  %307 = vmatprep.subr.mxu0 0.0
  %308 = vmatpush1.msra.mxu0 0.0
  %309 = vmatprep.subr.mxu0 0.0
  %310 = vmatpush1.msra.mxu0 0.0
  %311 = vmatprep.subr.mxu0 0.0
  %312 = vmatpush1.msra.mxu0 0.0
  %313 = vmatprep.subr.mxu0 0.0
  %314 = vmatpush1.msra.mxu0 0.0
  %315 = vmatprep.subr.mxu0 0.0
  %316 = vmatpush1.msra.mxu0 0.0
  %317 = vmatprep.subr.mxu0 0.0
  %318 = vmatpush1.msra.mxu0 0.0
  %319 = vmatprep.subr.mxu0 0.0
  %320 = vmatpush1.msra.mxu0 0.0
  %321 = vmatprep.subr.mxu0 0.0
  %322 = vmatpush1.msra.mxu0 0.0
  %323 = vmatprep.subr.mxu0 0.0
  %324 = vmatpush1.msra.mxu0 0.0
  %325 = vmatprep.subr.mxu0 0.0
  %326 = vmatpush1.msra.mxu0 0.0
  %327 = vmatprep.subr.mxu0 0.0
  %328 = vmatpush1.msra.mxu0 0.0
  %329 = vmatprep.subr.mxu0 0.0
  %330 = vmatpush1.msra.mxu0 0.0
  %331 = vmatprep.subr.mxu0 0.0
  %332 = vmatpush1.msra.mxu0 0.0
  %333 = vmatprep.subr.mxu0 0.0
  %334 = vmatpush1.msra.mxu0 0.0
  %335 = vmatprep.subr.mxu0 0.0
  %336 = vmatpush1.msra.mxu0 0.0
  %337 = vmatprep.subr.mxu0 0.0
  %338 = vmatpush1.msra.mxu0 0.0
  %339 = vmatprep.subr.mxu0 0.0
  %340 = vmatpush1.msra.mxu0 0.0
  %341 = vmatprep.subr.mxu0 0.0
  %342 = vmatpush1.msra.mxu0 0.0
  %343 = vmatprep.subr.mxu0 0.0
  %344 = vmatpush1.msra.mxu0 0.0
  %345 = vmatprep.subr.mxu0 0.0
  %346 = vmatpush1.msra.mxu0 0.0
  %347 = vmatprep.subr.mxu0 0.0
  %348 = vmatpush1.msra.mxu0 0.0
  %349 = vmatprep.subr.mxu0 0.0
  %350 = vmatpush1.msra.mxu0 0.0
  %351 = vmatprep.subr.mxu0 0.0
  %352 = vmatpush1.msra.mxu0 0.0
  %353 = vmatprep.subr.mxu0 0.0
  %354 = vmatpush1.msra.mxu0 0.0
  %355 = vmatprep.mubr.f32.mxu0 0.0
  %356 = vmatmul.mubr.f32.gmra.mrb[0].mxu0 %v289
  %v357 = vpop.f32.mrb[0].mxu0
  %v358 = vadd.f32 0.0, %v357
  %v359 = vpop.f32.mrb[0].mxu0
  %360 = vdwg.mxu0
  %v361 = vadd.f32 %v287, %v358
  %362 = vrot.lane.b32.xlu0 %v361, 110
  %v363 = vpop.permute.xlu0 %362
  %364 = vrot.lane.b32.xlu0 %v361, 92
  %v365 = vpop.permute.xlu0 %364
  %366 = vrot.lane.b32.xlu0 %v361, 74
  %v367 = vpop.permute.xlu0 %366
  %v368 = vmul.f32 %v361, 0.5
  %v369 = vtanh.pop %v368
  %v370 = vmul.f32 %v369, 0.5
  %v371 = vadd.f32 %v370, 0.5
  %v372 = vmul.f32 %v363, 0.5
  %v373 = vtanh.pop %v372
  %v374 = vmul.f32 %v373, 0.5
  %v375 = vadd.f32 %v374, 0.5
  %v376 = vtanh.pop %v365
  %v377 = vmul.f32 %v367, 0.5
  %v378 = vtanh.pop %v377
  %v379 = vmul.f32 %v378, 0.5
  %v380 = vadd.f32 %v379, 0.5
  %v381 = vmul.f32 %v375, %v266
  %v382 = vmul.f32 %v371, %v376
  %v383 = vadd.f32 %v381, %v382
  %v384 = vtanh.pop %v383
  %v385 = vmul.f32 %v380, %v384
  %s386 = scalar_lea.vmem %s4, 2
  %v387 = vld [vmem:[%s386] sm:$0x1]
  %v389 = vlaneseq
  %v390 = vshrl.u32 %v389, 7
  %v391 = vsub.s32 0, %v390
  %v392 = vrot.slane %v387, %v391
  %v394 = vmul.f32 %v385, %v392
  %v395 = vadd.f32 %v278, %v394
  %s396 = scalar_lea.vmem %s0, 24
  %v397 = vld [vmem:[%s396] sm:$0xff]
  %399 = vset.pattern.permute.xlu0 0
  %400 = vperm.xlu0 %399, %v397
  %v401 = vpop.permute.xlu0 %400
  %v403 = vmul.f32 %v401, %v40
  %v404 = vadd.f32 %v403, %v47
  %v406 = vsel %vm50, %v385, 0
  %408 = vmatprep.subr.mxu0 0.0
  %409 = vmatpush1.msra.mxu0 %v27
  %410 = vmatprep.subr.mxu0 0.0
  %411 = vmatpush1.msra.mxu0 %v28
  %412 = vmatprep.subr.mxu0 0.0
  %413 = vmatpush1.msra.mxu0 %v56
  %414 = vmatprep.subr.mxu0 0.0
  %415 = vmatpush1.msra.mxu0 0.0
  %416 = vmatprep.subr.mxu0 0.0
  %417 = vmatpush1.msra.mxu0 0.0
  %418 = vmatprep.subr.mxu0 0.0
  %419 = vmatpush1.msra.mxu0 0.0
  %420 = vmatprep.subr.mxu0 0.0
  %421 = vmatpush1.msra.mxu0 0.0
  %422 = vmatprep.subr.mxu0 0.0
  %423 = vmatpush1.msra.mxu0 0.0
  %424 = vmatprep.subr.mxu0 0.0
  %425 = vmatpush1.msra.mxu0 0.0
  %426 = vmatprep.subr.mxu0 0.0
  %427 = vmatpush1.msra.mxu0 0.0
  %428 = vmatprep.subr.mxu0 0.0
  %429 = vmatpush1.msra.mxu0 0.0
  %430 = vmatprep.subr.mxu0 0.0
  %431 = vmatpush1.msra.mxu0 0.0
  %432 = vmatprep.subr.mxu0 0.0
  %433 = vmatpush1.msra.mxu0 0.0
  %434 = vmatprep.subr.mxu0 0.0
  %435 = vmatpush1.msra.mxu0 0.0
  %436 = vmatprep.subr.mxu0 0.0
  %437 = vmatpush1.msra.mxu0 0.0
  %438 = vmatprep.subr.mxu0 0.0
  %439 = vmatpush1.msra.mxu0 0.0
  %440 = vmatprep.subr.mxu0 0.0
  %441 = vmatpush1.msra.mxu0 0.0
  %442 = vmatprep.subr.mxu0 0.0
  %443 = vmatpush1.msra.mxu0 0.0
  %444 = vmatprep.subr.mxu0 0.0
  %445 = vmatpush1.msra.mxu0 0.0
  %446 = vmatprep.subr.mxu0 0.0
  %447 = vmatpush1.msra.mxu0 0.0
  %448 = vmatprep.subr.mxu0 0.0
  %449 = vmatpush1.msra.mxu0 0.0
  %450 = vmatprep.subr.mxu0 0.0
  %451 = vmatpush1.msra.mxu0 0.0
  %452 = vmatprep.subr.mxu0 0.0
  %453 = vmatpush1.msra.mxu0 0.0
  %454 = vmatprep.subr.mxu0 0.0
  %455 = vmatpush1.msra.mxu0 0.0
  %456 = vmatprep.subr.mxu0 0.0
  %457 = vmatpush1.msra.mxu0 0.0
  %458 = vmatprep.subr.mxu0 0.0
  %459 = vmatpush1.msra.mxu0 0.0
  %460 = vmatprep.subr.mxu0 0.0
  %461 = vmatpush1.msra.mxu0 0.0
  %462 = vmatprep.subr.mxu0 0.0
  %463 = vmatpush1.msra.mxu0 0.0
  %464 = vmatprep.subr.mxu0 0.0
  %465 = vmatpush1.msra.mxu0 0.0
  %466 = vmatprep.subr.mxu0 0.0
  %467 = vmatpush1.msra.mxu0 0.0
  %468 = vmatprep.subr.mxu0 0.0
  %469 = vmatpush1.msra.mxu0 0.0
  %470 = vmatprep.subr.mxu0 0.0
  %471 = vmatpush1.msra.mxu0 0.0
  %472 = vmatprep.mubr.f32.mxu0 0.0
  %473 = vmatmul.mubr.f32.gmra.mrb[0].mxu0 %v406
  %v474 = vpop.f32.mrb[0].mxu0
  %v475 = vadd.f32 0.0, %v474
  %v476 = vpop.f32.mrb[0].mxu0
  %477 = vdwg.mxu0
  %v478 = vadd.f32 %v404, %v475
  %479 = vrot.lane.b32.xlu0 %v478, 110
  %v480 = vpop.permute.xlu0 %479
  %481 = vrot.lane.b32.xlu0 %v478, 92
  %v482 = vpop.permute.xlu0 %481
  %483 = vrot.lane.b32.xlu0 %v478, 74
  %v484 = vpop.permute.xlu0 %483
  %v485 = vmul.f32 %v478, 0.5
  %v486 = vtanh.pop %v485
  %v487 = vmul.f32 %v486, 0.5
  %v488 = vadd.f32 %v487, 0.5
  %v489 = vmul.f32 %v480, 0.5
  %v490 = vtanh.pop %v489
  %v491 = vmul.f32 %v490, 0.5
  %v492 = vadd.f32 %v491, 0.5
  %v493 = vtanh.pop %v482
  %v494 = vmul.f32 %v484, 0.5
  %v495 = vtanh.pop %v494
  %v496 = vmul.f32 %v495, 0.5
  %v497 = vadd.f32 %v496, 0.5
  %v498 = vmul.f32 %v492, %v383
  %v499 = vmul.f32 %v488, %v493
  %v500 = vadd.f32 %v498, %v499
  %v501 = vtanh.pop %v500
  %v502 = vmul.f32 %v497, %v501
  %s503 = scalar_lea.vmem %s4, 3
  %v504 = vld [vmem:[%s503] sm:$0x1]
  %v506 = vlaneseq
  %v507 = vshrl.u32 %v506, 7
  %v508 = vsub.s32 0, %v507
  %v509 = vrot.slane %v504, %v508
  %v511 = vmul.f32 %v502, %v509
  %v512 = vadd.f32 %v395, %v511
  %s513 = scalar_lea.vmem %s0, 32
  %v514 = vld [vmem:[%s513] sm:$0xff]
  %516 = vset.pattern.permute.xlu0 0
  %517 = vperm.xlu0 %516, %v514
  %v518 = vpop.permute.xlu0 %517
  %v520 = vmul.f32 %v518, %v40
  %v521 = vadd.f32 %v520, %v47
  %v523 = vsel %vm50, %v502, 0
  %525 = vmatprep.subr.mxu0 0.0
  %526 = vmatpush1.msra.mxu0 %v27
  %527 = vmatprep.subr.mxu0 0.0
  %528 = vmatpush1.msra.mxu0 %v28
  %529 = vmatprep.subr.mxu0 0.0
  %530 = vmatpush1.msra.mxu0 %v56
  %531 = vmatprep.subr.mxu0 0.0
  %532 = vmatpush1.msra.mxu0 0.0
  %533 = vmatprep.subr.mxu0 0.0
  %534 = vmatpush1.msra.mxu0 0.0
  %535 = vmatprep.subr.mxu0 0.0
  %536 = vmatpush1.msra.mxu0 0.0
  %537 = vmatprep.subr.mxu0 0.0
  %538 = vmatpush1.msra.mxu0 0.0
  %539 = vmatprep.subr.mxu0 0.0
  %540 = vmatpush1.msra.mxu0 0.0
  %541 = vmatprep.subr.mxu0 0.0
  %542 = vmatpush1.msra.mxu0 0.0
  %543 = vmatprep.subr.mxu0 0.0
  %544 = vmatpush1.msra.mxu0 0.0
  %545 = vmatprep.subr.mxu0 0.0
  %546 = vmatpush1.msra.mxu0 0.0
  %547 = vmatprep.subr.mxu0 0.0
  %548 = vmatpush1.msra.mxu0 0.0
  %549 = vmatprep.subr.mxu0 0.0
  %550 = vmatpush1.msra.mxu0 0.0
  %551 = vmatprep.subr.mxu0 0.0
  %552 = vmatpush1.msra.mxu0 0.0
  %553 = vmatprep.subr.mxu0 0.0
  %554 = vmatpush1.msra.mxu0 0.0
  %555 = vmatprep.subr.mxu0 0.0
  %556 = vmatpush1.msra.mxu0 0.0
  %557 = vmatprep.subr.mxu0 0.0
  %558 = vmatpush1.msra.mxu0 0.0
  %559 = vmatprep.subr.mxu0 0.0
  %560 = vmatpush1.msra.mxu0 0.0
  %561 = vmatprep.subr.mxu0 0.0
  %562 = vmatpush1.msra.mxu0 0.0
  %563 = vmatprep.subr.mxu0 0.0
  %564 = vmatpush1.msra.mxu0 0.0
  %565 = vmatprep.subr.mxu0 0.0
  %566 = vmatpush1.msra.mxu0 0.0
  %567 = vmatprep.subr.mxu0 0.0
  %568 = vmatpush1.msra.mxu0 0.0
  %569 = vmatprep.subr.mxu0 0.0
  %570 = vmatpush1.msra.mxu0 0.0
  %571 = vmatprep.subr.mxu0 0.0
  %572 = vmatpush1.msra.mxu0 0.0
  %573 = vmatprep.subr.mxu0 0.0
  %574 = vmatpush1.msra.mxu0 0.0
  %575 = vmatprep.subr.mxu0 0.0
  %576 = vmatpush1.msra.mxu0 0.0
  %577 = vmatprep.subr.mxu0 0.0
  %578 = vmatpush1.msra.mxu0 0.0
  %579 = vmatprep.subr.mxu0 0.0
  %580 = vmatpush1.msra.mxu0 0.0
  %581 = vmatprep.subr.mxu0 0.0
  %582 = vmatpush1.msra.mxu0 0.0
  %583 = vmatprep.subr.mxu0 0.0
  %584 = vmatpush1.msra.mxu0 0.0
  %585 = vmatprep.subr.mxu0 0.0
  %586 = vmatpush1.msra.mxu0 0.0
  %587 = vmatprep.subr.mxu0 0.0
  %588 = vmatpush1.msra.mxu0 0.0
  %589 = vmatprep.mubr.f32.mxu0 0.0
  %590 = vmatmul.mubr.f32.gmra.mrb[0].mxu0 %v523
  %v591 = vpop.f32.mrb[0].mxu0
  %v592 = vadd.f32 0.0, %v591
  %v593 = vpop.f32.mrb[0].mxu0
  %594 = vdwg.mxu0
  %v595 = vadd.f32 %v521, %v592
  %596 = vrot.lane.b32.xlu0 %v595, 110
  %v597 = vpop.permute.xlu0 %596
  %598 = vrot.lane.b32.xlu0 %v595, 92
  %v599 = vpop.permute.xlu0 %598
  %600 = vrot.lane.b32.xlu0 %v595, 74
  %v601 = vpop.permute.xlu0 %600
  %v602 = vmul.f32 %v595, 0.5
  %v603 = vtanh.pop %v602
  %v604 = vmul.f32 %v603, 0.5
  %v605 = vadd.f32 %v604, 0.5
  %v606 = vmul.f32 %v597, 0.5
  %v607 = vtanh.pop %v606
  %v608 = vmul.f32 %v607, 0.5
  %v609 = vadd.f32 %v608, 0.5
  %v610 = vtanh.pop %v599
  %v611 = vmul.f32 %v601, 0.5
  %v612 = vtanh.pop %v611
  %v613 = vmul.f32 %v612, 0.5
  %v614 = vadd.f32 %v613, 0.5
  %v615 = vmul.f32 %v609, %v500
  %v616 = vmul.f32 %v605, %v610
  %v617 = vadd.f32 %v615, %v616
  %v618 = vtanh.pop %v617
  %v619 = vmul.f32 %v614, %v618
  %s620 = scalar_lea.vmem %s4, 4
  %v621 = vld [vmem:[%s620] sm:$0x1]
  %v623 = vlaneseq
  %v624 = vshrl.u32 %v623, 7
  %v625 = vsub.s32 0, %v624
  %v626 = vrot.slane %v621, %v625
  %v628 = vmul.f32 %v619, %v626
  %v629 = vadd.f32 %v512, %v628
  %s630 = scalar_lea.vmem %s0, 40
  %v631 = vld [vmem:[%s630] sm:$0xff]
  %633 = vset.pattern.permute.xlu0 0
  %634 = vperm.xlu0 %633, %v631
  %v635 = vpop.permute.xlu0 %634
  %v637 = vmul.f32 %v635, %v40
  %v638 = vadd.f32 %v637, %v47
  %v640 = vsel %vm50, %v619, 0
  %642 = vmatprep.subr.mxu0 0.0
  %643 = vmatpush1.msra.mxu0 %v27
  %644 = vmatprep.subr.mxu0 0.0
  %645 = vmatpush1.msra.mxu0 %v28
  %646 = vmatprep.subr.mxu0 0.0
  %647 = vmatpush1.msra.mxu0 %v56
  %648 = vmatprep.subr.mxu0 0.0
  %649 = vmatpush1.msra.mxu0 0.0
  %650 = vmatprep.subr.mxu0 0.0
  %651 = vmatpush1.msra.mxu0 0.0
  %652 = vmatprep.subr.mxu0 0.0
  %653 = vmatpush1.msra.mxu0 0.0
  %654 = vmatprep.subr.mxu0 0.0
  %655 = vmatpush1.msra.mxu0 0.0
  %656 = vmatprep.subr.mxu0 0.0
  %657 = vmatpush1.msra.mxu0 0.0
  %658 = vmatprep.subr.mxu0 0.0
  %659 = vmatpush1.msra.mxu0 0.0
  %660 = vmatprep.subr.mxu0 0.0
  %661 = vmatpush1.msra.mxu0 0.0
  %662 = vmatprep.subr.mxu0 0.0
  %663 = vmatpush1.msra.mxu0 0.0
  %664 = vmatprep.subr.mxu0 0.0
  %665 = vmatpush1.msra.mxu0 0.0
  %666 = vmatprep.subr.mxu0 0.0
  %667 = vmatpush1.msra.mxu0 0.0
  %668 = vmatprep.subr.mxu0 0.0
  %669 = vmatpush1.msra.mxu0 0.0
  %670 = vmatprep.subr.mxu0 0.0
  %671 = vmatpush1.msra.mxu0 0.0
  %672 = vmatprep.subr.mxu0 0.0
  %673 = vmatpush1.msra.mxu0 0.0
  %674 = vmatprep.subr.mxu0 0.0
  %675 = vmatpush1.msra.mxu0 0.0
  %676 = vmatprep.subr.mxu0 0.0
  %677 = vmatpush1.msra.mxu0 0.0
  %678 = vmatprep.subr.mxu0 0.0
  %679 = vmatpush1.msra.mxu0 0.0
  %680 = vmatprep.subr.mxu0 0.0
  %681 = vmatpush1.msra.mxu0 0.0
  %682 = vmatprep.subr.mxu0 0.0
  %683 = vmatpush1.msra.mxu0 0.0
  %684 = vmatprep.subr.mxu0 0.0
  %685 = vmatpush1.msra.mxu0 0.0
  %686 = vmatprep.subr.mxu0 0.0
  %687 = vmatpush1.msra.mxu0 0.0
  %688 = vmatprep.subr.mxu0 0.0
  %689 = vmatpush1.msra.mxu0 0.0
  %690 = vmatprep.subr.mxu0 0.0
  %691 = vmatpush1.msra.mxu0 0.0
  %692 = vmatprep.subr.mxu0 0.0
  %693 = vmatpush1.msra.mxu0 0.0
  %694 = vmatprep.subr.mxu0 0.0
  %695 = vmatpush1.msra.mxu0 0.0
  %696 = vmatprep.subr.mxu0 0.0
  %697 = vmatpush1.msra.mxu0 0.0
  %698 = vmatprep.subr.mxu0 0.0
  %699 = vmatpush1.msra.mxu0 0.0
  %700 = vmatprep.subr.mxu0 0.0
  %701 = vmatpush1.msra.mxu0 0.0
  %702 = vmatprep.subr.mxu0 0.0
  %703 = vmatpush1.msra.mxu0 0.0
  %704 = vmatprep.subr.mxu0 0.0
  %705 = vmatpush1.msra.mxu0 0.0
  %706 = vmatprep.mubr.f32.mxu0 0.0
  %707 = vmatmul.mubr.f32.gmra.mrb[0].mxu0 %v640
  %v708 = vpop.f32.mrb[0].mxu0
  %v709 = vadd.f32 0.0, %v708
  %v710 = vpop.f32.mrb[0].mxu0
  %711 = vdwg.mxu0
  %v712 = vadd.f32 %v638, %v709
  %713 = vrot.lane.b32.xlu0 %v712, 110
  %v714 = vpop.permute.xlu0 %713
  %715 = vrot.lane.b32.xlu0 %v712, 92
  %v716 = vpop.permute.xlu0 %715
  %717 = vrot.lane.b32.xlu0 %v712, 74
  %v718 = vpop.permute.xlu0 %717
  %v719 = vmul.f32 %v712, 0.5
  %v720 = vtanh.pop %v719
  %v721 = vmul.f32 %v720, 0.5
  %v722 = vadd.f32 %v721, 0.5
  %v723 = vmul.f32 %v714, 0.5
  %v724 = vtanh.pop %v723
  %v725 = vmul.f32 %v724, 0.5
  %v726 = vadd.f32 %v725, 0.5
  %v727 = vtanh.pop %v716
  %v728 = vmul.f32 %v718, 0.5
  %v729 = vtanh.pop %v728
  %v730 = vmul.f32 %v729, 0.5
  %v731 = vadd.f32 %v730, 0.5
  %v732 = vmul.f32 %v726, %v617
  %v733 = vmul.f32 %v722, %v727
  %v734 = vadd.f32 %v732, %v733
  %v735 = vtanh.pop %v734
  %v736 = vmul.f32 %v731, %v735
  %s737 = scalar_lea.vmem %s4, 5
  %v738 = vld [vmem:[%s737] sm:$0x1]
  %v740 = vlaneseq
  %v741 = vshrl.u32 %v740, 7
  %v742 = vsub.s32 0, %v741
  %v743 = vrot.slane %v738, %v742
  %v745 = vmul.f32 %v736, %v743
  %v746 = vadd.f32 %v629, %v745
  %s747 = scalar_lea.vmem %s0, 48
  %v748 = vld [vmem:[%s747] sm:$0xff]
  %750 = vset.pattern.permute.xlu0 0
  %751 = vperm.xlu0 %750, %v748
  %v752 = vpop.permute.xlu0 %751
  %v754 = vmul.f32 %v752, %v40
  %v755 = vadd.f32 %v754, %v47
  %v757 = vsel %vm50, %v736, 0
  %759 = vmatprep.subr.mxu0 0.0
  %760 = vmatpush1.msra.mxu0 %v27
  %761 = vmatprep.subr.mxu0 0.0
  %762 = vmatpush1.msra.mxu0 %v28
  %763 = vmatprep.subr.mxu0 0.0
  %764 = vmatpush1.msra.mxu0 %v56
  %765 = vmatprep.subr.mxu0 0.0
  %766 = vmatpush1.msra.mxu0 0.0
  %767 = vmatprep.subr.mxu0 0.0
  %768 = vmatpush1.msra.mxu0 0.0
  %769 = vmatprep.subr.mxu0 0.0
  %770 = vmatpush1.msra.mxu0 0.0
  %771 = vmatprep.subr.mxu0 0.0
  %772 = vmatpush1.msra.mxu0 0.0
  %773 = vmatprep.subr.mxu0 0.0
  %774 = vmatpush1.msra.mxu0 0.0
  %775 = vmatprep.subr.mxu0 0.0
  %776 = vmatpush1.msra.mxu0 0.0
  %777 = vmatprep.subr.mxu0 0.0
  %778 = vmatpush1.msra.mxu0 0.0
  %779 = vmatprep.subr.mxu0 0.0
  %780 = vmatpush1.msra.mxu0 0.0
  %781 = vmatprep.subr.mxu0 0.0
  %782 = vmatpush1.msra.mxu0 0.0
  %783 = vmatprep.subr.mxu0 0.0
  %784 = vmatpush1.msra.mxu0 0.0
  %785 = vmatprep.subr.mxu0 0.0
  %786 = vmatpush1.msra.mxu0 0.0
  %787 = vmatprep.subr.mxu0 0.0
  %788 = vmatpush1.msra.mxu0 0.0
  %789 = vmatprep.subr.mxu0 0.0
  %790 = vmatpush1.msra.mxu0 0.0
  %791 = vmatprep.subr.mxu0 0.0
  %792 = vmatpush1.msra.mxu0 0.0
  %793 = vmatprep.subr.mxu0 0.0
  %794 = vmatpush1.msra.mxu0 0.0
  %795 = vmatprep.subr.mxu0 0.0
  %796 = vmatpush1.msra.mxu0 0.0
  %797 = vmatprep.subr.mxu0 0.0
  %798 = vmatpush1.msra.mxu0 0.0
  %799 = vmatprep.subr.mxu0 0.0
  %800 = vmatpush1.msra.mxu0 0.0
  %801 = vmatprep.subr.mxu0 0.0
  %802 = vmatpush1.msra.mxu0 0.0
  %803 = vmatprep.subr.mxu0 0.0
  %804 = vmatpush1.msra.mxu0 0.0
  %805 = vmatprep.subr.mxu0 0.0
  %806 = vmatpush1.msra.mxu0 0.0
  %807 = vmatprep.subr.mxu0 0.0
  %808 = vmatpush1.msra.mxu0 0.0
  %809 = vmatprep.subr.mxu0 0.0
  %810 = vmatpush1.msra.mxu0 0.0
  %811 = vmatprep.subr.mxu0 0.0
  %812 = vmatpush1.msra.mxu0 0.0
  %813 = vmatprep.subr.mxu0 0.0
  %814 = vmatpush1.msra.mxu0 0.0
  %815 = vmatprep.subr.mxu0 0.0
  %816 = vmatpush1.msra.mxu0 0.0
  %817 = vmatprep.subr.mxu0 0.0
  %818 = vmatpush1.msra.mxu0 0.0
  %819 = vmatprep.subr.mxu0 0.0
  %820 = vmatpush1.msra.mxu0 0.0
  %821 = vmatprep.subr.mxu0 0.0
  %822 = vmatpush1.msra.mxu0 0.0
  %823 = vmatprep.mubr.f32.mxu0 0.0
  %824 = vmatmul.mubr.f32.gmra.mrb[0].mxu0 %v757
  %v825 = vpop.f32.mrb[0].mxu0
  %v826 = vadd.f32 0.0, %v825
  %v827 = vpop.f32.mrb[0].mxu0
  %828 = vdwg.mxu0
  %v829 = vadd.f32 %v755, %v826
  %830 = vrot.lane.b32.xlu0 %v829, 110
  %v831 = vpop.permute.xlu0 %830
  %832 = vrot.lane.b32.xlu0 %v829, 92
  %v833 = vpop.permute.xlu0 %832
  %834 = vrot.lane.b32.xlu0 %v829, 74
  %v835 = vpop.permute.xlu0 %834
  %v836 = vmul.f32 %v829, 0.5
  %v837 = vtanh.pop %v836
  %v838 = vmul.f32 %v837, 0.5
  %v839 = vadd.f32 %v838, 0.5
  %v840 = vmul.f32 %v831, 0.5
  %v841 = vtanh.pop %v840
  %v842 = vmul.f32 %v841, 0.5
  %v843 = vadd.f32 %v842, 0.5
  %v844 = vtanh.pop %v833
  %v845 = vmul.f32 %v835, 0.5
  %v846 = vtanh.pop %v845
  %v847 = vmul.f32 %v846, 0.5
  %v848 = vadd.f32 %v847, 0.5
  %v849 = vmul.f32 %v843, %v734
  %v850 = vmul.f32 %v839, %v844
  %v851 = vadd.f32 %v849, %v850
  %v852 = vtanh.pop %v851
  %v853 = vmul.f32 %v848, %v852
  %s854 = scalar_lea.vmem %s4, 6
  %v855 = vld [vmem:[%s854] sm:$0x1]
  %v857 = vlaneseq
  %v858 = vshrl.u32 %v857, 7
  %v859 = vsub.s32 0, %v858
  %v860 = vrot.slane %v855, %v859
  %v862 = vmul.f32 %v853, %v860
  %v863 = vadd.f32 %v746, %v862
  %s864 = scalar_lea.vmem %s0, 56
  %v865 = vld [vmem:[%s864] sm:$0xff]
  %867 = vset.pattern.permute.xlu0 0
  %868 = vperm.xlu0 %867, %v865
  %v869 = vpop.permute.xlu0 %868
  %v871 = vmul.f32 %v869, %v40
  %v872 = vadd.f32 %v871, %v47
  %v874 = vsel %vm50, %v853, 0
  %876 = vmatprep.subr.mxu0 0.0
  %877 = vmatpush1.msra.mxu0 %v27
  %878 = vmatprep.subr.mxu0 0.0
  %879 = vmatpush1.msra.mxu0 %v28
  %880 = vmatprep.subr.mxu0 0.0
  %881 = vmatpush1.msra.mxu0 %v56
  %882 = vmatprep.subr.mxu0 0.0
  %883 = vmatpush1.msra.mxu0 0.0
  %884 = vmatprep.subr.mxu0 0.0
  %885 = vmatpush1.msra.mxu0 0.0
  %886 = vmatprep.subr.mxu0 0.0
  %887 = vmatpush1.msra.mxu0 0.0
  %888 = vmatprep.subr.mxu0 0.0
  %889 = vmatpush1.msra.mxu0 0.0
  %890 = vmatprep.subr.mxu0 0.0
  %891 = vmatpush1.msra.mxu0 0.0
  %892 = vmatprep.subr.mxu0 0.0
  %893 = vmatpush1.msra.mxu0 0.0
  %894 = vmatprep.subr.mxu0 0.0
  %895 = vmatpush1.msra.mxu0 0.0
  %896 = vmatprep.subr.mxu0 0.0
  %897 = vmatpush1.msra.mxu0 0.0
  %898 = vmatprep.subr.mxu0 0.0
  %899 = vmatpush1.msra.mxu0 0.0
  %900 = vmatprep.subr.mxu0 0.0
  %901 = vmatpush1.msra.mxu0 0.0
  %902 = vmatprep.subr.mxu0 0.0
  %903 = vmatpush1.msra.mxu0 0.0
  %904 = vmatprep.subr.mxu0 0.0
  %905 = vmatpush1.msra.mxu0 0.0
  %906 = vmatprep.subr.mxu0 0.0
  %907 = vmatpush1.msra.mxu0 0.0
  %908 = vmatprep.subr.mxu0 0.0
  %909 = vmatpush1.msra.mxu0 0.0
  %910 = vmatprep.subr.mxu0 0.0
  %911 = vmatpush1.msra.mxu0 0.0
  %912 = vmatprep.subr.mxu0 0.0
  %913 = vmatpush1.msra.mxu0 0.0
  %914 = vmatprep.subr.mxu0 0.0
  %915 = vmatpush1.msra.mxu0 0.0
  %916 = vmatprep.subr.mxu0 0.0
  %917 = vmatpush1.msra.mxu0 0.0
  %918 = vmatprep.subr.mxu0 0.0
  %919 = vmatpush1.msra.mxu0 0.0
  %920 = vmatprep.subr.mxu0 0.0
  %921 = vmatpush1.msra.mxu0 0.0
  %922 = vmatprep.subr.mxu0 0.0
  %923 = vmatpush1.msra.mxu0 0.0
  %924 = vmatprep.subr.mxu0 0.0
  %925 = vmatpush1.msra.mxu0 0.0
  %926 = vmatprep.subr.mxu0 0.0
  %927 = vmatpush1.msra.mxu0 0.0
  %928 = vmatprep.subr.mxu0 0.0
  %929 = vmatpush1.msra.mxu0 0.0
  %930 = vmatprep.subr.mxu0 0.0
  %931 = vmatpush1.msra.mxu0 0.0
  %932 = vmatprep.subr.mxu0 0.0
  %933 = vmatpush1.msra.mxu0 0.0
  %934 = vmatprep.subr.mxu0 0.0
  %935 = vmatpush1.msra.mxu0 0.0
  %936 = vmatprep.subr.mxu0 0.0
  %937 = vmatpush1.msra.mxu0 0.0
  %938 = vmatprep.subr.mxu0 0.0
  %939 = vmatpush1.msra.mxu0 0.0
  %940 = vmatprep.mubr.f32.mxu0 0.0
  %941 = vmatmul.mubr.f32.gmra.mrb[0].mxu0 %v874
  %v942 = vpop.f32.mrb[0].mxu0
  %v943 = vadd.f32 0.0, %v942
  %v944 = vpop.f32.mrb[0].mxu0
  %945 = vdwg.mxu0
  %v946 = vadd.f32 %v872, %v943
  %947 = vrot.lane.b32.xlu0 %v946, 110
  %v948 = vpop.permute.xlu0 %947
  %949 = vrot.lane.b32.xlu0 %v946, 92
  %v950 = vpop.permute.xlu0 %949
  %951 = vrot.lane.b32.xlu0 %v946, 74
  %v952 = vpop.permute.xlu0 %951
  %v953 = vmul.f32 %v946, 0.5
  %v954 = vtanh.pop %v953
  %v955 = vmul.f32 %v954, 0.5
  %v956 = vadd.f32 %v955, 0.5
  %v957 = vmul.f32 %v948, 0.5
  %v958 = vtanh.pop %v957
  %v959 = vmul.f32 %v958, 0.5
  %v960 = vadd.f32 %v959, 0.5
  %v961 = vtanh.pop %v950
  %v962 = vmul.f32 %v952, 0.5
  %v963 = vtanh.pop %v962
  %v964 = vmul.f32 %v963, 0.5
  %v965 = vadd.f32 %v964, 0.5
  %v966 = vmul.f32 %v960, %v851
  %v967 = vmul.f32 %v956, %v961
  %v968 = vadd.f32 %v966, %v967
  %v969 = vtanh.pop %v968
  %v970 = vmul.f32 %v965, %v969
  %s971 = scalar_lea.vmem %s4, 7
  %v972 = vld [vmem:[%s971] sm:$0x1]
  %v974 = vlaneseq
  %v975 = vshrl.u32 %v974, 7
  %v976 = vsub.s32 0, %v975
  %v977 = vrot.slane %v972, %v976
  %v979 = vmul.f32 %v970, %v977
  %v980 = vadd.f32 %v863, %v979
  %s981 = scalar_lea.vmem %s0, 64
  %v982 = vld [vmem:[%s981] sm:$0xff]
  %984 = vset.pattern.permute.xlu0 0
  %985 = vperm.xlu0 %984, %v982
  %v986 = vpop.permute.xlu0 %985
  %v988 = vmul.f32 %v986, %v40
  %v989 = vadd.f32 %v988, %v47
  %v991 = vsel %vm50, %v970, 0
  %993 = vmatprep.subr.mxu0 0.0
  %994 = vmatpush1.msra.mxu0 %v27
  %995 = vmatprep.subr.mxu0 0.0
  %996 = vmatpush1.msra.mxu0 %v28
  %997 = vmatprep.subr.mxu0 0.0
  %998 = vmatpush1.msra.mxu0 %v56
  %999 = vmatprep.subr.mxu0 0.0
  %1000 = vmatpush1.msra.mxu0 0.0
  %1001 = vmatprep.subr.mxu0 0.0
  %1002 = vmatpush1.msra.mxu0 0.0
  %1003 = vmatprep.subr.mxu0 0.0
  %1004 = vmatpush1.msra.mxu0 0.0
  %1005 = vmatprep.subr.mxu0 0.0
  %1006 = vmatpush1.msra.mxu0 0.0
  %1007 = vmatprep.subr.mxu0 0.0
  %1008 = vmatpush1.msra.mxu0 0.0
  %1009 = vmatprep.subr.mxu0 0.0
  %1010 = vmatpush1.msra.mxu0 0.0
  %1011 = vmatprep.subr.mxu0 0.0
  %1012 = vmatpush1.msra.mxu0 0.0
  %1013 = vmatprep.subr.mxu0 0.0
  %1014 = vmatpush1.msra.mxu0 0.0
  %1015 = vmatprep.subr.mxu0 0.0
  %1016 = vmatpush1.msra.mxu0 0.0
  %1017 = vmatprep.subr.mxu0 0.0
  %1018 = vmatpush1.msra.mxu0 0.0
  %1019 = vmatprep.subr.mxu0 0.0
  %1020 = vmatpush1.msra.mxu0 0.0
  %1021 = vmatprep.subr.mxu0 0.0
  %1022 = vmatpush1.msra.mxu0 0.0
  %1023 = vmatprep.subr.mxu0 0.0
  %1024 = vmatpush1.msra.mxu0 0.0
  %1025 = vmatprep.subr.mxu0 0.0
  %1026 = vmatpush1.msra.mxu0 0.0
  %1027 = vmatprep.subr.mxu0 0.0
  %1028 = vmatpush1.msra.mxu0 0.0
  %1029 = vmatprep.subr.mxu0 0.0
  %1030 = vmatpush1.msra.mxu0 0.0
  %1031 = vmatprep.subr.mxu0 0.0
  %1032 = vmatpush1.msra.mxu0 0.0
  %1033 = vmatprep.subr.mxu0 0.0
  %1034 = vmatpush1.msra.mxu0 0.0
  %1035 = vmatprep.subr.mxu0 0.0
  %1036 = vmatpush1.msra.mxu0 0.0
  %1037 = vmatprep.subr.mxu0 0.0
  %1038 = vmatpush1.msra.mxu0 0.0
  %1039 = vmatprep.subr.mxu0 0.0
  %1040 = vmatpush1.msra.mxu0 0.0
  %1041 = vmatprep.subr.mxu0 0.0
  %1042 = vmatpush1.msra.mxu0 0.0
  %1043 = vmatprep.subr.mxu0 0.0
  %1044 = vmatpush1.msra.mxu0 0.0
  %1045 = vmatprep.subr.mxu0 0.0
  %1046 = vmatpush1.msra.mxu0 0.0
  %1047 = vmatprep.subr.mxu0 0.0
  %1048 = vmatpush1.msra.mxu0 0.0
  %1049 = vmatprep.subr.mxu0 0.0
  %1050 = vmatpush1.msra.mxu0 0.0
  %1051 = vmatprep.subr.mxu0 0.0
  %1052 = vmatpush1.msra.mxu0 0.0
  %1053 = vmatprep.subr.mxu0 0.0
  %1054 = vmatpush1.msra.mxu0 0.0
  %1055 = vmatprep.subr.mxu0 0.0
  %1056 = vmatpush1.msra.mxu0 0.0
  %1057 = vmatprep.mubr.f32.mxu0 0.0
  %1058 = vmatmul.mubr.f32.gmra.mrb[0].mxu0 %v991
  %v1059 = vpop.f32.mrb[0].mxu0
  %v1060 = vadd.f32 0.0, %v1059
  %v1061 = vpop.f32.mrb[0].mxu0
  %1062 = vdwg.mxu0
  %v1063 = vadd.f32 %v989, %v1060
  %1064 = vrot.lane.b32.xlu0 %v1063, 110
  %v1065 = vpop.permute.xlu0 %1064
  %1066 = vrot.lane.b32.xlu0 %v1063, 92
  %v1067 = vpop.permute.xlu0 %1066
  %1068 = vrot.lane.b32.xlu0 %v1063, 74
  %v1069 = vpop.permute.xlu0 %1068
  %v1070 = vmul.f32 %v1063, 0.5
  %v1071 = vtanh.pop %v1070
  %v1072 = vmul.f32 %v1071, 0.5
  %v1073 = vadd.f32 %v1072, 0.5
  %v1074 = vmul.f32 %v1065, 0.5
  %v1075 = vtanh.pop %v1074
  %v1076 = vmul.f32 %v1075, 0.5
  %v1077 = vadd.f32 %v1076, 0.5
  %v1078 = vtanh.pop %v1067
  %v1079 = vmul.f32 %v1069, 0.5
  %v1080 = vtanh.pop %v1079
  %v1081 = vmul.f32 %v1080, 0.5
  %v1082 = vadd.f32 %v1081, 0.5
  %v1083 = vmul.f32 %v1077, %v968
  %v1084 = vmul.f32 %v1073, %v1078
  %v1085 = vadd.f32 %v1083, %v1084
  %v1086 = vtanh.pop %v1085
  %v1087 = vmul.f32 %v1082, %v1086
  %s1088 = scalar_lea.vmem %s4, 8
  %v1089 = vld [vmem:[%s1088] sm:$0x1]
  %v1091 = vlaneseq
  %v1092 = vshrl.u32 %v1091, 7
  %v1093 = vsub.s32 0, %v1092
  %v1094 = vrot.slane %v1089, %v1093
  %v1096 = vmul.f32 %v1087, %v1094
  %v1097 = vadd.f32 %v980, %v1096
  %s1098 = scalar_lea.vmem %s0, 72
  %v1099 = vld [vmem:[%s1098] sm:$0xff]
  %1101 = vset.pattern.permute.xlu0 0
  %1102 = vperm.xlu0 %1101, %v1099
  %v1103 = vpop.permute.xlu0 %1102
  %v1105 = vmul.f32 %v1103, %v40
  %v1106 = vadd.f32 %v1105, %v47
  %v1108 = vsel %vm50, %v1087, 0
  %1110 = vmatprep.subr.mxu0 0.0
  %1111 = vmatpush1.msra.mxu0 %v27
  %1112 = vmatprep.subr.mxu0 0.0
  %1113 = vmatpush1.msra.mxu0 %v28
  %1114 = vmatprep.subr.mxu0 0.0
  %1115 = vmatpush1.msra.mxu0 %v56
  %1116 = vmatprep.subr.mxu0 0.0
  %1117 = vmatpush1.msra.mxu0 0.0
  %1118 = vmatprep.subr.mxu0 0.0
  %1119 = vmatpush1.msra.mxu0 0.0
  %1120 = vmatprep.subr.mxu0 0.0
  %1121 = vmatpush1.msra.mxu0 0.0
  %1122 = vmatprep.subr.mxu0 0.0
  %1123 = vmatpush1.msra.mxu0 0.0
  %1124 = vmatprep.subr.mxu0 0.0
  %1125 = vmatpush1.msra.mxu0 0.0
  %1126 = vmatprep.subr.mxu0 0.0
  %1127 = vmatpush1.msra.mxu0 0.0
  %1128 = vmatprep.subr.mxu0 0.0
  %1129 = vmatpush1.msra.mxu0 0.0
  %1130 = vmatprep.subr.mxu0 0.0
  %1131 = vmatpush1.msra.mxu0 0.0
  %1132 = vmatprep.subr.mxu0 0.0
  %1133 = vmatpush1.msra.mxu0 0.0
  %1134 = vmatprep.subr.mxu0 0.0
  %1135 = vmatpush1.msra.mxu0 0.0
  %1136 = vmatprep.subr.mxu0 0.0
  %1137 = vmatpush1.msra.mxu0 0.0
  %1138 = vmatprep.subr.mxu0 0.0
  %1139 = vmatpush1.msra.mxu0 0.0
  %1140 = vmatprep.subr.mxu0 0.0
  %1141 = vmatpush1.msra.mxu0 0.0
  %1142 = vmatprep.subr.mxu0 0.0
  %1143 = vmatpush1.msra.mxu0 0.0
  %1144 = vmatprep.subr.mxu0 0.0
  %1145 = vmatpush1.msra.mxu0 0.0
  %1146 = vmatprep.subr.mxu0 0.0
  %1147 = vmatpush1.msra.mxu0 0.0
  %1148 = vmatprep.subr.mxu0 0.0
  %1149 = vmatpush1.msra.mxu0 0.0
  %1150 = vmatprep.subr.mxu0 0.0
  %1151 = vmatpush1.msra.mxu0 0.0
  %1152 = vmatprep.subr.mxu0 0.0
  %1153 = vmatpush1.msra.mxu0 0.0
  %1154 = vmatprep.subr.mxu0 0.0
  %1155 = vmatpush1.msra.mxu0 0.0
  %1156 = vmatprep.subr.mxu0 0.0
  %1157 = vmatpush1.msra.mxu0 0.0
  %1158 = vmatprep.subr.mxu0 0.0
  %1159 = vmatpush1.msra.mxu0 0.0
  %1160 = vmatprep.subr.mxu0 0.0
  %1161 = vmatpush1.msra.mxu0 0.0
  %1162 = vmatprep.subr.mxu0 0.0
  %1163 = vmatpush1.msra.mxu0 0.0
  %1164 = vmatprep.subr.mxu0 0.0
  %1165 = vmatpush1.msra.mxu0 0.0
  %1166 = vmatprep.subr.mxu0 0.0
  %1167 = vmatpush1.msra.mxu0 0.0
  %1168 = vmatprep.subr.mxu0 0.0
  %1169 = vmatpush1.msra.mxu0 0.0
  %1170 = vmatprep.subr.mxu0 0.0
  %1171 = vmatpush1.msra.mxu0 0.0
  %1172 = vmatprep.subr.mxu0 0.0
  %1173 = vmatpush1.msra.mxu0 0.0
  %1174 = vmatprep.mubr.f32.mxu0 0.0
  %1175 = vmatmul.mubr.f32.gmra.mrb[0].mxu0 %v1108
  %v1176 = vpop.f32.mrb[0].mxu0
  %v1177 = vadd.f32 0.0, %v1176
  %v1178 = vpop.f32.mrb[0].mxu0
  %1179 = vdwg.mxu0
  %v1180 = vadd.f32 %v1106, %v1177
  %1181 = vrot.lane.b32.xlu0 %v1180, 110
  %v1182 = vpop.permute.xlu0 %1181
  %1183 = vrot.lane.b32.xlu0 %v1180, 92
  %v1184 = vpop.permute.xlu0 %1183
  %1185 = vrot.lane.b32.xlu0 %v1180, 74
  %v1186 = vpop.permute.xlu0 %1185
  %v1187 = vmul.f32 %v1180, 0.5
  %v1188 = vtanh.pop %v1187
  %v1189 = vmul.f32 %v1188, 0.5
  %v1190 = vadd.f32 %v1189, 0.5
  %v1191 = vmul.f32 %v1182, 0.5
  %v1192 = vtanh.pop %v1191
  %v1193 = vmul.f32 %v1192, 0.5
  %v1194 = vadd.f32 %v1193, 0.5
  %v1195 = vtanh.pop %v1184
  %v1196 = vmul.f32 %v1186, 0.5
  %v1197 = vtanh.pop %v1196
  %v1198 = vmul.f32 %v1197, 0.5
  %v1199 = vadd.f32 %v1198, 0.5
  %v1200 = vmul.f32 %v1194, %v1085
  %v1201 = vmul.f32 %v1190, %v1195
  %v1202 = vadd.f32 %v1200, %v1201
  %v1203 = vtanh.pop %v1202
  %v1204 = vmul.f32 %v1199, %v1203
  %s1205 = scalar_lea.vmem %s4, 9
  %v1206 = vld [vmem:[%s1205] sm:$0x1]
  %v1208 = vlaneseq
  %v1209 = vshrl.u32 %v1208, 7
  %v1210 = vsub.s32 0, %v1209
  %v1211 = vrot.slane %v1206, %v1210
  %v1213 = vmul.f32 %v1204, %v1211
  %v1214 = vadd.f32 %v1097, %v1213
  %s1215 = scalar_lea.vmem %s0, 80
  %v1216 = vld [vmem:[%s1215] sm:$0xff]
  %1218 = vset.pattern.permute.xlu0 0
  %1219 = vperm.xlu0 %1218, %v1216
  %v1220 = vpop.permute.xlu0 %1219
  %v1222 = vmul.f32 %v1220, %v40
  %v1223 = vadd.f32 %v1222, %v47
  %v1225 = vsel %vm50, %v1204, 0
  %1227 = vmatprep.subr.mxu0 0.0
  %1228 = vmatpush1.msra.mxu0 %v27
  %1229 = vmatprep.subr.mxu0 0.0
  %1230 = vmatpush1.msra.mxu0 %v28
  %1231 = vmatprep.subr.mxu0 0.0
  %1232 = vmatpush1.msra.mxu0 %v56
  %1233 = vmatprep.subr.mxu0 0.0
  %1234 = vmatpush1.msra.mxu0 0.0
  %1235 = vmatprep.subr.mxu0 0.0
  %1236 = vmatpush1.msra.mxu0 0.0
  %1237 = vmatprep.subr.mxu0 0.0
  %1238 = vmatpush1.msra.mxu0 0.0
  %1239 = vmatprep.subr.mxu0 0.0
  %1240 = vmatpush1.msra.mxu0 0.0
  %1241 = vmatprep.subr.mxu0 0.0
  %1242 = vmatpush1.msra.mxu0 0.0
  %1243 = vmatprep.subr.mxu0 0.0
  %1244 = vmatpush1.msra.mxu0 0.0
  %1245 = vmatprep.subr.mxu0 0.0
  %1246 = vmatpush1.msra.mxu0 0.0
  %1247 = vmatprep.subr.mxu0 0.0
  %1248 = vmatpush1.msra.mxu0 0.0
  %1249 = vmatprep.subr.mxu0 0.0
  %1250 = vmatpush1.msra.mxu0 0.0
  %1251 = vmatprep.subr.mxu0 0.0
  %1252 = vmatpush1.msra.mxu0 0.0
  %1253 = vmatprep.subr.mxu0 0.0
  %1254 = vmatpush1.msra.mxu0 0.0
  %1255 = vmatprep.subr.mxu0 0.0
  %1256 = vmatpush1.msra.mxu0 0.0
  %1257 = vmatprep.subr.mxu0 0.0
  %1258 = vmatpush1.msra.mxu0 0.0
  %1259 = vmatprep.subr.mxu0 0.0
  %1260 = vmatpush1.msra.mxu0 0.0
  %1261 = vmatprep.subr.mxu0 0.0
  %1262 = vmatpush1.msra.mxu0 0.0
  %1263 = vmatprep.subr.mxu0 0.0
  %1264 = vmatpush1.msra.mxu0 0.0
  %1265 = vmatprep.subr.mxu0 0.0
  %1266 = vmatpush1.msra.mxu0 0.0
  %1267 = vmatprep.subr.mxu0 0.0
  %1268 = vmatpush1.msra.mxu0 0.0
  %1269 = vmatprep.subr.mxu0 0.0
  %1270 = vmatpush1.msra.mxu0 0.0
  %1271 = vmatprep.subr.mxu0 0.0
  %1272 = vmatpush1.msra.mxu0 0.0
  %1273 = vmatprep.subr.mxu0 0.0
  %1274 = vmatpush1.msra.mxu0 0.0
  %1275 = vmatprep.subr.mxu0 0.0
  %1276 = vmatpush1.msra.mxu0 0.0
  %1277 = vmatprep.subr.mxu0 0.0
  %1278 = vmatpush1.msra.mxu0 0.0
  %1279 = vmatprep.subr.mxu0 0.0
  %1280 = vmatpush1.msra.mxu0 0.0
  %1281 = vmatprep.subr.mxu0 0.0
  %1282 = vmatpush1.msra.mxu0 0.0
  %1283 = vmatprep.subr.mxu0 0.0
  %1284 = vmatpush1.msra.mxu0 0.0
  %1285 = vmatprep.subr.mxu0 0.0
  %1286 = vmatpush1.msra.mxu0 0.0
  %1287 = vmatprep.subr.mxu0 0.0
  %1288 = vmatpush1.msra.mxu0 0.0
  %1289 = vmatprep.subr.mxu0 0.0
  %1290 = vmatpush1.msra.mxu0 0.0
  %1291 = vmatprep.mubr.f32.mxu0 0.0
  %1292 = vmatmul.mubr.f32.gmra.mrb[0].mxu0 %v1225
  %v1293 = vpop.f32.mrb[0].mxu0
  %v1294 = vadd.f32 0.0, %v1293
  %v1295 = vpop.f32.mrb[0].mxu0
  %1296 = vdwg.mxu0
  %v1297 = vadd.f32 %v1223, %v1294
  %1298 = vrot.lane.b32.xlu0 %v1297, 110
  %v1299 = vpop.permute.xlu0 %1298
  %1300 = vrot.lane.b32.xlu0 %v1297, 92
  %v1301 = vpop.permute.xlu0 %1300
  %1302 = vrot.lane.b32.xlu0 %v1297, 74
  %v1303 = vpop.permute.xlu0 %1302
  %v1304 = vmul.f32 %v1297, 0.5
  %v1305 = vtanh.pop %v1304
  %v1306 = vmul.f32 %v1305, 0.5
  %v1307 = vadd.f32 %v1306, 0.5
  %v1308 = vmul.f32 %v1299, 0.5
  %v1309 = vtanh.pop %v1308
  %v1310 = vmul.f32 %v1309, 0.5
  %v1311 = vadd.f32 %v1310, 0.5
  %v1312 = vtanh.pop %v1301
  %v1313 = vmul.f32 %v1303, 0.5
  %v1314 = vtanh.pop %v1313
  %v1315 = vmul.f32 %v1314, 0.5
  %v1316 = vadd.f32 %v1315, 0.5
  %v1317 = vmul.f32 %v1311, %v1202
  %v1318 = vmul.f32 %v1307, %v1312
  %v1319 = vadd.f32 %v1317, %v1318
  %v1320 = vtanh.pop %v1319
  %v1321 = vmul.f32 %v1316, %v1320
  %s1322 = scalar_lea.vmem %s4, 10
  %v1323 = vld [vmem:[%s1322] sm:$0x1]
  %v1325 = vlaneseq
  %v1326 = vshrl.u32 %v1325, 7
  %v1327 = vsub.s32 0, %v1326
  %v1328 = vrot.slane %v1323, %v1327
  %v1330 = vmul.f32 %v1321, %v1328
  %v1331 = vadd.f32 %v1214, %v1330
  %s1332 = scalar_lea.vmem %s0, 88
  %v1333 = vld [vmem:[%s1332] sm:$0xff]
  %1335 = vset.pattern.permute.xlu0 0
  %1336 = vperm.xlu0 %1335, %v1333
  %v1337 = vpop.permute.xlu0 %1336
  %v1339 = vmul.f32 %v1337, %v40
  %v1340 = vadd.f32 %v1339, %v47
  %v1342 = vsel %vm50, %v1321, 0
  %1344 = vmatprep.subr.mxu0 0.0
  %1345 = vmatpush1.msra.mxu0 %v27
  %1346 = vmatprep.subr.mxu0 0.0
  %1347 = vmatpush1.msra.mxu0 %v28
  %1348 = vmatprep.subr.mxu0 0.0
  %1349 = vmatpush1.msra.mxu0 %v56
  %1350 = vmatprep.subr.mxu0 0.0
  %1351 = vmatpush1.msra.mxu0 0.0
  %1352 = vmatprep.subr.mxu0 0.0
  %1353 = vmatpush1.msra.mxu0 0.0
  %1354 = vmatprep.subr.mxu0 0.0
  %1355 = vmatpush1.msra.mxu0 0.0
  %1356 = vmatprep.subr.mxu0 0.0
  %1357 = vmatpush1.msra.mxu0 0.0
  %1358 = vmatprep.subr.mxu0 0.0
  %1359 = vmatpush1.msra.mxu0 0.0
  %1360 = vmatprep.subr.mxu0 0.0
  %1361 = vmatpush1.msra.mxu0 0.0
  %1362 = vmatprep.subr.mxu0 0.0
  %1363 = vmatpush1.msra.mxu0 0.0
  %1364 = vmatprep.subr.mxu0 0.0
  %1365 = vmatpush1.msra.mxu0 0.0
  %1366 = vmatprep.subr.mxu0 0.0
  %1367 = vmatpush1.msra.mxu0 0.0
  %1368 = vmatprep.subr.mxu0 0.0
  %1369 = vmatpush1.msra.mxu0 0.0
  %1370 = vmatprep.subr.mxu0 0.0
  %1371 = vmatpush1.msra.mxu0 0.0
  %1372 = vmatprep.subr.mxu0 0.0
  %1373 = vmatpush1.msra.mxu0 0.0
  %1374 = vmatprep.subr.mxu0 0.0
  %1375 = vmatpush1.msra.mxu0 0.0
  %1376 = vmatprep.subr.mxu0 0.0
  %1377 = vmatpush1.msra.mxu0 0.0
  %1378 = vmatprep.subr.mxu0 0.0
  %1379 = vmatpush1.msra.mxu0 0.0
  %1380 = vmatprep.subr.mxu0 0.0
  %1381 = vmatpush1.msra.mxu0 0.0
  %1382 = vmatprep.subr.mxu0 0.0
  %1383 = vmatpush1.msra.mxu0 0.0
  %1384 = vmatprep.subr.mxu0 0.0
  %1385 = vmatpush1.msra.mxu0 0.0
  %1386 = vmatprep.subr.mxu0 0.0
  %1387 = vmatpush1.msra.mxu0 0.0
  %1388 = vmatprep.subr.mxu0 0.0
  %1389 = vmatpush1.msra.mxu0 0.0
  %1390 = vmatprep.subr.mxu0 0.0
  %1391 = vmatpush1.msra.mxu0 0.0
  %1392 = vmatprep.subr.mxu0 0.0
  %1393 = vmatpush1.msra.mxu0 0.0
  %1394 = vmatprep.subr.mxu0 0.0
  %1395 = vmatpush1.msra.mxu0 0.0
  %1396 = vmatprep.subr.mxu0 0.0
  %1397 = vmatpush1.msra.mxu0 0.0
  %1398 = vmatprep.subr.mxu0 0.0
  %1399 = vmatpush1.msra.mxu0 0.0
  %1400 = vmatprep.subr.mxu0 0.0
  %1401 = vmatpush1.msra.mxu0 0.0
  %1402 = vmatprep.subr.mxu0 0.0
  %1403 = vmatpush1.msra.mxu0 0.0
  %1404 = vmatprep.subr.mxu0 0.0
  %1405 = vmatpush1.msra.mxu0 0.0
  %1406 = vmatprep.subr.mxu0 0.0
  %1407 = vmatpush1.msra.mxu0 0.0
  %1408 = vmatprep.mubr.f32.mxu0 0.0
  %1409 = vmatmul.mubr.f32.gmra.mrb[0].mxu0 %v1342
  %v1410 = vpop.f32.mrb[0].mxu0
  %v1411 = vadd.f32 0.0, %v1410
  %v1412 = vpop.f32.mrb[0].mxu0
  %1413 = vdwg.mxu0
  %v1414 = vadd.f32 %v1340, %v1411
  %1415 = vrot.lane.b32.xlu0 %v1414, 110
  %v1416 = vpop.permute.xlu0 %1415
  %1417 = vrot.lane.b32.xlu0 %v1414, 92
  %v1418 = vpop.permute.xlu0 %1417
  %1419 = vrot.lane.b32.xlu0 %v1414, 74
  %v1420 = vpop.permute.xlu0 %1419
  %v1421 = vmul.f32 %v1414, 0.5
  %v1422 = vtanh.pop %v1421
  %v1423 = vmul.f32 %v1422, 0.5
  %v1424 = vadd.f32 %v1423, 0.5
  %v1425 = vmul.f32 %v1416, 0.5
  %v1426 = vtanh.pop %v1425
  %v1427 = vmul.f32 %v1426, 0.5
  %v1428 = vadd.f32 %v1427, 0.5
  %v1429 = vtanh.pop %v1418
  %v1430 = vmul.f32 %v1420, 0.5
  %v1431 = vtanh.pop %v1430
  %v1432 = vmul.f32 %v1431, 0.5
  %v1433 = vadd.f32 %v1432, 0.5
  %v1434 = vmul.f32 %v1428, %v1319
  %v1435 = vmul.f32 %v1424, %v1429
  %v1436 = vadd.f32 %v1434, %v1435
  %v1437 = vtanh.pop %v1436
  %v1438 = vmul.f32 %v1433, %v1437
  %s1439 = scalar_lea.vmem %s4, 11
  %v1440 = vld [vmem:[%s1439] sm:$0x1]
  %v1442 = vlaneseq
  %v1443 = vshrl.u32 %v1442, 7
  %v1444 = vsub.s32 0, %v1443
  %v1445 = vrot.slane %v1440, %v1444
  %v1447 = vmul.f32 %v1438, %v1445
  %v1448 = vadd.f32 %v1331, %v1447
  %s1449 = scalar_lea.vmem %s0, 96
  %v1450 = vld [vmem:[%s1449] sm:$0xff]
  %1452 = vset.pattern.permute.xlu0 0
  %1453 = vperm.xlu0 %1452, %v1450
  %v1454 = vpop.permute.xlu0 %1453
  %v1456 = vmul.f32 %v1454, %v40
  %v1457 = vadd.f32 %v1456, %v47
  %v1459 = vsel %vm50, %v1438, 0
  %1461 = vmatprep.subr.mxu0 0.0
  %1462 = vmatpush1.msra.mxu0 %v27
  %1463 = vmatprep.subr.mxu0 0.0
  %1464 = vmatpush1.msra.mxu0 %v28
  %1465 = vmatprep.subr.mxu0 0.0
  %1466 = vmatpush1.msra.mxu0 %v56
  %1467 = vmatprep.subr.mxu0 0.0
  %1468 = vmatpush1.msra.mxu0 0.0
  %1469 = vmatprep.subr.mxu0 0.0
  %1470 = vmatpush1.msra.mxu0 0.0
  %1471 = vmatprep.subr.mxu0 0.0
  %1472 = vmatpush1.msra.mxu0 0.0
  %1473 = vmatprep.subr.mxu0 0.0
  %1474 = vmatpush1.msra.mxu0 0.0
  %1475 = vmatprep.subr.mxu0 0.0
  %1476 = vmatpush1.msra.mxu0 0.0
  %1477 = vmatprep.subr.mxu0 0.0
  %1478 = vmatpush1.msra.mxu0 0.0
  %1479 = vmatprep.subr.mxu0 0.0
  %1480 = vmatpush1.msra.mxu0 0.0
  %1481 = vmatprep.subr.mxu0 0.0
  %1482 = vmatpush1.msra.mxu0 0.0
  %1483 = vmatprep.subr.mxu0 0.0
  %1484 = vmatpush1.msra.mxu0 0.0
  %1485 = vmatprep.subr.mxu0 0.0
  %1486 = vmatpush1.msra.mxu0 0.0
  %1487 = vmatprep.subr.mxu0 0.0
  %1488 = vmatpush1.msra.mxu0 0.0
  %1489 = vmatprep.subr.mxu0 0.0
  %1490 = vmatpush1.msra.mxu0 0.0
  %1491 = vmatprep.subr.mxu0 0.0
  %1492 = vmatpush1.msra.mxu0 0.0
  %1493 = vmatprep.subr.mxu0 0.0
  %1494 = vmatpush1.msra.mxu0 0.0
  %1495 = vmatprep.subr.mxu0 0.0
  %1496 = vmatpush1.msra.mxu0 0.0
  %1497 = vmatprep.subr.mxu0 0.0
  %1498 = vmatpush1.msra.mxu0 0.0
  %1499 = vmatprep.subr.mxu0 0.0
  %1500 = vmatpush1.msra.mxu0 0.0
  %1501 = vmatprep.subr.mxu0 0.0
  %1502 = vmatpush1.msra.mxu0 0.0
  %1503 = vmatprep.subr.mxu0 0.0
  %1504 = vmatpush1.msra.mxu0 0.0
  %1505 = vmatprep.subr.mxu0 0.0
  %1506 = vmatpush1.msra.mxu0 0.0
  %1507 = vmatprep.subr.mxu0 0.0
  %1508 = vmatpush1.msra.mxu0 0.0
  %1509 = vmatprep.subr.mxu0 0.0
  %1510 = vmatpush1.msra.mxu0 0.0
  %1511 = vmatprep.subr.mxu0 0.0
  %1512 = vmatpush1.msra.mxu0 0.0
  %1513 = vmatprep.subr.mxu0 0.0
  %1514 = vmatpush1.msra.mxu0 0.0
  %1515 = vmatprep.subr.mxu0 0.0
  %1516 = vmatpush1.msra.mxu0 0.0
  %1517 = vmatprep.subr.mxu0 0.0
  %1518 = vmatpush1.msra.mxu0 0.0
  %1519 = vmatprep.subr.mxu0 0.0
  %1520 = vmatpush1.msra.mxu0 0.0
  %1521 = vmatprep.subr.mxu0 0.0
  %1522 = vmatpush1.msra.mxu0 0.0
  %1523 = vmatprep.subr.mxu0 0.0
  %1524 = vmatpush1.msra.mxu0 0.0
  %1525 = vmatprep.mubr.f32.mxu0 0.0
  %1526 = vmatmul.mubr.f32.gmra.mrb[0].mxu0 %v1459
  %v1527 = vpop.f32.mrb[0].mxu0
  %v1528 = vadd.f32 0.0, %v1527
  %v1529 = vpop.f32.mrb[0].mxu0
  %1530 = vdwg.mxu0
  %v1531 = vadd.f32 %v1457, %v1528
  %1532 = vrot.lane.b32.xlu0 %v1531, 110
  %v1533 = vpop.permute.xlu0 %1532
  %1534 = vrot.lane.b32.xlu0 %v1531, 92
  %v1535 = vpop.permute.xlu0 %1534
  %1536 = vrot.lane.b32.xlu0 %v1531, 74
  %v1537 = vpop.permute.xlu0 %1536
  %v1538 = vmul.f32 %v1531, 0.5
  %v1539 = vtanh.pop %v1538
  %v1540 = vmul.f32 %v1539, 0.5
  %v1541 = vadd.f32 %v1540, 0.5
  %v1542 = vmul.f32 %v1533, 0.5
  %v1543 = vtanh.pop %v1542
  %v1544 = vmul.f32 %v1543, 0.5
  %v1545 = vadd.f32 %v1544, 0.5
  %v1546 = vtanh.pop %v1535
  %v1547 = vmul.f32 %v1537, 0.5
  %v1548 = vtanh.pop %v1547
  %v1549 = vmul.f32 %v1548, 0.5
  %v1550 = vadd.f32 %v1549, 0.5
  %v1551 = vmul.f32 %v1545, %v1436
  %v1552 = vmul.f32 %v1541, %v1546
  %v1553 = vadd.f32 %v1551, %v1552
  %v1554 = vtanh.pop %v1553
  %v1555 = vmul.f32 %v1550, %v1554
  %s1556 = scalar_lea.vmem %s4, 12
  %v1557 = vld [vmem:[%s1556] sm:$0x1]
  %v1559 = vlaneseq
  %v1560 = vshrl.u32 %v1559, 7
  %v1561 = vsub.s32 0, %v1560
  %v1562 = vrot.slane %v1557, %v1561
  %v1564 = vmul.f32 %v1555, %v1562
  %v1565 = vadd.f32 %v1448, %v1564
  %s1566 = scalar_lea.vmem %s0, 104
  %v1567 = vld [vmem:[%s1566] sm:$0xff]
  %1569 = vset.pattern.permute.xlu0 0
  %1570 = vperm.xlu0 %1569, %v1567
  %v1571 = vpop.permute.xlu0 %1570
  %v1573 = vmul.f32 %v1571, %v40
  %v1574 = vadd.f32 %v1573, %v47
  %v1576 = vsel %vm50, %v1555, 0
  %1578 = vmatprep.subr.mxu0 0.0
  %1579 = vmatpush1.msra.mxu0 %v27
  %1580 = vmatprep.subr.mxu0 0.0
  %1581 = vmatpush1.msra.mxu0 %v28
  %1582 = vmatprep.subr.mxu0 0.0
  %1583 = vmatpush1.msra.mxu0 %v56
  %1584 = vmatprep.subr.mxu0 0.0
  %1585 = vmatpush1.msra.mxu0 0.0
  %1586 = vmatprep.subr.mxu0 0.0
  %1587 = vmatpush1.msra.mxu0 0.0
  %1588 = vmatprep.subr.mxu0 0.0
  %1589 = vmatpush1.msra.mxu0 0.0
  %1590 = vmatprep.subr.mxu0 0.0
  %1591 = vmatpush1.msra.mxu0 0.0
  %1592 = vmatprep.subr.mxu0 0.0
  %1593 = vmatpush1.msra.mxu0 0.0
  %1594 = vmatprep.subr.mxu0 0.0
  %1595 = vmatpush1.msra.mxu0 0.0
  %1596 = vmatprep.subr.mxu0 0.0
  %1597 = vmatpush1.msra.mxu0 0.0
  %1598 = vmatprep.subr.mxu0 0.0
  %1599 = vmatpush1.msra.mxu0 0.0
  %1600 = vmatprep.subr.mxu0 0.0
  %1601 = vmatpush1.msra.mxu0 0.0
  %1602 = vmatprep.subr.mxu0 0.0
  %1603 = vmatpush1.msra.mxu0 0.0
  %1604 = vmatprep.subr.mxu0 0.0
  %1605 = vmatpush1.msra.mxu0 0.0
  %1606 = vmatprep.subr.mxu0 0.0
  %1607 = vmatpush1.msra.mxu0 0.0
  %1608 = vmatprep.subr.mxu0 0.0
  %1609 = vmatpush1.msra.mxu0 0.0
  %1610 = vmatprep.subr.mxu0 0.0
  %1611 = vmatpush1.msra.mxu0 0.0
  %1612 = vmatprep.subr.mxu0 0.0
  %1613 = vmatpush1.msra.mxu0 0.0
  %1614 = vmatprep.subr.mxu0 0.0
  %1615 = vmatpush1.msra.mxu0 0.0
  %1616 = vmatprep.subr.mxu0 0.0
  %1617 = vmatpush1.msra.mxu0 0.0
  %1618 = vmatprep.subr.mxu0 0.0
  %1619 = vmatpush1.msra.mxu0 0.0
  %1620 = vmatprep.subr.mxu0 0.0
  %1621 = vmatpush1.msra.mxu0 0.0
  %1622 = vmatprep.subr.mxu0 0.0
  %1623 = vmatpush1.msra.mxu0 0.0
  %1624 = vmatprep.subr.mxu0 0.0
  %1625 = vmatpush1.msra.mxu0 0.0
  %1626 = vmatprep.subr.mxu0 0.0
  %1627 = vmatpush1.msra.mxu0 0.0
  %1628 = vmatprep.subr.mxu0 0.0
  %1629 = vmatpush1.msra.mxu0 0.0
  %1630 = vmatprep.subr.mxu0 0.0
  %1631 = vmatpush1.msra.mxu0 0.0
  %1632 = vmatprep.subr.mxu0 0.0
  %1633 = vmatpush1.msra.mxu0 0.0
  %1634 = vmatprep.subr.mxu0 0.0
  %1635 = vmatpush1.msra.mxu0 0.0
  %1636 = vmatprep.subr.mxu0 0.0
  %1637 = vmatpush1.msra.mxu0 0.0
  %1638 = vmatprep.subr.mxu0 0.0
  %1639 = vmatpush1.msra.mxu0 0.0
  %1640 = vmatprep.subr.mxu0 0.0
  %1641 = vmatpush1.msra.mxu0 0.0
  %1642 = vmatprep.mubr.f32.mxu0 0.0
  %1643 = vmatmul.mubr.f32.gmra.mrb[0].mxu0 %v1576
  %v1644 = vpop.f32.mrb[0].mxu0
  %v1645 = vadd.f32 0.0, %v1644
  %v1646 = vpop.f32.mrb[0].mxu0
  %1647 = vdwg.mxu0
  %v1648 = vadd.f32 %v1574, %v1645
  %1649 = vrot.lane.b32.xlu0 %v1648, 110
  %v1650 = vpop.permute.xlu0 %1649
  %1651 = vrot.lane.b32.xlu0 %v1648, 92
  %v1652 = vpop.permute.xlu0 %1651
  %1653 = vrot.lane.b32.xlu0 %v1648, 74
  %v1654 = vpop.permute.xlu0 %1653
  %v1655 = vmul.f32 %v1648, 0.5
  %v1656 = vtanh.pop %v1655
  %v1657 = vmul.f32 %v1656, 0.5
  %v1658 = vadd.f32 %v1657, 0.5
  %v1659 = vmul.f32 %v1650, 0.5
  %v1660 = vtanh.pop %v1659
  %v1661 = vmul.f32 %v1660, 0.5
  %v1662 = vadd.f32 %v1661, 0.5
  %v1663 = vtanh.pop %v1652
  %v1664 = vmul.f32 %v1654, 0.5
  %v1665 = vtanh.pop %v1664
  %v1666 = vmul.f32 %v1665, 0.5
  %v1667 = vadd.f32 %v1666, 0.5
  %v1668 = vmul.f32 %v1662, %v1553
  %v1669 = vmul.f32 %v1658, %v1663
  %v1670 = vadd.f32 %v1668, %v1669
  %v1671 = vtanh.pop %v1670
  %v1672 = vmul.f32 %v1667, %v1671
  %s1673 = scalar_lea.vmem %s4, 13
  %v1674 = vld [vmem:[%s1673] sm:$0x1]
  %v1676 = vlaneseq
  %v1677 = vshrl.u32 %v1676, 7
  %v1678 = vsub.s32 0, %v1677
  %v1679 = vrot.slane %v1674, %v1678
  %v1681 = vmul.f32 %v1672, %v1679
  %v1682 = vadd.f32 %v1565, %v1681
  %s1683 = scalar_lea.vmem %s0, 112
  %v1684 = vld [vmem:[%s1683] sm:$0xff]
  %1686 = vset.pattern.permute.xlu0 0
  %1687 = vperm.xlu0 %1686, %v1684
  %v1688 = vpop.permute.xlu0 %1687
  %v1690 = vmul.f32 %v1688, %v40
  %v1691 = vadd.f32 %v1690, %v47
  %v1693 = vsel %vm50, %v1672, 0
  %1695 = vmatprep.subr.mxu0 0.0
  %1696 = vmatpush1.msra.mxu0 %v27
  %1697 = vmatprep.subr.mxu0 0.0
  %1698 = vmatpush1.msra.mxu0 %v28
  %1699 = vmatprep.subr.mxu0 0.0
  %1700 = vmatpush1.msra.mxu0 %v56
  %1701 = vmatprep.subr.mxu0 0.0
  %1702 = vmatpush1.msra.mxu0 0.0
  %1703 = vmatprep.subr.mxu0 0.0
  %1704 = vmatpush1.msra.mxu0 0.0
  %1705 = vmatprep.subr.mxu0 0.0
  %1706 = vmatpush1.msra.mxu0 0.0
  %1707 = vmatprep.subr.mxu0 0.0
  %1708 = vmatpush1.msra.mxu0 0.0
  %1709 = vmatprep.subr.mxu0 0.0
  %1710 = vmatpush1.msra.mxu0 0.0
  %1711 = vmatprep.subr.mxu0 0.0
  %1712 = vmatpush1.msra.mxu0 0.0
  %1713 = vmatprep.subr.mxu0 0.0
  %1714 = vmatpush1.msra.mxu0 0.0
  %1715 = vmatprep.subr.mxu0 0.0
  %1716 = vmatpush1.msra.mxu0 0.0
  %1717 = vmatprep.subr.mxu0 0.0
  %1718 = vmatpush1.msra.mxu0 0.0
  %1719 = vmatprep.subr.mxu0 0.0
  %1720 = vmatpush1.msra.mxu0 0.0
  %1721 = vmatprep.subr.mxu0 0.0
  %1722 = vmatpush1.msra.mxu0 0.0
  %1723 = vmatprep.subr.mxu0 0.0
  %1724 = vmatpush1.msra.mxu0 0.0
  %1725 = vmatprep.subr.mxu0 0.0
  %1726 = vmatpush1.msra.mxu0 0.0
  %1727 = vmatprep.subr.mxu0 0.0
  %1728 = vmatpush1.msra.mxu0 0.0
  %1729 = vmatprep.subr.mxu0 0.0
  %1730 = vmatpush1.msra.mxu0 0.0
  %1731 = vmatprep.subr.mxu0 0.0
  %1732 = vmatpush1.msra.mxu0 0.0
  %1733 = vmatprep.subr.mxu0 0.0
  %1734 = vmatpush1.msra.mxu0 0.0
  %1735 = vmatprep.subr.mxu0 0.0
  %1736 = vmatpush1.msra.mxu0 0.0
  %1737 = vmatprep.subr.mxu0 0.0
  %1738 = vmatpush1.msra.mxu0 0.0
  %1739 = vmatprep.subr.mxu0 0.0
  %1740 = vmatpush1.msra.mxu0 0.0
  %1741 = vmatprep.subr.mxu0 0.0
  %1742 = vmatpush1.msra.mxu0 0.0
  %1743 = vmatprep.subr.mxu0 0.0
  %1744 = vmatpush1.msra.mxu0 0.0
  %1745 = vmatprep.subr.mxu0 0.0
  %1746 = vmatpush1.msra.mxu0 0.0
  %1747 = vmatprep.subr.mxu0 0.0
  %1748 = vmatpush1.msra.mxu0 0.0
  %1749 = vmatprep.subr.mxu0 0.0
  %1750 = vmatpush1.msra.mxu0 0.0
  %1751 = vmatprep.subr.mxu0 0.0
  %1752 = vmatpush1.msra.mxu0 0.0
  %1753 = vmatprep.subr.mxu0 0.0
  %1754 = vmatpush1.msra.mxu0 0.0
  %1755 = vmatprep.subr.mxu0 0.0
  %1756 = vmatpush1.msra.mxu0 0.0
  %1757 = vmatprep.subr.mxu0 0.0
  %1758 = vmatpush1.msra.mxu0 0.0
  %1759 = vmatprep.mubr.f32.mxu0 0.0
  %1760 = vmatmul.mubr.f32.gmra.mrb[0].mxu0 %v1693
  %v1761 = vpop.f32.mrb[0].mxu0
  %v1762 = vadd.f32 0.0, %v1761
  %v1763 = vpop.f32.mrb[0].mxu0
  %1764 = vdwg.mxu0
  %v1765 = vadd.f32 %v1691, %v1762
  %1766 = vrot.lane.b32.xlu0 %v1765, 110
  %v1767 = vpop.permute.xlu0 %1766
  %1768 = vrot.lane.b32.xlu0 %v1765, 92
  %v1769 = vpop.permute.xlu0 %1768
  %1770 = vrot.lane.b32.xlu0 %v1765, 74
  %v1771 = vpop.permute.xlu0 %1770
  %v1772 = vmul.f32 %v1765, 0.5
  %v1773 = vtanh.pop %v1772
  %v1774 = vmul.f32 %v1773, 0.5
  %v1775 = vadd.f32 %v1774, 0.5
  %v1776 = vmul.f32 %v1767, 0.5
  %v1777 = vtanh.pop %v1776
  %v1778 = vmul.f32 %v1777, 0.5
  %v1779 = vadd.f32 %v1778, 0.5
  %v1780 = vtanh.pop %v1769
  %v1781 = vmul.f32 %v1771, 0.5
  %v1782 = vtanh.pop %v1781
  %v1783 = vmul.f32 %v1782, 0.5
  %v1784 = vadd.f32 %v1783, 0.5
  %v1785 = vmul.f32 %v1779, %v1670
  %v1786 = vmul.f32 %v1775, %v1780
  %v1787 = vadd.f32 %v1785, %v1786
  %v1788 = vtanh.pop %v1787
  %v1789 = vmul.f32 %v1784, %v1788
  %s1790 = scalar_lea.vmem %s4, 14
  %v1791 = vld [vmem:[%s1790] sm:$0x1]
  %v1793 = vlaneseq
  %v1794 = vshrl.u32 %v1793, 7
  %v1795 = vsub.s32 0, %v1794
  %v1796 = vrot.slane %v1791, %v1795
  %v1798 = vmul.f32 %v1789, %v1796
  %v1799 = vadd.f32 %v1682, %v1798
  %s1800 = scalar_lea.vmem %s0, 120
  %v1801 = vld [vmem:[%s1800] sm:$0xff]
  %1803 = vset.pattern.permute.xlu0 0
  %1804 = vperm.xlu0 %1803, %v1801
  %v1805 = vpop.permute.xlu0 %1804
  %v1807 = vmul.f32 %v1805, %v40
  %v1808 = vadd.f32 %v1807, %v47
  %v1810 = vsel %vm50, %v1789, 0
  %1812 = vmatprep.subr.mxu0 0.0
  %1813 = vmatpush1.msra.mxu0 %v27
  %1814 = vmatprep.subr.mxu0 0.0
  %1815 = vmatpush1.msra.mxu0 %v28
  %1816 = vmatprep.subr.mxu0 0.0
  %1817 = vmatpush1.msra.mxu0 %v56
  %1818 = vmatprep.subr.mxu0 0.0
  %1819 = vmatpush1.msra.mxu0 0.0
  %1820 = vmatprep.subr.mxu0 0.0
  %1821 = vmatpush1.msra.mxu0 0.0
  %1822 = vmatprep.subr.mxu0 0.0
  %1823 = vmatpush1.msra.mxu0 0.0
  %1824 = vmatprep.subr.mxu0 0.0
  %1825 = vmatpush1.msra.mxu0 0.0
  %1826 = vmatprep.subr.mxu0 0.0
  %1827 = vmatpush1.msra.mxu0 0.0
  %1828 = vmatprep.subr.mxu0 0.0
  %1829 = vmatpush1.msra.mxu0 0.0
  %1830 = vmatprep.subr.mxu0 0.0
  %1831 = vmatpush1.msra.mxu0 0.0
  %1832 = vmatprep.subr.mxu0 0.0
  %1833 = vmatpush1.msra.mxu0 0.0
  %1834 = vmatprep.subr.mxu0 0.0
  %1835 = vmatpush1.msra.mxu0 0.0
  %1836 = vmatprep.subr.mxu0 0.0
  %1837 = vmatpush1.msra.mxu0 0.0
  %1838 = vmatprep.subr.mxu0 0.0
  %1839 = vmatpush1.msra.mxu0 0.0
  %1840 = vmatprep.subr.mxu0 0.0
  %1841 = vmatpush1.msra.mxu0 0.0
  %1842 = vmatprep.subr.mxu0 0.0
  %1843 = vmatpush1.msra.mxu0 0.0
  %1844 = vmatprep.subr.mxu0 0.0
  %1845 = vmatpush1.msra.mxu0 0.0
  %1846 = vmatprep.subr.mxu0 0.0
  %1847 = vmatpush1.msra.mxu0 0.0
  %1848 = vmatprep.subr.mxu0 0.0
  %1849 = vmatpush1.msra.mxu0 0.0
  %1850 = vmatprep.subr.mxu0 0.0
  %1851 = vmatpush1.msra.mxu0 0.0
  %1852 = vmatprep.subr.mxu0 0.0
  %1853 = vmatpush1.msra.mxu0 0.0
  %1854 = vmatprep.subr.mxu0 0.0
  %1855 = vmatpush1.msra.mxu0 0.0
  %1856 = vmatprep.subr.mxu0 0.0
  %1857 = vmatpush1.msra.mxu0 0.0
  %1858 = vmatprep.subr.mxu0 0.0
  %1859 = vmatpush1.msra.mxu0 0.0
  %1860 = vmatprep.subr.mxu0 0.0
  %1861 = vmatpush1.msra.mxu0 0.0
  %1862 = vmatprep.subr.mxu0 0.0
  %1863 = vmatpush1.msra.mxu0 0.0
  %1864 = vmatprep.subr.mxu0 0.0
  %1865 = vmatpush1.msra.mxu0 0.0
  %1866 = vmatprep.subr.mxu0 0.0
  %1867 = vmatpush1.msra.mxu0 0.0
  %1868 = vmatprep.subr.mxu0 0.0
  %1869 = vmatpush1.msra.mxu0 0.0
  %1870 = vmatprep.subr.mxu0 0.0
  %1871 = vmatpush1.msra.mxu0 0.0
  %1872 = vmatprep.subr.mxu0 0.0
  %1873 = vmatpush1.msra.mxu0 0.0
  %1874 = vmatprep.subr.mxu0 0.0
  %1875 = vmatpush1.msra.mxu0 0.0
  %1876 = vmatprep.mubr.f32.mxu0 0.0
  %1877 = vmatmul.mubr.f32.gmra.mrb[0].mxu0 %v1810
  %v1878 = vpop.f32.mrb[0].mxu0
  %v1879 = vadd.f32 0.0, %v1878
  %v1880 = vpop.f32.mrb[0].mxu0
  %1881 = vdwg.mxu0
  %v1882 = vadd.f32 %v1808, %v1879
  %1883 = vrot.lane.b32.xlu0 %v1882, 110
  %v1884 = vpop.permute.xlu0 %1883
  %1885 = vrot.lane.b32.xlu0 %v1882, 92
  %v1886 = vpop.permute.xlu0 %1885
  %1887 = vrot.lane.b32.xlu0 %v1882, 74
  %v1888 = vpop.permute.xlu0 %1887
  %v1889 = vmul.f32 %v1882, 0.5
  %v1890 = vtanh.pop %v1889
  %v1891 = vmul.f32 %v1890, 0.5
  %v1892 = vadd.f32 %v1891, 0.5
  %v1893 = vmul.f32 %v1884, 0.5
  %v1894 = vtanh.pop %v1893
  %v1895 = vmul.f32 %v1894, 0.5
  %v1896 = vadd.f32 %v1895, 0.5
  %v1897 = vtanh.pop %v1886
  %v1898 = vmul.f32 %v1888, 0.5
  %v1899 = vtanh.pop %v1898
  %v1900 = vmul.f32 %v1899, 0.5
  %v1901 = vadd.f32 %v1900, 0.5
  %v1902 = vmul.f32 %v1896, %v1787
  %v1903 = vmul.f32 %v1892, %v1897
  %v1904 = vadd.f32 %v1902, %v1903
  %v1905 = vtanh.pop %v1904
  %v1906 = vmul.f32 %v1901, %v1905
  %s1907 = scalar_lea.vmem %s4, 15
  %v1908 = vld [vmem:[%s1907] sm:$0x1]
  %v1910 = vlaneseq
  %v1911 = vshrl.u32 %v1910, 7
  %v1912 = vsub.s32 0, %v1911
  %v1913 = vrot.slane %v1908, %v1912
  %v1915 = vmul.f32 %v1906, %v1913
  %v1916 = vadd.f32 %v1799, %v1915
  %s1917 = scalar_lea.vmem %s0, 128
  %v1918 = vld [vmem:[%s1917] sm:$0xff]
  %1920 = vset.pattern.permute.xlu0 0
  %1921 = vperm.xlu0 %1920, %v1918
  %v1922 = vpop.permute.xlu0 %1921
  %v1924 = vmul.f32 %v1922, %v40
  %v1925 = vadd.f32 %v1924, %v47
  %v1927 = vsel %vm50, %v1906, 0
  %1929 = vmatprep.subr.mxu0 0.0
  %1930 = vmatpush1.msra.mxu0 %v27
  %1931 = vmatprep.subr.mxu0 0.0
  %1932 = vmatpush1.msra.mxu0 %v28
  %1933 = vmatprep.subr.mxu0 0.0
  %1934 = vmatpush1.msra.mxu0 %v56
  %1935 = vmatprep.subr.mxu0 0.0
  %1936 = vmatpush1.msra.mxu0 0.0
  %1937 = vmatprep.subr.mxu0 0.0
  %1938 = vmatpush1.msra.mxu0 0.0
  %1939 = vmatprep.subr.mxu0 0.0
  %1940 = vmatpush1.msra.mxu0 0.0
  %1941 = vmatprep.subr.mxu0 0.0
  %1942 = vmatpush1.msra.mxu0 0.0
  %1943 = vmatprep.subr.mxu0 0.0
  %1944 = vmatpush1.msra.mxu0 0.0
  %1945 = vmatprep.subr.mxu0 0.0
  %1946 = vmatpush1.msra.mxu0 0.0
  %1947 = vmatprep.subr.mxu0 0.0
  %1948 = vmatpush1.msra.mxu0 0.0
  %1949 = vmatprep.subr.mxu0 0.0
  %1950 = vmatpush1.msra.mxu0 0.0
  %1951 = vmatprep.subr.mxu0 0.0
  %1952 = vmatpush1.msra.mxu0 0.0
  %1953 = vmatprep.subr.mxu0 0.0
  %1954 = vmatpush1.msra.mxu0 0.0
  %1955 = vmatprep.subr.mxu0 0.0
  %1956 = vmatpush1.msra.mxu0 0.0
  %1957 = vmatprep.subr.mxu0 0.0
  %1958 = vmatpush1.msra.mxu0 0.0
  %1959 = vmatprep.subr.mxu0 0.0
  %1960 = vmatpush1.msra.mxu0 0.0
  %1961 = vmatprep.subr.mxu0 0.0
  %1962 = vmatpush1.msra.mxu0 0.0
  %1963 = vmatprep.subr.mxu0 0.0
  %1964 = vmatpush1.msra.mxu0 0.0
  %1965 = vmatprep.subr.mxu0 0.0
  %1966 = vmatpush1.msra.mxu0 0.0
  %1967 = vmatprep.subr.mxu0 0.0
  %1968 = vmatpush1.msra.mxu0 0.0
  %1969 = vmatprep.subr.mxu0 0.0
  %1970 = vmatpush1.msra.mxu0 0.0
  %1971 = vmatprep.subr.mxu0 0.0
  %1972 = vmatpush1.msra.mxu0 0.0
  %1973 = vmatprep.subr.mxu0 0.0
  %1974 = vmatpush1.msra.mxu0 0.0
  %1975 = vmatprep.subr.mxu0 0.0
  %1976 = vmatpush1.msra.mxu0 0.0
  %1977 = vmatprep.subr.mxu0 0.0
  %1978 = vmatpush1.msra.mxu0 0.0
  %1979 = vmatprep.subr.mxu0 0.0
  %1980 = vmatpush1.msra.mxu0 0.0
  %1981 = vmatprep.subr.mxu0 0.0
  %1982 = vmatpush1.msra.mxu0 0.0
  %1983 = vmatprep.subr.mxu0 0.0
  %1984 = vmatpush1.msra.mxu0 0.0
  %1985 = vmatprep.subr.mxu0 0.0
  %1986 = vmatpush1.msra.mxu0 0.0
  %1987 = vmatprep.subr.mxu0 0.0
  %1988 = vmatpush1.msra.mxu0 0.0
  %1989 = vmatprep.subr.mxu0 0.0
  %1990 = vmatpush1.msra.mxu0 0.0
  %1991 = vmatprep.subr.mxu0 0.0
  %1992 = vmatpush1.msra.mxu0 0.0
  %1993 = vmatprep.mubr.f32.mxu0 0.0
  %1994 = vmatmul.mubr.f32.gmra.mrb[0].mxu0 %v1927
  %v1995 = vpop.f32.mrb[0].mxu0
  %v1996 = vadd.f32 0.0, %v1995
  %v1997 = vpop.f32.mrb[0].mxu0
  %1998 = vdwg.mxu0
  %v1999 = vadd.f32 %v1925, %v1996
  %2000 = vrot.lane.b32.xlu0 %v1999, 110
  %v2001 = vpop.permute.xlu0 %2000
  %2002 = vrot.lane.b32.xlu0 %v1999, 92
  %v2003 = vpop.permute.xlu0 %2002
  %2004 = vrot.lane.b32.xlu0 %v1999, 74
  %v2005 = vpop.permute.xlu0 %2004
  %v2006 = vmul.f32 %v1999, 0.5
  %v2007 = vtanh.pop %v2006
  %v2008 = vmul.f32 %v2007, 0.5
  %v2009 = vadd.f32 %v2008, 0.5
  %v2010 = vmul.f32 %v2001, 0.5
  %v2011 = vtanh.pop %v2010
  %v2012 = vmul.f32 %v2011, 0.5
  %v2013 = vadd.f32 %v2012, 0.5
  %v2014 = vtanh.pop %v2003
  %v2015 = vmul.f32 %v2005, 0.5
  %v2016 = vtanh.pop %v2015
  %v2017 = vmul.f32 %v2016, 0.5
  %v2018 = vadd.f32 %v2017, 0.5
  %v2019 = vmul.f32 %v2013, %v1904
  %v2020 = vmul.f32 %v2009, %v2014
  %v2021 = vadd.f32 %v2019, %v2020
  %v2022 = vtanh.pop %v2021
  %v2023 = vmul.f32 %v2018, %v2022
  %s2024 = scalar_lea.vmem %s4, 16
  %v2025 = vld [vmem:[%s2024] sm:$0x1]
  %v2027 = vlaneseq
  %v2028 = vshrl.u32 %v2027, 7
  %v2029 = vsub.s32 0, %v2028
  %v2030 = vrot.slane %v2025, %v2029
  %v2032 = vmul.f32 %v2023, %v2030
  %v2033 = vadd.f32 %v1916, %v2032
  %s2034 = scalar_lea.vmem %s0, 136
  %v2035 = vld [vmem:[%s2034] sm:$0xff]
  %2037 = vset.pattern.permute.xlu0 0
  %2038 = vperm.xlu0 %2037, %v2035
  %v2039 = vpop.permute.xlu0 %2038
  %v2041 = vmul.f32 %v2039, %v40
  %v2042 = vadd.f32 %v2041, %v47
  %v2044 = vsel %vm50, %v2023, 0
  %2046 = vmatprep.subr.mxu0 0.0
  %2047 = vmatpush1.msra.mxu0 %v27
  %2048 = vmatprep.subr.mxu0 0.0
  %2049 = vmatpush1.msra.mxu0 %v28
  %2050 = vmatprep.subr.mxu0 0.0
  %2051 = vmatpush1.msra.mxu0 %v56
  %2052 = vmatprep.subr.mxu0 0.0
  %2053 = vmatpush1.msra.mxu0 0.0
  %2054 = vmatprep.subr.mxu0 0.0
  %2055 = vmatpush1.msra.mxu0 0.0
  %2056 = vmatprep.subr.mxu0 0.0
  %2057 = vmatpush1.msra.mxu0 0.0
  %2058 = vmatprep.subr.mxu0 0.0
  %2059 = vmatpush1.msra.mxu0 0.0
  %2060 = vmatprep.subr.mxu0 0.0
  %2061 = vmatpush1.msra.mxu0 0.0
  %2062 = vmatprep.subr.mxu0 0.0
  %2063 = vmatpush1.msra.mxu0 0.0
  %2064 = vmatprep.subr.mxu0 0.0
  %2065 = vmatpush1.msra.mxu0 0.0
  %2066 = vmatprep.subr.mxu0 0.0
  %2067 = vmatpush1.msra.mxu0 0.0
  %2068 = vmatprep.subr.mxu0 0.0
  %2069 = vmatpush1.msra.mxu0 0.0
  %2070 = vmatprep.subr.mxu0 0.0
  %2071 = vmatpush1.msra.mxu0 0.0
  %2072 = vmatprep.subr.mxu0 0.0
  %2073 = vmatpush1.msra.mxu0 0.0
  %2074 = vmatprep.subr.mxu0 0.0
  %2075 = vmatpush1.msra.mxu0 0.0
  %2076 = vmatprep.subr.mxu0 0.0
  %2077 = vmatpush1.msra.mxu0 0.0
  %2078 = vmatprep.subr.mxu0 0.0
  %2079 = vmatpush1.msra.mxu0 0.0
  %2080 = vmatprep.subr.mxu0 0.0
  %2081 = vmatpush1.msra.mxu0 0.0
  %2082 = vmatprep.subr.mxu0 0.0
  %2083 = vmatpush1.msra.mxu0 0.0
  %2084 = vmatprep.subr.mxu0 0.0
  %2085 = vmatpush1.msra.mxu0 0.0
  %2086 = vmatprep.subr.mxu0 0.0
  %2087 = vmatpush1.msra.mxu0 0.0
  %2088 = vmatprep.subr.mxu0 0.0
  %2089 = vmatpush1.msra.mxu0 0.0
  %2090 = vmatprep.subr.mxu0 0.0
  %2091 = vmatpush1.msra.mxu0 0.0
  %2092 = vmatprep.subr.mxu0 0.0
  %2093 = vmatpush1.msra.mxu0 0.0
  %2094 = vmatprep.subr.mxu0 0.0
  %2095 = vmatpush1.msra.mxu0 0.0
  %2096 = vmatprep.subr.mxu0 0.0
  %2097 = vmatpush1.msra.mxu0 0.0
  %2098 = vmatprep.subr.mxu0 0.0
  %2099 = vmatpush1.msra.mxu0 0.0
  %2100 = vmatprep.subr.mxu0 0.0
  %2101 = vmatpush1.msra.mxu0 0.0
  %2102 = vmatprep.subr.mxu0 0.0
  %2103 = vmatpush1.msra.mxu0 0.0
  %2104 = vmatprep.subr.mxu0 0.0
  %2105 = vmatpush1.msra.mxu0 0.0
  %2106 = vmatprep.subr.mxu0 0.0
  %2107 = vmatpush1.msra.mxu0 0.0
  %2108 = vmatprep.subr.mxu0 0.0
  %2109 = vmatpush1.msra.mxu0 0.0
  %2110 = vmatprep.mubr.f32.mxu0 0.0
  %2111 = vmatmul.mubr.f32.gmra.mrb[0].mxu0 %v2044
  %v2112 = vpop.f32.mrb[0].mxu0
  %v2113 = vadd.f32 0.0, %v2112
  %v2114 = vpop.f32.mrb[0].mxu0
  %2115 = vdwg.mxu0
  %v2116 = vadd.f32 %v2042, %v2113
  %2117 = vrot.lane.b32.xlu0 %v2116, 110
  %v2118 = vpop.permute.xlu0 %2117
  %2119 = vrot.lane.b32.xlu0 %v2116, 92
  %v2120 = vpop.permute.xlu0 %2119
  %2121 = vrot.lane.b32.xlu0 %v2116, 74
  %v2122 = vpop.permute.xlu0 %2121
  %v2123 = vmul.f32 %v2116, 0.5
  %v2124 = vtanh.pop %v2123
  %v2125 = vmul.f32 %v2124, 0.5
  %v2126 = vadd.f32 %v2125, 0.5
  %v2127 = vmul.f32 %v2118, 0.5
  %v2128 = vtanh.pop %v2127
  %v2129 = vmul.f32 %v2128, 0.5
  %v2130 = vadd.f32 %v2129, 0.5
  %v2131 = vtanh.pop %v2120
  %v2132 = vmul.f32 %v2122, 0.5
  %v2133 = vtanh.pop %v2132
  %v2134 = vmul.f32 %v2133, 0.5
  %v2135 = vadd.f32 %v2134, 0.5
  %v2136 = vmul.f32 %v2130, %v2021
  %v2137 = vmul.f32 %v2126, %v2131
  %v2138 = vadd.f32 %v2136, %v2137
  %v2139 = vtanh.pop %v2138
  %v2140 = vmul.f32 %v2135, %v2139
  %s2141 = scalar_lea.vmem %s4, 17
  %v2142 = vld [vmem:[%s2141] sm:$0x1]
  %v2144 = vlaneseq
  %v2145 = vshrl.u32 %v2144, 7
  %v2146 = vsub.s32 0, %v2145
  %v2147 = vrot.slane %v2142, %v2146
  %v2149 = vmul.f32 %v2140, %v2147
  %v2150 = vadd.f32 %v2033, %v2149
  %s2151 = scalar_lea.vmem %s0, 144
  %v2152 = vld [vmem:[%s2151] sm:$0xff]
  %2154 = vset.pattern.permute.xlu0 0
  %2155 = vperm.xlu0 %2154, %v2152
  %v2156 = vpop.permute.xlu0 %2155
  %v2158 = vmul.f32 %v2156, %v40
  %v2159 = vadd.f32 %v2158, %v47
  %v2161 = vsel %vm50, %v2140, 0
  %2163 = vmatprep.subr.mxu0 0.0
  %2164 = vmatpush1.msra.mxu0 %v27
  %2165 = vmatprep.subr.mxu0 0.0
  %2166 = vmatpush1.msra.mxu0 %v28
  %2167 = vmatprep.subr.mxu0 0.0
  %2168 = vmatpush1.msra.mxu0 %v56
  %2169 = vmatprep.subr.mxu0 0.0
  %2170 = vmatpush1.msra.mxu0 0.0
  %2171 = vmatprep.subr.mxu0 0.0
  %2172 = vmatpush1.msra.mxu0 0.0
  %2173 = vmatprep.subr.mxu0 0.0
  %2174 = vmatpush1.msra.mxu0 0.0
  %2175 = vmatprep.subr.mxu0 0.0
  %2176 = vmatpush1.msra.mxu0 0.0
  %2177 = vmatprep.subr.mxu0 0.0
  %2178 = vmatpush1.msra.mxu0 0.0
  %2179 = vmatprep.subr.mxu0 0.0
  %2180 = vmatpush1.msra.mxu0 0.0
  %2181 = vmatprep.subr.mxu0 0.0
  %2182 = vmatpush1.msra.mxu0 0.0
  %2183 = vmatprep.subr.mxu0 0.0
  %2184 = vmatpush1.msra.mxu0 0.0
  %2185 = vmatprep.subr.mxu0 0.0
  %2186 = vmatpush1.msra.mxu0 0.0
  %2187 = vmatprep.subr.mxu0 0.0
  %2188 = vmatpush1.msra.mxu0 0.0
  %2189 = vmatprep.subr.mxu0 0.0
  %2190 = vmatpush1.msra.mxu0 0.0
  %2191 = vmatprep.subr.mxu0 0.0
  %2192 = vmatpush1.msra.mxu0 0.0
  %2193 = vmatprep.subr.mxu0 0.0
  %2194 = vmatpush1.msra.mxu0 0.0
  %2195 = vmatprep.subr.mxu0 0.0
  %2196 = vmatpush1.msra.mxu0 0.0
  %2197 = vmatprep.subr.mxu0 0.0
  %2198 = vmatpush1.msra.mxu0 0.0
  %2199 = vmatprep.subr.mxu0 0.0
  %2200 = vmatpush1.msra.mxu0 0.0
  %2201 = vmatprep.subr.mxu0 0.0
  %2202 = vmatpush1.msra.mxu0 0.0
  %2203 = vmatprep.subr.mxu0 0.0
  %2204 = vmatpush1.msra.mxu0 0.0
  %2205 = vmatprep.subr.mxu0 0.0
  %2206 = vmatpush1.msra.mxu0 0.0
  %2207 = vmatprep.subr.mxu0 0.0
  %2208 = vmatpush1.msra.mxu0 0.0
  %2209 = vmatprep.subr.mxu0 0.0
  %2210 = vmatpush1.msra.mxu0 0.0
  %2211 = vmatprep.subr.mxu0 0.0
  %2212 = vmatpush1.msra.mxu0 0.0
  %2213 = vmatprep.subr.mxu0 0.0
  %2214 = vmatpush1.msra.mxu0 0.0
  %2215 = vmatprep.subr.mxu0 0.0
  %2216 = vmatpush1.msra.mxu0 0.0
  %2217 = vmatprep.subr.mxu0 0.0
  %2218 = vmatpush1.msra.mxu0 0.0
  %2219 = vmatprep.subr.mxu0 0.0
  %2220 = vmatpush1.msra.mxu0 0.0
  %2221 = vmatprep.subr.mxu0 0.0
  %2222 = vmatpush1.msra.mxu0 0.0
  %2223 = vmatprep.subr.mxu0 0.0
  %2224 = vmatpush1.msra.mxu0 0.0
  %2225 = vmatprep.subr.mxu0 0.0
  %2226 = vmatpush1.msra.mxu0 0.0
  %2227 = vmatprep.mubr.f32.mxu0 0.0
  %2228 = vmatmul.mubr.f32.gmra.mrb[0].mxu0 %v2161
  %v2229 = vpop.f32.mrb[0].mxu0
  %v2230 = vadd.f32 0.0, %v2229
  %v2231 = vpop.f32.mrb[0].mxu0
  %2232 = vdwg.mxu0
  %v2233 = vadd.f32 %v2159, %v2230
  %2234 = vrot.lane.b32.xlu0 %v2233, 110
  %v2235 = vpop.permute.xlu0 %2234
  %2236 = vrot.lane.b32.xlu0 %v2233, 92
  %v2237 = vpop.permute.xlu0 %2236
  %2238 = vrot.lane.b32.xlu0 %v2233, 74
  %v2239 = vpop.permute.xlu0 %2238
  %v2240 = vmul.f32 %v2233, 0.5
  %v2241 = vtanh.pop %v2240
  %v2242 = vmul.f32 %v2241, 0.5
  %v2243 = vadd.f32 %v2242, 0.5
  %v2244 = vmul.f32 %v2235, 0.5
  %v2245 = vtanh.pop %v2244
  %v2246 = vmul.f32 %v2245, 0.5
  %v2247 = vadd.f32 %v2246, 0.5
  %v2248 = vtanh.pop %v2237
  %v2249 = vmul.f32 %v2239, 0.5
  %v2250 = vtanh.pop %v2249
  %v2251 = vmul.f32 %v2250, 0.5
  %v2252 = vadd.f32 %v2251, 0.5
  %v2253 = vmul.f32 %v2247, %v2138
  %v2254 = vmul.f32 %v2243, %v2248
  %v2255 = vadd.f32 %v2253, %v2254
  %v2256 = vtanh.pop %v2255
  %v2257 = vmul.f32 %v2252, %v2256
  %s2258 = scalar_lea.vmem %s4, 18
  %v2259 = vld [vmem:[%s2258] sm:$0x1]
  %v2261 = vlaneseq
  %v2262 = vshrl.u32 %v2261, 7
  %v2263 = vsub.s32 0, %v2262
  %v2264 = vrot.slane %v2259, %v2263
  %v2266 = vmul.f32 %v2257, %v2264
  %v2267 = vadd.f32 %v2150, %v2266
  %s2268 = scalar_lea.vmem %s0, 152
  %v2269 = vld [vmem:[%s2268] sm:$0xff]
  %2271 = vset.pattern.permute.xlu0 0
  %2272 = vperm.xlu0 %2271, %v2269
  %v2273 = vpop.permute.xlu0 %2272
  %v2275 = vmul.f32 %v2273, %v40
  %v2276 = vadd.f32 %v2275, %v47
  %v2278 = vsel %vm50, %v2257, 0
  %2280 = vmatprep.subr.mxu0 0.0
  %2281 = vmatpush1.msra.mxu0 %v27
  %2282 = vmatprep.subr.mxu0 0.0
  %2283 = vmatpush1.msra.mxu0 %v28
  %2284 = vmatprep.subr.mxu0 0.0
  %2285 = vmatpush1.msra.mxu0 %v56
  %2286 = vmatprep.subr.mxu0 0.0
  %2287 = vmatpush1.msra.mxu0 0.0
  %2288 = vmatprep.subr.mxu0 0.0
  %2289 = vmatpush1.msra.mxu0 0.0
  %2290 = vmatprep.subr.mxu0 0.0
  %2291 = vmatpush1.msra.mxu0 0.0
  %2292 = vmatprep.subr.mxu0 0.0
  %2293 = vmatpush1.msra.mxu0 0.0
  %2294 = vmatprep.subr.mxu0 0.0
  %2295 = vmatpush1.msra.mxu0 0.0
  %2296 = vmatprep.subr.mxu0 0.0
  %2297 = vmatpush1.msra.mxu0 0.0
  %2298 = vmatprep.subr.mxu0 0.0
  %2299 = vmatpush1.msra.mxu0 0.0
  %2300 = vmatprep.subr.mxu0 0.0
  %2301 = vmatpush1.msra.mxu0 0.0
  %2302 = vmatprep.subr.mxu0 0.0
  %2303 = vmatpush1.msra.mxu0 0.0
  %2304 = vmatprep.subr.mxu0 0.0
  %2305 = vmatpush1.msra.mxu0 0.0
  %2306 = vmatprep.subr.mxu0 0.0
  %2307 = vmatpush1.msra.mxu0 0.0
  %2308 = vmatprep.subr.mxu0 0.0
  %2309 = vmatpush1.msra.mxu0 0.0
  %2310 = vmatprep.subr.mxu0 0.0
  %2311 = vmatpush1.msra.mxu0 0.0
  %2312 = vmatprep.subr.mxu0 0.0
  %2313 = vmatpush1.msra.mxu0 0.0
  %2314 = vmatprep.subr.mxu0 0.0
  %2315 = vmatpush1.msra.mxu0 0.0
  %2316 = vmatprep.subr.mxu0 0.0
  %2317 = vmatpush1.msra.mxu0 0.0
  %2318 = vmatprep.subr.mxu0 0.0
  %2319 = vmatpush1.msra.mxu0 0.0
  %2320 = vmatprep.subr.mxu0 0.0
  %2321 = vmatpush1.msra.mxu0 0.0
  %2322 = vmatprep.subr.mxu0 0.0
  %2323 = vmatpush1.msra.mxu0 0.0
  %2324 = vmatprep.subr.mxu0 0.0
  %2325 = vmatpush1.msra.mxu0 0.0
  %2326 = vmatprep.subr.mxu0 0.0
  %2327 = vmatpush1.msra.mxu0 0.0
  %2328 = vmatprep.subr.mxu0 0.0
  %2329 = vmatpush1.msra.mxu0 0.0
  %2330 = vmatprep.subr.mxu0 0.0
  %2331 = vmatpush1.msra.mxu0 0.0
  %2332 = vmatprep.subr.mxu0 0.0
  %2333 = vmatpush1.msra.mxu0 0.0
  %2334 = vmatprep.subr.mxu0 0.0
  %2335 = vmatpush1.msra.mxu0 0.0
  %2336 = vmatprep.subr.mxu0 0.0
  %2337 = vmatpush1.msra.mxu0 0.0
  %2338 = vmatprep.subr.mxu0 0.0
  %2339 = vmatpush1.msra.mxu0 0.0
  %2340 = vmatprep.subr.mxu0 0.0
  %2341 = vmatpush1.msra.mxu0 0.0
  %2342 = vmatprep.subr.mxu0 0.0
  %2343 = vmatpush1.msra.mxu0 0.0
  %2344 = vmatprep.mubr.f32.mxu0 0.0
  %2345 = vmatmul.mubr.f32.gmra.mrb[0].mxu0 %v2278
  %v2346 = vpop.f32.mrb[0].mxu0
  %v2347 = vadd.f32 0.0, %v2346
  %v2348 = vpop.f32.mrb[0].mxu0
  %2349 = vdwg.mxu0
  %v2350 = vadd.f32 %v2276, %v2347
  %2351 = vrot.lane.b32.xlu0 %v2350, 110
  %v2352 = vpop.permute.xlu0 %2351
  %2353 = vrot.lane.b32.xlu0 %v2350, 92
  %v2354 = vpop.permute.xlu0 %2353
  %2355 = vrot.lane.b32.xlu0 %v2350, 74
  %v2356 = vpop.permute.xlu0 %2355
  %v2357 = vmul.f32 %v2350, 0.5
  %v2358 = vtanh.pop %v2357
  %v2359 = vmul.f32 %v2358, 0.5
  %v2360 = vadd.f32 %v2359, 0.5
  %v2361 = vmul.f32 %v2352, 0.5
  %v2362 = vtanh.pop %v2361
  %v2363 = vmul.f32 %v2362, 0.5
  %v2364 = vadd.f32 %v2363, 0.5
  %v2365 = vtanh.pop %v2354
  %v2366 = vmul.f32 %v2356, 0.5
  %v2367 = vtanh.pop %v2366
  %v2368 = vmul.f32 %v2367, 0.5
  %v2369 = vadd.f32 %v2368, 0.5
  %v2370 = vmul.f32 %v2364, %v2255
  %v2371 = vmul.f32 %v2360, %v2365
  %v2372 = vadd.f32 %v2370, %v2371
  %v2373 = vtanh.pop %v2372
  %v2374 = vmul.f32 %v2369, %v2373
  %s2375 = scalar_lea.vmem %s4, 19
  %v2376 = vld [vmem:[%s2375] sm:$0x1]
  %v2378 = vlaneseq
  %v2379 = vshrl.u32 %v2378, 7
  %v2380 = vsub.s32 0, %v2379
  %v2381 = vrot.slane %v2376, %v2380
  %v2383 = vmul.f32 %v2374, %v2381
  %v2384 = vadd.f32 %v2267, %v2383
  %s2385 = scalar_lea.vmem %s0, 160
  %v2386 = vld [vmem:[%s2385] sm:$0xff]
  %2388 = vset.pattern.permute.xlu0 0
  %2389 = vperm.xlu0 %2388, %v2386
  %v2390 = vpop.permute.xlu0 %2389
  %v2392 = vmul.f32 %v2390, %v40
  %v2393 = vadd.f32 %v2392, %v47
  %v2395 = vsel %vm50, %v2374, 0
  %2397 = vmatprep.subr.mxu0 0.0
  %2398 = vmatpush1.msra.mxu0 %v27
  %2399 = vmatprep.subr.mxu0 0.0
  %2400 = vmatpush1.msra.mxu0 %v28
  %2401 = vmatprep.subr.mxu0 0.0
  %2402 = vmatpush1.msra.mxu0 %v56
  %2403 = vmatprep.subr.mxu0 0.0
  %2404 = vmatpush1.msra.mxu0 0.0
  %2405 = vmatprep.subr.mxu0 0.0
  %2406 = vmatpush1.msra.mxu0 0.0
  %2407 = vmatprep.subr.mxu0 0.0
  %2408 = vmatpush1.msra.mxu0 0.0
  %2409 = vmatprep.subr.mxu0 0.0
  %2410 = vmatpush1.msra.mxu0 0.0
  %2411 = vmatprep.subr.mxu0 0.0
  %2412 = vmatpush1.msra.mxu0 0.0
  %2413 = vmatprep.subr.mxu0 0.0
  %2414 = vmatpush1.msra.mxu0 0.0
  %2415 = vmatprep.subr.mxu0 0.0
  %2416 = vmatpush1.msra.mxu0 0.0
  %2417 = vmatprep.subr.mxu0 0.0
  %2418 = vmatpush1.msra.mxu0 0.0
  %2419 = vmatprep.subr.mxu0 0.0
  %2420 = vmatpush1.msra.mxu0 0.0
  %2421 = vmatprep.subr.mxu0 0.0
  %2422 = vmatpush1.msra.mxu0 0.0
  %2423 = vmatprep.subr.mxu0 0.0
  %2424 = vmatpush1.msra.mxu0 0.0
  %2425 = vmatprep.subr.mxu0 0.0
  %2426 = vmatpush1.msra.mxu0 0.0
  %2427 = vmatprep.subr.mxu0 0.0
  %2428 = vmatpush1.msra.mxu0 0.0
  %2429 = vmatprep.subr.mxu0 0.0
  %2430 = vmatpush1.msra.mxu0 0.0
  %2431 = vmatprep.subr.mxu0 0.0
  %2432 = vmatpush1.msra.mxu0 0.0
  %2433 = vmatprep.subr.mxu0 0.0
  %2434 = vmatpush1.msra.mxu0 0.0
  %2435 = vmatprep.subr.mxu0 0.0
  %2436 = vmatpush1.msra.mxu0 0.0
  %2437 = vmatprep.subr.mxu0 0.0
  %2438 = vmatpush1.msra.mxu0 0.0
  %2439 = vmatprep.subr.mxu0 0.0
  %2440 = vmatpush1.msra.mxu0 0.0
  %2441 = vmatprep.subr.mxu0 0.0
  %2442 = vmatpush1.msra.mxu0 0.0
  %2443 = vmatprep.subr.mxu0 0.0
  %2444 = vmatpush1.msra.mxu0 0.0
  %2445 = vmatprep.subr.mxu0 0.0
  %2446 = vmatpush1.msra.mxu0 0.0
  %2447 = vmatprep.subr.mxu0 0.0
  %2448 = vmatpush1.msra.mxu0 0.0
  %2449 = vmatprep.subr.mxu0 0.0
  %2450 = vmatpush1.msra.mxu0 0.0
  %2451 = vmatprep.subr.mxu0 0.0
  %2452 = vmatpush1.msra.mxu0 0.0
  %2453 = vmatprep.subr.mxu0 0.0
  %2454 = vmatpush1.msra.mxu0 0.0
  %2455 = vmatprep.subr.mxu0 0.0
  %2456 = vmatpush1.msra.mxu0 0.0
  %2457 = vmatprep.subr.mxu0 0.0
  %2458 = vmatpush1.msra.mxu0 0.0
  %2459 = vmatprep.subr.mxu0 0.0
  %2460 = vmatpush1.msra.mxu0 0.0
  %2461 = vmatprep.mubr.f32.mxu0 0.0
  %2462 = vmatmul.mubr.f32.gmra.mrb[0].mxu0 %v2395
  %v2463 = vpop.f32.mrb[0].mxu0
  %v2464 = vadd.f32 0.0, %v2463
  %v2465 = vpop.f32.mrb[0].mxu0
  %2466 = vdwg.mxu0
  %v2467 = vadd.f32 %v2393, %v2464
  %2468 = vrot.lane.b32.xlu0 %v2467, 110
  %v2469 = vpop.permute.xlu0 %2468
  %2470 = vrot.lane.b32.xlu0 %v2467, 92
  %v2471 = vpop.permute.xlu0 %2470
  %2472 = vrot.lane.b32.xlu0 %v2467, 74
  %v2473 = vpop.permute.xlu0 %2472
  %v2474 = vmul.f32 %v2467, 0.5
  %v2475 = vtanh.pop %v2474
  %v2476 = vmul.f32 %v2475, 0.5
  %v2477 = vadd.f32 %v2476, 0.5
  %v2478 = vmul.f32 %v2469, 0.5
  %v2479 = vtanh.pop %v2478
  %v2480 = vmul.f32 %v2479, 0.5
  %v2481 = vadd.f32 %v2480, 0.5
  %v2482 = vtanh.pop %v2471
  %v2483 = vmul.f32 %v2473, 0.5
  %v2484 = vtanh.pop %v2483
  %v2485 = vmul.f32 %v2484, 0.5
  %v2486 = vadd.f32 %v2485, 0.5
  %v2487 = vmul.f32 %v2481, %v2372
  %v2488 = vmul.f32 %v2477, %v2482
  %v2489 = vadd.f32 %v2487, %v2488
  %v2490 = vtanh.pop %v2489
  %v2491 = vmul.f32 %v2486, %v2490
  %s2492 = scalar_lea.vmem %s4, 20
  %v2493 = vld [vmem:[%s2492] sm:$0x1]
  %v2495 = vlaneseq
  %v2496 = vshrl.u32 %v2495, 7
  %v2497 = vsub.s32 0, %v2496
  %v2498 = vrot.slane %v2493, %v2497
  %v2500 = vmul.f32 %v2491, %v2498
  %v2501 = vadd.f32 %v2384, %v2500
  %s2502 = scalar_lea.vmem %s0, 168
  %v2503 = vld [vmem:[%s2502] sm:$0xff]
  %2505 = vset.pattern.permute.xlu0 0
  %2506 = vperm.xlu0 %2505, %v2503
  %v2507 = vpop.permute.xlu0 %2506
  %v2509 = vmul.f32 %v2507, %v40
  %v2510 = vadd.f32 %v2509, %v47
  %v2512 = vsel %vm50, %v2491, 0
  %2514 = vmatprep.subr.mxu0 0.0
  %2515 = vmatpush1.msra.mxu0 %v27
  %2516 = vmatprep.subr.mxu0 0.0
  %2517 = vmatpush1.msra.mxu0 %v28
  %2518 = vmatprep.subr.mxu0 0.0
  %2519 = vmatpush1.msra.mxu0 %v56
  %2520 = vmatprep.subr.mxu0 0.0
  %2521 = vmatpush1.msra.mxu0 0.0
  %2522 = vmatprep.subr.mxu0 0.0
  %2523 = vmatpush1.msra.mxu0 0.0
  %2524 = vmatprep.subr.mxu0 0.0
  %2525 = vmatpush1.msra.mxu0 0.0
  %2526 = vmatprep.subr.mxu0 0.0
  %2527 = vmatpush1.msra.mxu0 0.0
  %2528 = vmatprep.subr.mxu0 0.0
  %2529 = vmatpush1.msra.mxu0 0.0
  %2530 = vmatprep.subr.mxu0 0.0
  %2531 = vmatpush1.msra.mxu0 0.0
  %2532 = vmatprep.subr.mxu0 0.0
  %2533 = vmatpush1.msra.mxu0 0.0
  %2534 = vmatprep.subr.mxu0 0.0
  %2535 = vmatpush1.msra.mxu0 0.0
  %2536 = vmatprep.subr.mxu0 0.0
  %2537 = vmatpush1.msra.mxu0 0.0
  %2538 = vmatprep.subr.mxu0 0.0
  %2539 = vmatpush1.msra.mxu0 0.0
  %2540 = vmatprep.subr.mxu0 0.0
  %2541 = vmatpush1.msra.mxu0 0.0
  %2542 = vmatprep.subr.mxu0 0.0
  %2543 = vmatpush1.msra.mxu0 0.0
  %2544 = vmatprep.subr.mxu0 0.0
  %2545 = vmatpush1.msra.mxu0 0.0
  %2546 = vmatprep.subr.mxu0 0.0
  %2547 = vmatpush1.msra.mxu0 0.0
  %2548 = vmatprep.subr.mxu0 0.0
  %2549 = vmatpush1.msra.mxu0 0.0
  %2550 = vmatprep.subr.mxu0 0.0
  %2551 = vmatpush1.msra.mxu0 0.0
  %2552 = vmatprep.subr.mxu0 0.0
  %2553 = vmatpush1.msra.mxu0 0.0
  %2554 = vmatprep.subr.mxu0 0.0
  %2555 = vmatpush1.msra.mxu0 0.0
  %2556 = vmatprep.subr.mxu0 0.0
  %2557 = vmatpush1.msra.mxu0 0.0
  %2558 = vmatprep.subr.mxu0 0.0
  %2559 = vmatpush1.msra.mxu0 0.0
  %2560 = vmatprep.subr.mxu0 0.0
  %2561 = vmatpush1.msra.mxu0 0.0
  %2562 = vmatprep.subr.mxu0 0.0
  %2563 = vmatpush1.msra.mxu0 0.0
  %2564 = vmatprep.subr.mxu0 0.0
  %2565 = vmatpush1.msra.mxu0 0.0
  %2566 = vmatprep.subr.mxu0 0.0
  %2567 = vmatpush1.msra.mxu0 0.0
  %2568 = vmatprep.subr.mxu0 0.0
  %2569 = vmatpush1.msra.mxu0 0.0
  %2570 = vmatprep.subr.mxu0 0.0
  %2571 = vmatpush1.msra.mxu0 0.0
  %2572 = vmatprep.subr.mxu0 0.0
  %2573 = vmatpush1.msra.mxu0 0.0
  %2574 = vmatprep.subr.mxu0 0.0
  %2575 = vmatpush1.msra.mxu0 0.0
  %2576 = vmatprep.subr.mxu0 0.0
  %2577 = vmatpush1.msra.mxu0 0.0
  %2578 = vmatprep.mubr.f32.mxu0 0.0
  %2579 = vmatmul.mubr.f32.gmra.mrb[0].mxu0 %v2512
  %v2580 = vpop.f32.mrb[0].mxu0
  %v2581 = vadd.f32 0.0, %v2580
  %v2582 = vpop.f32.mrb[0].mxu0
  %2583 = vdwg.mxu0
  %v2584 = vadd.f32 %v2510, %v2581
  %2585 = vrot.lane.b32.xlu0 %v2584, 110
  %v2586 = vpop.permute.xlu0 %2585
  %2587 = vrot.lane.b32.xlu0 %v2584, 92
  %v2588 = vpop.permute.xlu0 %2587
  %2589 = vrot.lane.b32.xlu0 %v2584, 74
  %v2590 = vpop.permute.xlu0 %2589
  %v2591 = vmul.f32 %v2584, 0.5
  %v2592 = vtanh.pop %v2591
  %v2593 = vmul.f32 %v2592, 0.5
  %v2594 = vadd.f32 %v2593, 0.5
  %v2595 = vmul.f32 %v2586, 0.5
  %v2596 = vtanh.pop %v2595
  %v2597 = vmul.f32 %v2596, 0.5
  %v2598 = vadd.f32 %v2597, 0.5
  %v2599 = vtanh.pop %v2588
  %v2600 = vmul.f32 %v2590, 0.5
  %v2601 = vtanh.pop %v2600
  %v2602 = vmul.f32 %v2601, 0.5
  %v2603 = vadd.f32 %v2602, 0.5
  %v2604 = vmul.f32 %v2598, %v2489
  %v2605 = vmul.f32 %v2594, %v2599
  %v2606 = vadd.f32 %v2604, %v2605
  %v2607 = vtanh.pop %v2606
  %v2608 = vmul.f32 %v2603, %v2607
  %s2609 = scalar_lea.vmem %s4, 21
  %v2610 = vld [vmem:[%s2609] sm:$0x1]
  %v2612 = vlaneseq
  %v2613 = vshrl.u32 %v2612, 7
  %v2614 = vsub.s32 0, %v2613
  %v2615 = vrot.slane %v2610, %v2614
  %v2617 = vmul.f32 %v2608, %v2615
  %v2618 = vadd.f32 %v2501, %v2617
  %s2619 = scalar_lea.vmem %s0, 176
  %v2620 = vld [vmem:[%s2619] sm:$0xff]
  %2622 = vset.pattern.permute.xlu0 0
  %2623 = vperm.xlu0 %2622, %v2620
  %v2624 = vpop.permute.xlu0 %2623
  %v2626 = vmul.f32 %v2624, %v40
  %v2627 = vadd.f32 %v2626, %v47
  %v2629 = vsel %vm50, %v2608, 0
  %2631 = vmatprep.subr.mxu0 0.0
  %2632 = vmatpush1.msra.mxu0 %v27
  %2633 = vmatprep.subr.mxu0 0.0
  %2634 = vmatpush1.msra.mxu0 %v28
  %2635 = vmatprep.subr.mxu0 0.0
  %2636 = vmatpush1.msra.mxu0 %v56
  %2637 = vmatprep.subr.mxu0 0.0
  %2638 = vmatpush1.msra.mxu0 0.0
  %2639 = vmatprep.subr.mxu0 0.0
  %2640 = vmatpush1.msra.mxu0 0.0
  %2641 = vmatprep.subr.mxu0 0.0
  %2642 = vmatpush1.msra.mxu0 0.0
  %2643 = vmatprep.subr.mxu0 0.0
  %2644 = vmatpush1.msra.mxu0 0.0
  %2645 = vmatprep.subr.mxu0 0.0
  %2646 = vmatpush1.msra.mxu0 0.0
  %2647 = vmatprep.subr.mxu0 0.0
  %2648 = vmatpush1.msra.mxu0 0.0
  %2649 = vmatprep.subr.mxu0 0.0
  %2650 = vmatpush1.msra.mxu0 0.0
  %2651 = vmatprep.subr.mxu0 0.0
  %2652 = vmatpush1.msra.mxu0 0.0
  %2653 = vmatprep.subr.mxu0 0.0
  %2654 = vmatpush1.msra.mxu0 0.0
  %2655 = vmatprep.subr.mxu0 0.0
  %2656 = vmatpush1.msra.mxu0 0.0
  %2657 = vmatprep.subr.mxu0 0.0
  %2658 = vmatpush1.msra.mxu0 0.0
  %2659 = vmatprep.subr.mxu0 0.0
  %2660 = vmatpush1.msra.mxu0 0.0
  %2661 = vmatprep.subr.mxu0 0.0
  %2662 = vmatpush1.msra.mxu0 0.0
  %2663 = vmatprep.subr.mxu0 0.0
  %2664 = vmatpush1.msra.mxu0 0.0
  %2665 = vmatprep.subr.mxu0 0.0
  %2666 = vmatpush1.msra.mxu0 0.0
  %2667 = vmatprep.subr.mxu0 0.0
  %2668 = vmatpush1.msra.mxu0 0.0
  %2669 = vmatprep.subr.mxu0 0.0
  %2670 = vmatpush1.msra.mxu0 0.0
  %2671 = vmatprep.subr.mxu0 0.0
  %2672 = vmatpush1.msra.mxu0 0.0
  %2673 = vmatprep.subr.mxu0 0.0
  %2674 = vmatpush1.msra.mxu0 0.0
  %2675 = vmatprep.subr.mxu0 0.0
  %2676 = vmatpush1.msra.mxu0 0.0
  %2677 = vmatprep.subr.mxu0 0.0
  %2678 = vmatpush1.msra.mxu0 0.0
  %2679 = vmatprep.subr.mxu0 0.0
  %2680 = vmatpush1.msra.mxu0 0.0
  %2681 = vmatprep.subr.mxu0 0.0
  %2682 = vmatpush1.msra.mxu0 0.0
  %2683 = vmatprep.subr.mxu0 0.0
  %2684 = vmatpush1.msra.mxu0 0.0
  %2685 = vmatprep.subr.mxu0 0.0
  %2686 = vmatpush1.msra.mxu0 0.0
  %2687 = vmatprep.subr.mxu0 0.0
  %2688 = vmatpush1.msra.mxu0 0.0
  %2689 = vmatprep.subr.mxu0 0.0
  %2690 = vmatpush1.msra.mxu0 0.0
  %2691 = vmatprep.subr.mxu0 0.0
  %2692 = vmatpush1.msra.mxu0 0.0
  %2693 = vmatprep.subr.mxu0 0.0
  %2694 = vmatpush1.msra.mxu0 0.0
  %2695 = vmatprep.mubr.f32.mxu0 0.0
  %2696 = vmatmul.mubr.f32.gmra.mrb[0].mxu0 %v2629
  %v2697 = vpop.f32.mrb[0].mxu0
  %v2698 = vadd.f32 0.0, %v2697
  %v2699 = vpop.f32.mrb[0].mxu0
  %2700 = vdwg.mxu0
  %v2701 = vadd.f32 %v2627, %v2698
  %2702 = vrot.lane.b32.xlu0 %v2701, 110
  %v2703 = vpop.permute.xlu0 %2702
  %2704 = vrot.lane.b32.xlu0 %v2701, 92
  %v2705 = vpop.permute.xlu0 %2704
  %2706 = vrot.lane.b32.xlu0 %v2701, 74
  %v2707 = vpop.permute.xlu0 %2706
  %v2708 = vmul.f32 %v2701, 0.5
  %v2709 = vtanh.pop %v2708
  %v2710 = vmul.f32 %v2709, 0.5
  %v2711 = vadd.f32 %v2710, 0.5
  %v2712 = vmul.f32 %v2703, 0.5
  %v2713 = vtanh.pop %v2712
  %v2714 = vmul.f32 %v2713, 0.5
  %v2715 = vadd.f32 %v2714, 0.5
  %v2716 = vtanh.pop %v2705
  %v2717 = vmul.f32 %v2707, 0.5
  %v2718 = vtanh.pop %v2717
  %v2719 = vmul.f32 %v2718, 0.5
  %v2720 = vadd.f32 %v2719, 0.5
  %v2721 = vmul.f32 %v2715, %v2606
  %v2722 = vmul.f32 %v2711, %v2716
  %v2723 = vadd.f32 %v2721, %v2722
  %v2724 = vtanh.pop %v2723
  %v2725 = vmul.f32 %v2720, %v2724
  %s2726 = scalar_lea.vmem %s4, 22
  %v2727 = vld [vmem:[%s2726] sm:$0x1]
  %v2729 = vlaneseq
  %v2730 = vshrl.u32 %v2729, 7
  %v2731 = vsub.s32 0, %v2730
  %v2732 = vrot.slane %v2727, %v2731
  %v2734 = vmul.f32 %v2725, %v2732
  %v2735 = vadd.f32 %v2618, %v2734
  %s2736 = scalar_lea.vmem %s0, 184
  %v2737 = vld [vmem:[%s2736] sm:$0xff]
  %2739 = vset.pattern.permute.xlu0 0
  %2740 = vperm.xlu0 %2739, %v2737
  %v2741 = vpop.permute.xlu0 %2740
  %v2743 = vmul.f32 %v2741, %v40
  %v2744 = vadd.f32 %v2743, %v47
  %v2746 = vsel %vm50, %v2725, 0
  %2748 = vmatprep.subr.mxu0 0.0
  %2749 = vmatpush1.msra.mxu0 %v27
  %2750 = vmatprep.subr.mxu0 0.0
  %2751 = vmatpush1.msra.mxu0 %v28
  %2752 = vmatprep.subr.mxu0 0.0
  %2753 = vmatpush1.msra.mxu0 %v56
  %2754 = vmatprep.subr.mxu0 0.0
  %2755 = vmatpush1.msra.mxu0 0.0
  %2756 = vmatprep.subr.mxu0 0.0
  %2757 = vmatpush1.msra.mxu0 0.0
  %2758 = vmatprep.subr.mxu0 0.0
  %2759 = vmatpush1.msra.mxu0 0.0
  %2760 = vmatprep.subr.mxu0 0.0
  %2761 = vmatpush1.msra.mxu0 0.0
  %2762 = vmatprep.subr.mxu0 0.0
  %2763 = vmatpush1.msra.mxu0 0.0
  %2764 = vmatprep.subr.mxu0 0.0
  %2765 = vmatpush1.msra.mxu0 0.0
  %2766 = vmatprep.subr.mxu0 0.0
  %2767 = vmatpush1.msra.mxu0 0.0
  %2768 = vmatprep.subr.mxu0 0.0
  %2769 = vmatpush1.msra.mxu0 0.0
  %2770 = vmatprep.subr.mxu0 0.0
  %2771 = vmatpush1.msra.mxu0 0.0
  %2772 = vmatprep.subr.mxu0 0.0
  %2773 = vmatpush1.msra.mxu0 0.0
  %2774 = vmatprep.subr.mxu0 0.0
  %2775 = vmatpush1.msra.mxu0 0.0
  %2776 = vmatprep.subr.mxu0 0.0
  %2777 = vmatpush1.msra.mxu0 0.0
  %2778 = vmatprep.subr.mxu0 0.0
  %2779 = vmatpush1.msra.mxu0 0.0
  %2780 = vmatprep.subr.mxu0 0.0
  %2781 = vmatpush1.msra.mxu0 0.0
  %2782 = vmatprep.subr.mxu0 0.0
  %2783 = vmatpush1.msra.mxu0 0.0
  %2784 = vmatprep.subr.mxu0 0.0
  %2785 = vmatpush1.msra.mxu0 0.0
  %2786 = vmatprep.subr.mxu0 0.0
  %2787 = vmatpush1.msra.mxu0 0.0
  %2788 = vmatprep.subr.mxu0 0.0
  %2789 = vmatpush1.msra.mxu0 0.0
  %2790 = vmatprep.subr.mxu0 0.0
  %2791 = vmatpush1.msra.mxu0 0.0
  %2792 = vmatprep.subr.mxu0 0.0
  %2793 = vmatpush1.msra.mxu0 0.0
  %2794 = vmatprep.subr.mxu0 0.0
  %2795 = vmatpush1.msra.mxu0 0.0
  %2796 = vmatprep.subr.mxu0 0.0
  %2797 = vmatpush1.msra.mxu0 0.0
  %2798 = vmatprep.subr.mxu0 0.0
  %2799 = vmatpush1.msra.mxu0 0.0
  %2800 = vmatprep.subr.mxu0 0.0
  %2801 = vmatpush1.msra.mxu0 0.0
  %2802 = vmatprep.subr.mxu0 0.0
  %2803 = vmatpush1.msra.mxu0 0.0
  %2804 = vmatprep.subr.mxu0 0.0
  %2805 = vmatpush1.msra.mxu0 0.0
  %2806 = vmatprep.subr.mxu0 0.0
  %2807 = vmatpush1.msra.mxu0 0.0
  %2808 = vmatprep.subr.mxu0 0.0
  %2809 = vmatpush1.msra.mxu0 0.0
  %2810 = vmatprep.subr.mxu0 0.0
  %2811 = vmatpush1.msra.mxu0 0.0
  %2812 = vmatprep.mubr.f32.mxu0 0.0
  %2813 = vmatmul.mubr.f32.gmra.mrb[0].mxu0 %v2746
  %v2814 = vpop.f32.mrb[0].mxu0
  %v2815 = vadd.f32 0.0, %v2814
  %v2816 = vpop.f32.mrb[0].mxu0
  %2817 = vdwg.mxu0
  %v2818 = vadd.f32 %v2744, %v2815
  %2819 = vrot.lane.b32.xlu0 %v2818, 110
  %v2820 = vpop.permute.xlu0 %2819
  %2821 = vrot.lane.b32.xlu0 %v2818, 92
  %v2822 = vpop.permute.xlu0 %2821
  %2823 = vrot.lane.b32.xlu0 %v2818, 74
  %v2824 = vpop.permute.xlu0 %2823
  %v2825 = vmul.f32 %v2818, 0.5
  %v2826 = vtanh.pop %v2825
  %v2827 = vmul.f32 %v2826, 0.5
  %v2828 = vadd.f32 %v2827, 0.5
  %v2829 = vmul.f32 %v2820, 0.5
  %v2830 = vtanh.pop %v2829
  %v2831 = vmul.f32 %v2830, 0.5
  %v2832 = vadd.f32 %v2831, 0.5
  %v2833 = vtanh.pop %v2822
  %v2834 = vmul.f32 %v2824, 0.5
  %v2835 = vtanh.pop %v2834
  %v2836 = vmul.f32 %v2835, 0.5
  %v2837 = vadd.f32 %v2836, 0.5
  %v2838 = vmul.f32 %v2832, %v2723
  %v2839 = vmul.f32 %v2828, %v2833
  %v2840 = vadd.f32 %v2838, %v2839
  %v2841 = vtanh.pop %v2840
  %v2842 = vmul.f32 %v2837, %v2841
  %s2843 = scalar_lea.vmem %s4, 23
  %v2844 = vld [vmem:[%s2843] sm:$0x1]
  %v2846 = vlaneseq
  %v2847 = vshrl.u32 %v2846, 7
  %v2848 = vsub.s32 0, %v2847
  %v2849 = vrot.slane %v2844, %v2848
  %v2851 = vmul.f32 %v2842, %v2849
  %v2852 = vadd.f32 %v2735, %v2851
  %s2853 = scalar_lea.vmem %s0, 192
  %v2854 = vld [vmem:[%s2853] sm:$0xff]
  %2856 = vset.pattern.permute.xlu0 0
  %2857 = vperm.xlu0 %2856, %v2854
  %v2858 = vpop.permute.xlu0 %2857
  %v2860 = vmul.f32 %v2858, %v40
  %v2861 = vadd.f32 %v2860, %v47
  %v2863 = vsel %vm50, %v2842, 0
  %2865 = vmatprep.subr.mxu0 0.0
  %2866 = vmatpush1.msra.mxu0 %v27
  %2867 = vmatprep.subr.mxu0 0.0
  %2868 = vmatpush1.msra.mxu0 %v28
  %2869 = vmatprep.subr.mxu0 0.0
  %2870 = vmatpush1.msra.mxu0 %v56
  %2871 = vmatprep.subr.mxu0 0.0
  %2872 = vmatpush1.msra.mxu0 0.0
  %2873 = vmatprep.subr.mxu0 0.0
  %2874 = vmatpush1.msra.mxu0 0.0
  %2875 = vmatprep.subr.mxu0 0.0
  %2876 = vmatpush1.msra.mxu0 0.0
  %2877 = vmatprep.subr.mxu0 0.0
  %2878 = vmatpush1.msra.mxu0 0.0
  %2879 = vmatprep.subr.mxu0 0.0
  %2880 = vmatpush1.msra.mxu0 0.0
  %2881 = vmatprep.subr.mxu0 0.0
  %2882 = vmatpush1.msra.mxu0 0.0
  %2883 = vmatprep.subr.mxu0 0.0
  %2884 = vmatpush1.msra.mxu0 0.0
  %2885 = vmatprep.subr.mxu0 0.0
  %2886 = vmatpush1.msra.mxu0 0.0
  %2887 = vmatprep.subr.mxu0 0.0
  %2888 = vmatpush1.msra.mxu0 0.0
  %2889 = vmatprep.subr.mxu0 0.0
  %2890 = vmatpush1.msra.mxu0 0.0
  %2891 = vmatprep.subr.mxu0 0.0
  %2892 = vmatpush1.msra.mxu0 0.0
  %2893 = vmatprep.subr.mxu0 0.0
  %2894 = vmatpush1.msra.mxu0 0.0
  %2895 = vmatprep.subr.mxu0 0.0
  %2896 = vmatpush1.msra.mxu0 0.0
  %2897 = vmatprep.subr.mxu0 0.0
  %2898 = vmatpush1.msra.mxu0 0.0
  %2899 = vmatprep.subr.mxu0 0.0
  %2900 = vmatpush1.msra.mxu0 0.0
  %2901 = vmatprep.subr.mxu0 0.0
  %2902 = vmatpush1.msra.mxu0 0.0
  %2903 = vmatprep.subr.mxu0 0.0
  %2904 = vmatpush1.msra.mxu0 0.0
  %2905 = vmatprep.subr.mxu0 0.0
  %2906 = vmatpush1.msra.mxu0 0.0
  %2907 = vmatprep.subr.mxu0 0.0
  %2908 = vmatpush1.msra.mxu0 0.0
  %2909 = vmatprep.subr.mxu0 0.0
  %2910 = vmatpush1.msra.mxu0 0.0
  %2911 = vmatprep.subr.mxu0 0.0
  %2912 = vmatpush1.msra.mxu0 0.0
  %2913 = vmatprep.subr.mxu0 0.0
  %2914 = vmatpush1.msra.mxu0 0.0
  %2915 = vmatprep.subr.mxu0 0.0
  %2916 = vmatpush1.msra.mxu0 0.0
  %2917 = vmatprep.subr.mxu0 0.0
  %2918 = vmatpush1.msra.mxu0 0.0
  %2919 = vmatprep.subr.mxu0 0.0
  %2920 = vmatpush1.msra.mxu0 0.0
  %2921 = vmatprep.subr.mxu0 0.0
  %2922 = vmatpush1.msra.mxu0 0.0
  %2923 = vmatprep.subr.mxu0 0.0
  %2924 = vmatpush1.msra.mxu0 0.0
  %2925 = vmatprep.subr.mxu0 0.0
  %2926 = vmatpush1.msra.mxu0 0.0
  %2927 = vmatprep.subr.mxu0 0.0
  %2928 = vmatpush1.msra.mxu0 0.0
  %2929 = vmatprep.mubr.f32.mxu0 0.0
  %2930 = vmatmul.mubr.f32.gmra.mrb[0].mxu0 %v2863
  %v2931 = vpop.f32.mrb[0].mxu0
  %v2932 = vadd.f32 0.0, %v2931
  %v2933 = vpop.f32.mrb[0].mxu0
  %2934 = vdwg.mxu0
  %v2935 = vadd.f32 %v2861, %v2932
  %2936 = vrot.lane.b32.xlu0 %v2935, 110
  %v2937 = vpop.permute.xlu0 %2936
  %2938 = vrot.lane.b32.xlu0 %v2935, 92
  %v2939 = vpop.permute.xlu0 %2938
  %2940 = vrot.lane.b32.xlu0 %v2935, 74
  %v2941 = vpop.permute.xlu0 %2940
  %v2942 = vmul.f32 %v2935, 0.5
  %v2943 = vtanh.pop %v2942
  %v2944 = vmul.f32 %v2943, 0.5
  %v2945 = vadd.f32 %v2944, 0.5
  %v2946 = vmul.f32 %v2937, 0.5
  %v2947 = vtanh.pop %v2946
  %v2948 = vmul.f32 %v2947, 0.5
  %v2949 = vadd.f32 %v2948, 0.5
  %v2950 = vtanh.pop %v2939
  %v2951 = vmul.f32 %v2941, 0.5
  %v2952 = vtanh.pop %v2951
  %v2953 = vmul.f32 %v2952, 0.5
  %v2954 = vadd.f32 %v2953, 0.5
  %v2955 = vmul.f32 %v2949, %v2840
  %v2956 = vmul.f32 %v2945, %v2950
  %v2957 = vadd.f32 %v2955, %v2956
  %v2958 = vtanh.pop %v2957
  %v2959 = vmul.f32 %v2954, %v2958
  %s2960 = scalar_lea.vmem %s4, 24
  %v2961 = vld [vmem:[%s2960] sm:$0x1]
  %v2963 = vlaneseq
  %v2964 = vshrl.u32 %v2963, 7
  %v2965 = vsub.s32 0, %v2964
  %v2966 = vrot.slane %v2961, %v2965
  %v2968 = vmul.f32 %v2959, %v2966
  %v2969 = vadd.f32 %v2852, %v2968
  %s2970 = scalar_lea.vmem %s0, 200
  %v2971 = vld [vmem:[%s2970] sm:$0xff]
  %2973 = vset.pattern.permute.xlu0 0
  %2974 = vperm.xlu0 %2973, %v2971
  %v2975 = vpop.permute.xlu0 %2974
  %v2977 = vmul.f32 %v2975, %v40
  %v2978 = vadd.f32 %v2977, %v47
  %v2980 = vsel %vm50, %v2959, 0
  %2982 = vmatprep.subr.mxu0 0.0
  %2983 = vmatpush1.msra.mxu0 %v27
  %2984 = vmatprep.subr.mxu0 0.0
  %2985 = vmatpush1.msra.mxu0 %v28
  %2986 = vmatprep.subr.mxu0 0.0
  %2987 = vmatpush1.msra.mxu0 %v56
  %2988 = vmatprep.subr.mxu0 0.0
  %2989 = vmatpush1.msra.mxu0 0.0
  %2990 = vmatprep.subr.mxu0 0.0
  %2991 = vmatpush1.msra.mxu0 0.0
  %2992 = vmatprep.subr.mxu0 0.0
  %2993 = vmatpush1.msra.mxu0 0.0
  %2994 = vmatprep.subr.mxu0 0.0
  %2995 = vmatpush1.msra.mxu0 0.0
  %2996 = vmatprep.subr.mxu0 0.0
  %2997 = vmatpush1.msra.mxu0 0.0
  %2998 = vmatprep.subr.mxu0 0.0
  %2999 = vmatpush1.msra.mxu0 0.0
  %3000 = vmatprep.subr.mxu0 0.0
  %3001 = vmatpush1.msra.mxu0 0.0
  %3002 = vmatprep.subr.mxu0 0.0
  %3003 = vmatpush1.msra.mxu0 0.0
  %3004 = vmatprep.subr.mxu0 0.0
  %3005 = vmatpush1.msra.mxu0 0.0
  %3006 = vmatprep.subr.mxu0 0.0
  %3007 = vmatpush1.msra.mxu0 0.0
  %3008 = vmatprep.subr.mxu0 0.0
  %3009 = vmatpush1.msra.mxu0 0.0
  %3010 = vmatprep.subr.mxu0 0.0
  %3011 = vmatpush1.msra.mxu0 0.0
  %3012 = vmatprep.subr.mxu0 0.0
  %3013 = vmatpush1.msra.mxu0 0.0
  %3014 = vmatprep.subr.mxu0 0.0
  %3015 = vmatpush1.msra.mxu0 0.0
  %3016 = vmatprep.subr.mxu0 0.0
  %3017 = vmatpush1.msra.mxu0 0.0
  %3018 = vmatprep.subr.mxu0 0.0
  %3019 = vmatpush1.msra.mxu0 0.0
  %3020 = vmatprep.subr.mxu0 0.0
  %3021 = vmatpush1.msra.mxu0 0.0
  %3022 = vmatprep.subr.mxu0 0.0
  %3023 = vmatpush1.msra.mxu0 0.0
  %3024 = vmatprep.subr.mxu0 0.0
  %3025 = vmatpush1.msra.mxu0 0.0
  %3026 = vmatprep.subr.mxu0 0.0
  %3027 = vmatpush1.msra.mxu0 0.0
  %3028 = vmatprep.subr.mxu0 0.0
  %3029 = vmatpush1.msra.mxu0 0.0
  %3030 = vmatprep.subr.mxu0 0.0
  %3031 = vmatpush1.msra.mxu0 0.0
  %3032 = vmatprep.subr.mxu0 0.0
  %3033 = vmatpush1.msra.mxu0 0.0
  %3034 = vmatprep.subr.mxu0 0.0
  %3035 = vmatpush1.msra.mxu0 0.0
  %3036 = vmatprep.subr.mxu0 0.0
  %3037 = vmatpush1.msra.mxu0 0.0
  %3038 = vmatprep.subr.mxu0 0.0
  %3039 = vmatpush1.msra.mxu0 0.0
  %3040 = vmatprep.subr.mxu0 0.0
  %3041 = vmatpush1.msra.mxu0 0.0
  %3042 = vmatprep.subr.mxu0 0.0
  %3043 = vmatpush1.msra.mxu0 0.0
  %3044 = vmatprep.subr.mxu0 0.0
  %3045 = vmatpush1.msra.mxu0 0.0
  %3046 = vmatprep.mubr.f32.mxu0 0.0
  %3047 = vmatmul.mubr.f32.gmra.mrb[0].mxu0 %v2980
  %v3048 = vpop.f32.mrb[0].mxu0
  %v3049 = vadd.f32 0.0, %v3048
  %v3050 = vpop.f32.mrb[0].mxu0
  %3051 = vdwg.mxu0
  %v3052 = vadd.f32 %v2978, %v3049
  %3053 = vrot.lane.b32.xlu0 %v3052, 110
  %v3054 = vpop.permute.xlu0 %3053
  %3055 = vrot.lane.b32.xlu0 %v3052, 92
  %v3056 = vpop.permute.xlu0 %3055
  %3057 = vrot.lane.b32.xlu0 %v3052, 74
  %v3058 = vpop.permute.xlu0 %3057
  %v3059 = vmul.f32 %v3052, 0.5
  %v3060 = vtanh.pop %v3059
  %v3061 = vmul.f32 %v3060, 0.5
  %v3062 = vadd.f32 %v3061, 0.5
  %v3063 = vmul.f32 %v3054, 0.5
  %v3064 = vtanh.pop %v3063
  %v3065 = vmul.f32 %v3064, 0.5
  %v3066 = vadd.f32 %v3065, 0.5
  %v3067 = vtanh.pop %v3056
  %v3068 = vmul.f32 %v3058, 0.5
  %v3069 = vtanh.pop %v3068
  %v3070 = vmul.f32 %v3069, 0.5
  %v3071 = vadd.f32 %v3070, 0.5
  %v3072 = vmul.f32 %v3066, %v2957
  %v3073 = vmul.f32 %v3062, %v3067
  %v3074 = vadd.f32 %v3072, %v3073
  %v3075 = vtanh.pop %v3074
  %v3076 = vmul.f32 %v3071, %v3075
  %s3077 = scalar_lea.vmem %s4, 25
  %v3078 = vld [vmem:[%s3077] sm:$0x1]
  %v3080 = vlaneseq
  %v3081 = vshrl.u32 %v3080, 7
  %v3082 = vsub.s32 0, %v3081
  %v3083 = vrot.slane %v3078, %v3082
  %v3085 = vmul.f32 %v3076, %v3083
  %v3086 = vadd.f32 %v2969, %v3085
  %s3087 = scalar_lea.vmem %s0, 208
  %v3088 = vld [vmem:[%s3087] sm:$0xff]
  %3090 = vset.pattern.permute.xlu0 0
  %3091 = vperm.xlu0 %3090, %v3088
  %v3092 = vpop.permute.xlu0 %3091
  %v3094 = vmul.f32 %v3092, %v40
  %v3095 = vadd.f32 %v3094, %v47
  %v3097 = vsel %vm50, %v3076, 0
  %3099 = vmatprep.subr.mxu0 0.0
  %3100 = vmatpush1.msra.mxu0 %v27
  %3101 = vmatprep.subr.mxu0 0.0
  %3102 = vmatpush1.msra.mxu0 %v28
  %3103 = vmatprep.subr.mxu0 0.0
  %3104 = vmatpush1.msra.mxu0 %v56
  %3105 = vmatprep.subr.mxu0 0.0
  %3106 = vmatpush1.msra.mxu0 0.0
  %3107 = vmatprep.subr.mxu0 0.0
  %3108 = vmatpush1.msra.mxu0 0.0
  %3109 = vmatprep.subr.mxu0 0.0
  %3110 = vmatpush1.msra.mxu0 0.0
  %3111 = vmatprep.subr.mxu0 0.0
  %3112 = vmatpush1.msra.mxu0 0.0
  %3113 = vmatprep.subr.mxu0 0.0
  %3114 = vmatpush1.msra.mxu0 0.0
  %3115 = vmatprep.subr.mxu0 0.0
  %3116 = vmatpush1.msra.mxu0 0.0
  %3117 = vmatprep.subr.mxu0 0.0
  %3118 = vmatpush1.msra.mxu0 0.0
  %3119 = vmatprep.subr.mxu0 0.0
  %3120 = vmatpush1.msra.mxu0 0.0
  %3121 = vmatprep.subr.mxu0 0.0
  %3122 = vmatpush1.msra.mxu0 0.0
  %3123 = vmatprep.subr.mxu0 0.0
  %3124 = vmatpush1.msra.mxu0 0.0
  %3125 = vmatprep.subr.mxu0 0.0
  %3126 = vmatpush1.msra.mxu0 0.0
  %3127 = vmatprep.subr.mxu0 0.0
  %3128 = vmatpush1.msra.mxu0 0.0
  %3129 = vmatprep.subr.mxu0 0.0
  %3130 = vmatpush1.msra.mxu0 0.0
  %3131 = vmatprep.subr.mxu0 0.0
  %3132 = vmatpush1.msra.mxu0 0.0
  %3133 = vmatprep.subr.mxu0 0.0
  %3134 = vmatpush1.msra.mxu0 0.0
  %3135 = vmatprep.subr.mxu0 0.0
  %3136 = vmatpush1.msra.mxu0 0.0
  %3137 = vmatprep.subr.mxu0 0.0
  %3138 = vmatpush1.msra.mxu0 0.0
  %3139 = vmatprep.subr.mxu0 0.0
  %3140 = vmatpush1.msra.mxu0 0.0
  %3141 = vmatprep.subr.mxu0 0.0
  %3142 = vmatpush1.msra.mxu0 0.0
  %3143 = vmatprep.subr.mxu0 0.0
  %3144 = vmatpush1.msra.mxu0 0.0
  %3145 = vmatprep.subr.mxu0 0.0
  %3146 = vmatpush1.msra.mxu0 0.0
  %3147 = vmatprep.subr.mxu0 0.0
  %3148 = vmatpush1.msra.mxu0 0.0
  %3149 = vmatprep.subr.mxu0 0.0
  %3150 = vmatpush1.msra.mxu0 0.0
  %3151 = vmatprep.subr.mxu0 0.0
  %3152 = vmatpush1.msra.mxu0 0.0
  %3153 = vmatprep.subr.mxu0 0.0
  %3154 = vmatpush1.msra.mxu0 0.0
  %3155 = vmatprep.subr.mxu0 0.0
  %3156 = vmatpush1.msra.mxu0 0.0
  %3157 = vmatprep.subr.mxu0 0.0
  %3158 = vmatpush1.msra.mxu0 0.0
  %3159 = vmatprep.subr.mxu0 0.0
  %3160 = vmatpush1.msra.mxu0 0.0
  %3161 = vmatprep.subr.mxu0 0.0
  %3162 = vmatpush1.msra.mxu0 0.0
  %3163 = vmatprep.mubr.f32.mxu0 0.0
  %3164 = vmatmul.mubr.f32.gmra.mrb[0].mxu0 %v3097
  %v3165 = vpop.f32.mrb[0].mxu0
  %v3166 = vadd.f32 0.0, %v3165
  %v3167 = vpop.f32.mrb[0].mxu0
  %3168 = vdwg.mxu0
  %v3169 = vadd.f32 %v3095, %v3166
  %3170 = vrot.lane.b32.xlu0 %v3169, 110
  %v3171 = vpop.permute.xlu0 %3170
  %3172 = vrot.lane.b32.xlu0 %v3169, 92
  %v3173 = vpop.permute.xlu0 %3172
  %3174 = vrot.lane.b32.xlu0 %v3169, 74
  %v3175 = vpop.permute.xlu0 %3174
  %v3176 = vmul.f32 %v3169, 0.5
  %v3177 = vtanh.pop %v3176
  %v3178 = vmul.f32 %v3177, 0.5
  %v3179 = vadd.f32 %v3178, 0.5
  %v3180 = vmul.f32 %v3171, 0.5
  %v3181 = vtanh.pop %v3180
  %v3182 = vmul.f32 %v3181, 0.5
  %v3183 = vadd.f32 %v3182, 0.5
  %v3184 = vtanh.pop %v3173
  %v3185 = vmul.f32 %v3175, 0.5
  %v3186 = vtanh.pop %v3185
  %v3187 = vmul.f32 %v3186, 0.5
  %v3188 = vadd.f32 %v3187, 0.5
  %v3189 = vmul.f32 %v3183, %v3074
  %v3190 = vmul.f32 %v3179, %v3184
  %v3191 = vadd.f32 %v3189, %v3190
  %v3192 = vtanh.pop %v3191
  %v3193 = vmul.f32 %v3188, %v3192
  %s3194 = scalar_lea.vmem %s4, 26
  %v3195 = vld [vmem:[%s3194] sm:$0x1]
  %v3197 = vlaneseq
  %v3198 = vshrl.u32 %v3197, 7
  %v3199 = vsub.s32 0, %v3198
  %v3200 = vrot.slane %v3195, %v3199
  %v3202 = vmul.f32 %v3193, %v3200
  %v3203 = vadd.f32 %v3086, %v3202
  %s3204 = scalar_lea.vmem %s0, 216
  %v3205 = vld [vmem:[%s3204] sm:$0xff]
  %3207 = vset.pattern.permute.xlu0 0
  %3208 = vperm.xlu0 %3207, %v3205
  %v3209 = vpop.permute.xlu0 %3208
  %v3211 = vmul.f32 %v3209, %v40
  %v3212 = vadd.f32 %v3211, %v47
  %v3214 = vsel %vm50, %v3193, 0
  %3216 = vmatprep.subr.mxu0 0.0
  %3217 = vmatpush1.msra.mxu0 %v27
  %3218 = vmatprep.subr.mxu0 0.0
  %3219 = vmatpush1.msra.mxu0 %v28
  %3220 = vmatprep.subr.mxu0 0.0
  %3221 = vmatpush1.msra.mxu0 %v56
  %3222 = vmatprep.subr.mxu0 0.0
  %3223 = vmatpush1.msra.mxu0 0.0
  %3224 = vmatprep.subr.mxu0 0.0
  %3225 = vmatpush1.msra.mxu0 0.0
  %3226 = vmatprep.subr.mxu0 0.0
  %3227 = vmatpush1.msra.mxu0 0.0
  %3228 = vmatprep.subr.mxu0 0.0
  %3229 = vmatpush1.msra.mxu0 0.0
  %3230 = vmatprep.subr.mxu0 0.0
  %3231 = vmatpush1.msra.mxu0 0.0
  %3232 = vmatprep.subr.mxu0 0.0
  %3233 = vmatpush1.msra.mxu0 0.0
  %3234 = vmatprep.subr.mxu0 0.0
  %3235 = vmatpush1.msra.mxu0 0.0
  %3236 = vmatprep.subr.mxu0 0.0
  %3237 = vmatpush1.msra.mxu0 0.0
  %3238 = vmatprep.subr.mxu0 0.0
  %3239 = vmatpush1.msra.mxu0 0.0
  %3240 = vmatprep.subr.mxu0 0.0
  %3241 = vmatpush1.msra.mxu0 0.0
  %3242 = vmatprep.subr.mxu0 0.0
  %3243 = vmatpush1.msra.mxu0 0.0
  %3244 = vmatprep.subr.mxu0 0.0
  %3245 = vmatpush1.msra.mxu0 0.0
  %3246 = vmatprep.subr.mxu0 0.0
  %3247 = vmatpush1.msra.mxu0 0.0
  %3248 = vmatprep.subr.mxu0 0.0
  %3249 = vmatpush1.msra.mxu0 0.0
  %3250 = vmatprep.subr.mxu0 0.0
  %3251 = vmatpush1.msra.mxu0 0.0
  %3252 = vmatprep.subr.mxu0 0.0
  %3253 = vmatpush1.msra.mxu0 0.0
  %3254 = vmatprep.subr.mxu0 0.0
  %3255 = vmatpush1.msra.mxu0 0.0
  %3256 = vmatprep.subr.mxu0 0.0
  %3257 = vmatpush1.msra.mxu0 0.0
  %3258 = vmatprep.subr.mxu0 0.0
  %3259 = vmatpush1.msra.mxu0 0.0
  %3260 = vmatprep.subr.mxu0 0.0
  %3261 = vmatpush1.msra.mxu0 0.0
  %3262 = vmatprep.subr.mxu0 0.0
  %3263 = vmatpush1.msra.mxu0 0.0
  %3264 = vmatprep.subr.mxu0 0.0
  %3265 = vmatpush1.msra.mxu0 0.0
  %3266 = vmatprep.subr.mxu0 0.0
  %3267 = vmatpush1.msra.mxu0 0.0
  %3268 = vmatprep.subr.mxu0 0.0
  %3269 = vmatpush1.msra.mxu0 0.0
  %3270 = vmatprep.subr.mxu0 0.0
  %3271 = vmatpush1.msra.mxu0 0.0
  %3272 = vmatprep.subr.mxu0 0.0
  %3273 = vmatpush1.msra.mxu0 0.0
  %3274 = vmatprep.subr.mxu0 0.0
  %3275 = vmatpush1.msra.mxu0 0.0
  %3276 = vmatprep.subr.mxu0 0.0
  %3277 = vmatpush1.msra.mxu0 0.0
  %3278 = vmatprep.subr.mxu0 0.0
  %3279 = vmatpush1.msra.mxu0 0.0
  %3280 = vmatprep.mubr.f32.mxu0 0.0
  %3281 = vmatmul.mubr.f32.gmra.mrb[0].mxu0 %v3214
  %v3282 = vpop.f32.mrb[0].mxu0
  %v3283 = vadd.f32 0.0, %v3282
  %v3284 = vpop.f32.mrb[0].mxu0
  %3285 = vdwg.mxu0
  %v3286 = vadd.f32 %v3212, %v3283
  %3287 = vrot.lane.b32.xlu0 %v3286, 110
  %v3288 = vpop.permute.xlu0 %3287
  %3289 = vrot.lane.b32.xlu0 %v3286, 92
  %v3290 = vpop.permute.xlu0 %3289
  %3291 = vrot.lane.b32.xlu0 %v3286, 74
  %v3292 = vpop.permute.xlu0 %3291
  %v3293 = vmul.f32 %v3286, 0.5
  %v3294 = vtanh.pop %v3293
  %v3295 = vmul.f32 %v3294, 0.5
  %v3296 = vadd.f32 %v3295, 0.5
  %v3297 = vmul.f32 %v3288, 0.5
  %v3298 = vtanh.pop %v3297
  %v3299 = vmul.f32 %v3298, 0.5
  %v3300 = vadd.f32 %v3299, 0.5
  %v3301 = vtanh.pop %v3290
  %v3302 = vmul.f32 %v3292, 0.5
  %v3303 = vtanh.pop %v3302
  %v3304 = vmul.f32 %v3303, 0.5
  %v3305 = vadd.f32 %v3304, 0.5
  %v3306 = vmul.f32 %v3300, %v3191
  %v3307 = vmul.f32 %v3296, %v3301
  %v3308 = vadd.f32 %v3306, %v3307
  %v3309 = vtanh.pop %v3308
  %v3310 = vmul.f32 %v3305, %v3309
  %s3311 = scalar_lea.vmem %s4, 27
  %v3312 = vld [vmem:[%s3311] sm:$0x1]
  %v3314 = vlaneseq
  %v3315 = vshrl.u32 %v3314, 7
  %v3316 = vsub.s32 0, %v3315
  %v3317 = vrot.slane %v3312, %v3316
  %v3319 = vmul.f32 %v3310, %v3317
  %v3320 = vadd.f32 %v3203, %v3319
  %s3321 = scalar_lea.vmem %s0, 224
  %v3322 = vld [vmem:[%s3321] sm:$0xff]
  %3324 = vset.pattern.permute.xlu0 0
  %3325 = vperm.xlu0 %3324, %v3322
  %v3326 = vpop.permute.xlu0 %3325
  %v3328 = vmul.f32 %v3326, %v40
  %v3329 = vadd.f32 %v3328, %v47
  %v3331 = vsel %vm50, %v3310, 0
  %3333 = vmatprep.subr.mxu0 0.0
  %3334 = vmatpush1.msra.mxu0 %v27
  %3335 = vmatprep.subr.mxu0 0.0
  %3336 = vmatpush1.msra.mxu0 %v28
  %3337 = vmatprep.subr.mxu0 0.0
  %3338 = vmatpush1.msra.mxu0 %v56
  %3339 = vmatprep.subr.mxu0 0.0
  %3340 = vmatpush1.msra.mxu0 0.0
  %3341 = vmatprep.subr.mxu0 0.0
  %3342 = vmatpush1.msra.mxu0 0.0
  %3343 = vmatprep.subr.mxu0 0.0
  %3344 = vmatpush1.msra.mxu0 0.0
  %3345 = vmatprep.subr.mxu0 0.0
  %3346 = vmatpush1.msra.mxu0 0.0
  %3347 = vmatprep.subr.mxu0 0.0
  %3348 = vmatpush1.msra.mxu0 0.0
  %3349 = vmatprep.subr.mxu0 0.0
  %3350 = vmatpush1.msra.mxu0 0.0
  %3351 = vmatprep.subr.mxu0 0.0
  %3352 = vmatpush1.msra.mxu0 0.0
  %3353 = vmatprep.subr.mxu0 0.0
  %3354 = vmatpush1.msra.mxu0 0.0
  %3355 = vmatprep.subr.mxu0 0.0
  %3356 = vmatpush1.msra.mxu0 0.0
  %3357 = vmatprep.subr.mxu0 0.0
  %3358 = vmatpush1.msra.mxu0 0.0
  %3359 = vmatprep.subr.mxu0 0.0
  %3360 = vmatpush1.msra.mxu0 0.0
  %3361 = vmatprep.subr.mxu0 0.0
  %3362 = vmatpush1.msra.mxu0 0.0
  %3363 = vmatprep.subr.mxu0 0.0
  %3364 = vmatpush1.msra.mxu0 0.0
  %3365 = vmatprep.subr.mxu0 0.0
  %3366 = vmatpush1.msra.mxu0 0.0
  %3367 = vmatprep.subr.mxu0 0.0
  %3368 = vmatpush1.msra.mxu0 0.0
  %3369 = vmatprep.subr.mxu0 0.0
  %3370 = vmatpush1.msra.mxu0 0.0
  %3371 = vmatprep.subr.mxu0 0.0
  %3372 = vmatpush1.msra.mxu0 0.0
  %3373 = vmatprep.subr.mxu0 0.0
  %3374 = vmatpush1.msra.mxu0 0.0
  %3375 = vmatprep.subr.mxu0 0.0
  %3376 = vmatpush1.msra.mxu0 0.0
  %3377 = vmatprep.subr.mxu0 0.0
  %3378 = vmatpush1.msra.mxu0 0.0
  %3379 = vmatprep.subr.mxu0 0.0
  %3380 = vmatpush1.msra.mxu0 0.0
  %3381 = vmatprep.subr.mxu0 0.0
  %3382 = vmatpush1.msra.mxu0 0.0
  %3383 = vmatprep.subr.mxu0 0.0
  %3384 = vmatpush1.msra.mxu0 0.0
  %3385 = vmatprep.subr.mxu0 0.0
  %3386 = vmatpush1.msra.mxu0 0.0
  %3387 = vmatprep.subr.mxu0 0.0
  %3388 = vmatpush1.msra.mxu0 0.0
  %3389 = vmatprep.subr.mxu0 0.0
  %3390 = vmatpush1.msra.mxu0 0.0
  %3391 = vmatprep.subr.mxu0 0.0
  %3392 = vmatpush1.msra.mxu0 0.0
  %3393 = vmatprep.subr.mxu0 0.0
  %3394 = vmatpush1.msra.mxu0 0.0
  %3395 = vmatprep.subr.mxu0 0.0
  %3396 = vmatpush1.msra.mxu0 0.0
  %3397 = vmatprep.mubr.f32.mxu0 0.0
  %3398 = vmatmul.mubr.f32.gmra.mrb[0].mxu0 %v3331
  %v3399 = vpop.f32.mrb[0].mxu0
  %v3400 = vadd.f32 0.0, %v3399
  %v3401 = vpop.f32.mrb[0].mxu0
  %3402 = vdwg.mxu0
  %v3403 = vadd.f32 %v3329, %v3400
  %3404 = vrot.lane.b32.xlu0 %v3403, 110
  %v3405 = vpop.permute.xlu0 %3404
  %3406 = vrot.lane.b32.xlu0 %v3403, 92
  %v3407 = vpop.permute.xlu0 %3406
  %3408 = vrot.lane.b32.xlu0 %v3403, 74
  %v3409 = vpop.permute.xlu0 %3408
  %v3410 = vmul.f32 %v3403, 0.5
  %v3411 = vtanh.pop %v3410
  %v3412 = vmul.f32 %v3411, 0.5
  %v3413 = vadd.f32 %v3412, 0.5
  %v3414 = vmul.f32 %v3405, 0.5
  %v3415 = vtanh.pop %v3414
  %v3416 = vmul.f32 %v3415, 0.5
  %v3417 = vadd.f32 %v3416, 0.5
  %v3418 = vtanh.pop %v3407
  %v3419 = vmul.f32 %v3409, 0.5
  %v3420 = vtanh.pop %v3419
  %v3421 = vmul.f32 %v3420, 0.5
  %v3422 = vadd.f32 %v3421, 0.5
  %v3423 = vmul.f32 %v3417, %v3308
  %v3424 = vmul.f32 %v3413, %v3418
  %v3425 = vadd.f32 %v3423, %v3424
  %v3426 = vtanh.pop %v3425
  %v3427 = vmul.f32 %v3422, %v3426
  %s3428 = scalar_lea.vmem %s4, 28
  %v3429 = vld [vmem:[%s3428] sm:$0x1]
  %v3431 = vlaneseq
  %v3432 = vshrl.u32 %v3431, 7
  %v3433 = vsub.s32 0, %v3432
  %v3434 = vrot.slane %v3429, %v3433
  %v3436 = vmul.f32 %v3427, %v3434
  %v3437 = vadd.f32 %v3320, %v3436
  %s3438 = scalar_lea.vmem %s0, 232
  %v3439 = vld [vmem:[%s3438] sm:$0xff]
  %3441 = vset.pattern.permute.xlu0 0
  %3442 = vperm.xlu0 %3441, %v3439
  %v3443 = vpop.permute.xlu0 %3442
  %v3445 = vmul.f32 %v3443, %v40
  %v3446 = vadd.f32 %v3445, %v47
  %v3448 = vsel %vm50, %v3427, 0
  %3450 = vmatprep.subr.mxu0 0.0
  %3451 = vmatpush1.msra.mxu0 %v27
  %3452 = vmatprep.subr.mxu0 0.0
  %3453 = vmatpush1.msra.mxu0 %v28
  %3454 = vmatprep.subr.mxu0 0.0
  %3455 = vmatpush1.msra.mxu0 %v56
  %3456 = vmatprep.subr.mxu0 0.0
  %3457 = vmatpush1.msra.mxu0 0.0
  %3458 = vmatprep.subr.mxu0 0.0
  %3459 = vmatpush1.msra.mxu0 0.0
  %3460 = vmatprep.subr.mxu0 0.0
  %3461 = vmatpush1.msra.mxu0 0.0
  %3462 = vmatprep.subr.mxu0 0.0
  %3463 = vmatpush1.msra.mxu0 0.0
  %3464 = vmatprep.subr.mxu0 0.0
  %3465 = vmatpush1.msra.mxu0 0.0
  %3466 = vmatprep.subr.mxu0 0.0
  %3467 = vmatpush1.msra.mxu0 0.0
  %3468 = vmatprep.subr.mxu0 0.0
  %3469 = vmatpush1.msra.mxu0 0.0
  %3470 = vmatprep.subr.mxu0 0.0
  %3471 = vmatpush1.msra.mxu0 0.0
  %3472 = vmatprep.subr.mxu0 0.0
  %3473 = vmatpush1.msra.mxu0 0.0
  %3474 = vmatprep.subr.mxu0 0.0
  %3475 = vmatpush1.msra.mxu0 0.0
  %3476 = vmatprep.subr.mxu0 0.0
  %3477 = vmatpush1.msra.mxu0 0.0
  %3478 = vmatprep.subr.mxu0 0.0
  %3479 = vmatpush1.msra.mxu0 0.0
  %3480 = vmatprep.subr.mxu0 0.0
  %3481 = vmatpush1.msra.mxu0 0.0
  %3482 = vmatprep.subr.mxu0 0.0
  %3483 = vmatpush1.msra.mxu0 0.0
  %3484 = vmatprep.subr.mxu0 0.0
  %3485 = vmatpush1.msra.mxu0 0.0
  %3486 = vmatprep.subr.mxu0 0.0
  %3487 = vmatpush1.msra.mxu0 0.0
  %3488 = vmatprep.subr.mxu0 0.0
  %3489 = vmatpush1.msra.mxu0 0.0
  %3490 = vmatprep.subr.mxu0 0.0
  %3491 = vmatpush1.msra.mxu0 0.0
  %3492 = vmatprep.subr.mxu0 0.0
  %3493 = vmatpush1.msra.mxu0 0.0
  %3494 = vmatprep.subr.mxu0 0.0
  %3495 = vmatpush1.msra.mxu0 0.0
  %3496 = vmatprep.subr.mxu0 0.0
  %3497 = vmatpush1.msra.mxu0 0.0
  %3498 = vmatprep.subr.mxu0 0.0
  %3499 = vmatpush1.msra.mxu0 0.0
  %3500 = vmatprep.subr.mxu0 0.0
  %3501 = vmatpush1.msra.mxu0 0.0
  %3502 = vmatprep.subr.mxu0 0.0
  %3503 = vmatpush1.msra.mxu0 0.0
  %3504 = vmatprep.subr.mxu0 0.0
  %3505 = vmatpush1.msra.mxu0 0.0
  %3506 = vmatprep.subr.mxu0 0.0
  %3507 = vmatpush1.msra.mxu0 0.0
  %3508 = vmatprep.subr.mxu0 0.0
  %3509 = vmatpush1.msra.mxu0 0.0
  %3510 = vmatprep.subr.mxu0 0.0
  %3511 = vmatpush1.msra.mxu0 0.0
  %3512 = vmatprep.subr.mxu0 0.0
  %3513 = vmatpush1.msra.mxu0 0.0
  %3514 = vmatprep.mubr.f32.mxu0 0.0
  %3515 = vmatmul.mubr.f32.gmra.mrb[0].mxu0 %v3448
  %v3516 = vpop.f32.mrb[0].mxu0
  %v3517 = vadd.f32 0.0, %v3516
  %v3518 = vpop.f32.mrb[0].mxu0
  %3519 = vdwg.mxu0
  %v3520 = vadd.f32 %v3446, %v3517
  %3521 = vrot.lane.b32.xlu0 %v3520, 110
  %v3522 = vpop.permute.xlu0 %3521
  %3523 = vrot.lane.b32.xlu0 %v3520, 92
  %v3524 = vpop.permute.xlu0 %3523
  %3525 = vrot.lane.b32.xlu0 %v3520, 74
  %v3526 = vpop.permute.xlu0 %3525
  %v3527 = vmul.f32 %v3520, 0.5
  %v3528 = vtanh.pop %v3527
  %v3529 = vmul.f32 %v3528, 0.5
  %v3530 = vadd.f32 %v3529, 0.5
  %v3531 = vmul.f32 %v3522, 0.5
  %v3532 = vtanh.pop %v3531
  %v3533 = vmul.f32 %v3532, 0.5
  %v3534 = vadd.f32 %v3533, 0.5
  %v3535 = vtanh.pop %v3524
  %v3536 = vmul.f32 %v3526, 0.5
  %v3537 = vtanh.pop %v3536
  %v3538 = vmul.f32 %v3537, 0.5
  %v3539 = vadd.f32 %v3538, 0.5
  %v3540 = vmul.f32 %v3534, %v3425
  %v3541 = vmul.f32 %v3530, %v3535
  %v3542 = vadd.f32 %v3540, %v3541
  %v3543 = vtanh.pop %v3542
  %v3544 = vmul.f32 %v3539, %v3543
  %s3545 = scalar_lea.vmem %s4, 29
  %v3546 = vld [vmem:[%s3545] sm:$0x1]
  %v3548 = vlaneseq
  %v3549 = vshrl.u32 %v3548, 7
  %v3550 = vsub.s32 0, %v3549
  %v3551 = vrot.slane %v3546, %v3550
  %v3553 = vmul.f32 %v3544, %v3551
  %v3554 = vadd.f32 %v3437, %v3553
  %v3555 = vsel %vm50, %v3554, 0.0
  %3556 = vadd.xlane.f32.xlu0 %v3555
  %v3557 = vpop.xlane.xlu0 %3556
  %v3558 = vld [vmem:[#allocation2] sm:$0x1]
  %v3560 = vlaneseq
  %v3561 = vshrl.u32 %v3560, 7
  %v3562 = vsub.s32 0, %v3561
  %v3563 = vrot.slane %v3558, %v3562
  %v3565 = vadd.f32 %v3557, %v3563
  %vm3566 = vcmask 7168
  %3567 = vst.msk [vmem:[%s6] sm:$0xff] %vm3566, %v3565
  // Predicated region
  $region26: #{net_forward.1} parent=0 // pred_check
    _
  $region27: #{net_forward.1} parent=0 // pred_check_branch
    %3569 = sbr.rel (0) target = $region29
  $region28: #{net_forward.1} parent=0 // pred_region
    _
  $region29: #{net_forward.1} parent=0 // pred_fallthru
    _
  // Predicated region
  $region30: #{net_forward.1} parent=0 // pred_check
    _
  $region31: #{net_forward.1} parent=0 // pred_check_branch
    %3571 = sbr.rel (0) target = $region33
  $region32: #{net_forward.1} parent=0 // pred_region
    _
  $region33: #{net_forward.1} parent=0 // pred_fallthru
    _

</llo_original>
